<compile_context>
chip_gen: v7x
topology: tpu7x:2x2x1
jax: 0.10.0
libtpu: 0.0.40
codegen_flags: <defaults>
</compile_context>

<pallas_src>
import functools

import jax
import jax.numpy as jnp
from jax.experimental import pallas as pl
from jax.experimental.pallas import tpu as pltpu

_EPS = 1e-5
_VMEM_LIMIT = 48 * 1024 * 1024   # above the 16/32 MiB scoped defaults, below v7x physical


# --------------------------------------------------------------------------------------
# Generic tapped-conv kernel: one batch element per grid step, one stacked MXU matmul,
# optional fused InstanceNorm(+ReLU), optional bias (non-normed convs), optional skip add.
# Taps are (channel_offset, channel_count, flat_shift) triples into the flattened slab.
# --------------------------------------------------------------------------------------
def _make_conv_kernel(tap_slices, m_out, wp, wo, inv_cnt, *,
                      fuse_norm, relu, has_bias, has_skip, eps):

    def compute(x_ref, w_ref):
        # stack all taps along the contraction dim -> one matmul with K = sum(ch_len)
        stacked = jnp.concatenate(
            [x_ref[0, co:co + cl, sh:sh + m_out] for (co, cl, sh) in tap_slices], axis=0)
        return jnp.dot(w_ref[...], stacked, preferred_element_type=jnp.float32)

    def epilogue(y):
        if fuse_norm:
            # valid-column mask built in-kernel (flattened rows carry wp-wo garbage cols)
            col = jax.lax.broadcasted_iota(jnp.int32, (1, m_out), 1)
            mask = (col % wp < wo).astype(jnp.float32)
            mean = jnp.sum(y * mask, axis=1, keepdims=True) * inv_cnt
            d = (y - mean) * mask
            var = jnp.sum(d * d, axis=1, keepdims=True) * inv_cnt
            y = (y - mean) * jax.lax.rsqrt(var + eps)
        if relu:
            y = jnp.maximum(y, 0.0)
        return y

    if has_bias and has_skip:
        def kernel(x_ref, w_ref, b_ref, s_ref, o_ref):
            y = epilogue(compute(x_ref, w_ref) + b_ref[...]) + s_ref[0].astype(jnp.float32)
            o_ref[0] = y.astype(o_ref.dtype)
    elif has_bias:
        def kernel(x_ref, w_ref, b_ref, o_ref):
            y = epilogue(compute(x_ref, w_ref) + b_ref[...])
            o_ref[0] = y.astype(o_ref.dtype)
    elif has_skip:
        def kernel(x_ref, w_ref, s_ref, o_ref):
            y = epilogue(compute(x_ref, w_ref)) + s_ref[0].astype(jnp.float32)
            o_ref[0] = y.astype(o_ref.dtype)
    else:
        def kernel(x_ref, w_ref, o_ref):
            y = epilogue(compute(x_ref, w_ref))
            o_ref[0] = y.astype(o_ref.dtype)
    return kernel


def conv_flat_pallas(x_flat, w2d, *, tap_slices, ho, wp, wo, c_out,
                     fuse_norm, relu, bias=None, skip=None,
                     out_dtype=jnp.bfloat16, eps=_EPS):
    """x_flat: (N, Ctot, Mp) bf16 row-flattened padded slab; w2d: (Cout, K) bf16.
    Returns (N, Cout, ho*wp) in out_dtype (wp-wo garbage cols per row, dropped by caller)."""
    n, c_tot, m_in = x_flat.shape
    m_out = ho * wp

    in_specs = [pl.BlockSpec((1, c_tot, m_in), lambda b: (b, 0, 0)),
                pl.BlockSpec(w2d.shape, lambda b: (0, 0))]
    args = [x_flat, w2d]
    if bias is not None:
        args.append(jnp.asarray(bias, jnp.float32).reshape(c_out, 1))
        in_specs.append(pl.BlockSpec((c_out, 1), lambda b: (0, 0)))
    if skip is not None:
        args.append(skip)
        in_specs.append(pl.BlockSpec((1, c_out, m_out), lambda b: (b, 0, 0)))

    kernel = _make_conv_kernel(tap_slices, m_out, wp, wo, 1.0 / float(ho * wo),
                               fuse_norm=fuse_norm, relu=relu,
                               has_bias=bias is not None, has_skip=skip is not None,
                               eps=eps)
    return pl.pallas_call(
        kernel,
        out_shape=jax.ShapeDtypeStruct((n, c_out, m_out), out_dtype),
        grid=(n,),
        in_specs=in_specs,
        out_specs=pl.BlockSpec((1, c_out, m_out), lambda b: (b, 0, 0)),
        compiler_params=pltpu.CompilerParams(
            dimension_semantics=("parallel",), vmem_limit_bytes=_VMEM_LIMIT),
    )(*args)


# --------------------------------------------------------------------------------------
# Layer wrappers (NCHW throughout)
# --------------------------------------------------------------------------------------
def conv_block(x, w2d, k, *, padding, pad_mode="constant", fuse_norm, relu,
               bias=None, skip=None, out_dtype=jnp.bfloat16):
    """Stride-1 kxk conv with spatial padding; optional fused IN+ReLU, bias, skip add."""
    n, c_in, h, w = x.shape
    c_out = w2d.shape[0]
    assert w2d.shape[1] == k * k * c_in
    xp = jnp.pad(x, ((0, 0), (0, 0), (padding, padding), (padding, padding)), mode=pad_mode)
    hp, wp = h + 2 * padding, w + 2 * padding
    ho, wo = hp - k + 1, wp - k + 1

    xf = xp.reshape(n, c_in, hp * wp).astype(jnp.bfloat16)
    xf = jnp.pad(xf, ((0, 0), (0, 0), (0, k - 1)))            # tail zeros for garbage cols
    taps = tuple((0, c_in, i * wp + j) for i in range(k) for j in range(k))

    skip_f = None
    if skip is not None:
        skip_f = jnp.pad(skip, ((0, 0), (0, 0), (0, 0), (0, wp - wo)))
        skip_f = skip_f.reshape(n, c_out, ho * wp).astype(jnp.bfloat16)

    out = conv_flat_pallas(xf, w2d, tap_slices=taps, ho=ho, wp=wp, wo=wo, c_out=c_out,
                           fuse_norm=fuse_norm, relu=relu, bias=bias, skip=skip_f,
                           out_dtype=out_dtype)
    return out.reshape(n, c_out, ho, wp)[:, :, :, :wo]


# Tap order of the fused down conv (matches _prep_down_w): parity-plane major.
_DOWN_TAP_ORDER = ((0, 0), (0, 2), (2, 0), (2, 2),   # plane (even rows, even cols)
                   (0, 1), (2, 1),                    # plane (even rows, odd  cols)
                   (1, 0), (1, 2),                    # plane (odd  rows, even cols)
                   (1, 1))                            # plane (odd  rows, odd  cols)


def down_block(x, w2d):
    """Conv2d k=3, s=2, p=1 + InstanceNorm + ReLU, as ONE pallas_call: the 4 parity-decimated
    planes are folded into the contraction dim (9 taps, K = 9*Cin), IN+ReLU fused."""
    n, c, h, w = x.shape
    assert h % 2 == 0 and w % 2 == 0
    c_out = w2d.shape[0]
    ho, wo = h // 2, w // 2
    wp = wo + 1
    xp = jnp.pad(x, ((0, 0), (0, 0), (1, 1), (1, 1)))
    planes = jnp.stack([xp[:, :, 0::2, 0::2], xp[:, :, 0::2, 1::2],
                        xp[:, :, 1::2, 0::2], xp[:, :, 1::2, 1::2]], axis=1)
    xf = planes.reshape(n, 4 * c, (ho + 1) * wp).astype(jnp.bfloat16)
    xf = jnp.pad(xf, ((0, 0), (0, 0), (0, 1)))
    taps = ((0, c, 0), (0, c, 1), (0, c, wp), (0, c, wp + 1),
            (c, c, 0), (c, c, wp),
            (2 * c, c, 0), (2 * c, c, 1),
            (3 * c, c, 0))
    out = conv_flat_pallas(xf, w2d, tap_slices=taps, ho=ho, wp=wp, wo=wo, c_out=c_out,
                           fuse_norm=True, relu=True, out_dtype=jnp.bfloat16)
    return out.reshape(n, c_out, ho, wp)[:, :, :, :wo]


def _make_up_kernel(c_out, m_out, wp, wo, inv_cnt, eps, shifts):
    """ConvTranspose(k3,s2,p1,op1): one block matmul produces all 4 output parities from the
    4 shifted input slabs; InstanceNorm stats taken jointly over all parities; ReLU fused."""
    def kernel(x_ref, w_ref, o_ref):
        stacked = jnp.concatenate([x_ref[0, :, sh:sh + m_out] for sh in shifts], axis=0)
        yall = jnp.dot(w_ref[...], stacked, preferred_element_type=jnp.float32)  # (4*Co, M)
        col = jax.lax.broadcasted_iota(jnp.int32, (1, m_out), 1)
        mask = (col % wp < wo).astype(jnp.float32)
        ssum = jnp.zeros((c_out, 1), jnp.float32)
        for p in range(4):
            ssum = ssum + jnp.sum(yall[p * c_out:(p + 1) * c_out] * mask,
                                  axis=1, keepdims=True)
        mean = ssum * inv_cnt
        svar = jnp.zeros((c_out, 1), jnp.float32)
        for p in range(4):
            d = (yall[p * c_out:(p + 1) * c_out] - mean) * mask
            svar = svar + jnp.sum(d * d, axis=1, keepdims=True)
        rstd = jax.lax.rsqrt(svar * inv_cnt + eps)
        for p in range(4):
            yp = jnp.maximum((yall[p * c_out:(p + 1) * c_out] - mean) * rstd, 0.0)
            o_ref[0, p] = yp.astype(o_ref.dtype)
    return kernel


def up_block(x, w_comb, eps=_EPS):
    """ConvTranspose2d k=3, s=2, p=1, op=1 + InstanceNorm + ReLU in ONE pallas_call."""
    n, c_in, h, w = x.shape
    c_out = w_comb.shape[0] // 4
    wp = w + 1
    m_out = h * wp
    xq = jnp.pad(x, ((0, 0), (0, 0), (0, 1), (0, 1)))           # one zero row/col at the end
    xf = xq.reshape(n, c_in, (h + 1) * wp).astype(jnp.bfloat16)
    xf = jnp.pad(xf, ((0, 0), (0, 0), (0, 1)))
    m_in = xf.shape[-1]
    shifts = (0, 1, wp, wp + 1)

    kernel = _make_up_kernel(c_out, m_out, wp, w, 1.0 / float(4 * h * w), eps, shifts)
    out = pl.pallas_call(
        kernel,
        out_shape=jax.ShapeDtypeStruct((n, 4, c_out, m_out), jnp.bfloat16),
        grid=(n,),
        in_specs=[pl.BlockSpec((1, c_in, m_in), lambda b: (b, 0, 0)),
                  pl.BlockSpec(w_comb.shape, lambda b: (0, 0))],
        out_specs=pl.BlockSpec((1, 4, c_out, m_out), lambda b: (b, 0, 0, 0)),
        compiler_params=pltpu.CompilerParams(
            dimension_semantics=("parallel",), vmem_limit_bytes=_VMEM_LIMIT),
    )(xf, w_comb)
    # interleave the 4 parities: (N, ph, pw, C, H, W) -> (N, C, 2H, 2W)
    out = out.reshape(n, 2, 2, c_out, h, wp)[..., :w]
    out = jnp.transpose(out, (0, 3, 4, 1, 5, 2)).reshape(n, c_out, 2 * h, 2 * w)
    return out


# --------------------------------------------------------------------------------------
# Parameter init (deterministic synthetic, PyTorch-native layouts) + one-time prep to the
# kernel-ready layouts (tap stacking, bf16 casts, bias dropping where IN cancels it).
# --------------------------------------------------------------------------------------
def init_params(key, in_channels, out_channels, n_down_blocks, n_res_blocks, nf):
    keys = iter(jax.random.split(key, 256))

    def conv_p(cin, cout, k):
        w = 0.05 * jax.random.normal(next(keys), (cout, cin, k, k), jnp.float32)
        b = 0.01 * jax.random.normal(next(keys), (cout,), jnp.float32)
        return w, b

    def convT_p(cin, cout, k):
        w = 0.05 * jax.random.normal(next(keys), (cin, cout, k, k), jnp.float32)
        b = 0.01 * jax.random.normal(next(keys), (cout,), jnp.float32)
        return w, b

    raw = {}
    raw['head'] = conv_p(in_channels, nf, 7)
    raw['down'] = [conv_p(nf * 2 ** i, nf * 2 ** (i + 1), 3) for i in range(n_down_blocks)]
    c = nf * 2 ** n_down_blocks
    raw['res'] = [(conv_p(c, c, 3), conv_p(c, c, 3)) for _ in range(n_res_blocks)]
    raw['up'] = [convT_p(nf * 2 ** (n_down_blocks - i),
                         nf * 2 ** (n_down_blocks - i) // 2, 3)
                 for i in range(n_down_blocks)]
    raw['tail'] = conv_p(nf, out_channels, 7)
    return raw


def _prep_conv_w(w_oihw):
    o, i, kh, kw = w_oihw.shape
    return jnp.transpose(w_oihw, (0, 2, 3, 1)).reshape(o, kh * kw * i).astype(jnp.bfloat16)


def _prep_down_w(w_oihw):
    return jnp.concatenate([w_oihw[:, :, a, b] for (a, b) in _DOWN_TAP_ORDER],
                           axis=1).astype(jnp.bfloat16)


def _prep_up_w(w_iohw):
    c_in, c_out = w_iohw.shape[0], w_iohw.shape[1]

    def tap(par, d):          # kernel index contributing to output parity `par`, input offset d
        if par == 0:
            return 1 if d == 0 else None
        return 2 if d == 0 else 0

    zero = jnp.zeros((c_out, c_in), jnp.float32)
    rows = []
    for ph in (0, 1):
        for pw in (0, 1):
            cols = []
            for dr in (0, 1):
                for dc in (0, 1):
                    a, b = tap(ph, dr), tap(pw, dc)
                    cols.append(zero if (a is None or b is None)
                                else jnp.transpose(w_iohw[:, :, a, b]))
            rows.append(jnp.concatenate(cols, axis=1))
    return jnp.concatenate(rows, axis=0).astype(jnp.bfloat16)   # (4*Cout, 4*Cin)


def prepare_params(raw):
    prep = {}
    prep['head'] = _prep_conv_w(raw['head'][0])                 # bias cancelled by IN
    prep['down'] = [_prep_down_w(w) for (w, _) in raw['down']]
    prep['res'] = [(_prep_conv_w(w1), _prep_conv_w(w2)) for ((w1, _), (w2, _)) in raw['res']]
    prep['up'] = [_prep_up_w(w) for (w, _) in raw['up']]
    prep['tail'] = (_prep_conv_w(raw['tail'][0]), jnp.asarray(raw['tail'][1], jnp.float32))
    return prep


# --------------------------------------------------------------------------------------
# Forward
# --------------------------------------------------------------------------------------
def preset_generator_resnet_forward(x_nchw, params):
    x = x_nchw.astype(jnp.float32)

    # ReflectionPad2d(3) + Conv(k7) + IN + ReLU (fused)
    x = conv_block(x, params['head'], 7, padding=3, pad_mode='reflect',
                   fuse_norm=True, relu=True, out_dtype=jnp.bfloat16)

    # downsampling: Conv(k3, s2, p1) + IN + ReLU (single fused kernel per layer)
    for w_down in params['down']:
        x = down_block(x, w_down)

    # residual units: (Conv->IN->ReLU) x2 + identity skip (skip add fused in 2nd conv)
    for (w1, w2) in params['res']:
        res = x
        y = conv_block(x, w1, 3, padding=1, fuse_norm=True, relu=True,
                       out_dtype=jnp.bfloat16)
        x = conv_block(y, w2, 3, padding=1, fuse_norm=True, relu=True, skip=res,
                       out_dtype=jnp.bfloat16)

    # upsampling: ConvTranspose(k3, s2, p1, op1) + IN + ReLU (single fused kernel per layer)
    for w_up in params['up']:
        x = up_block(x, w_up)

    # ReflectionPad2d(3) + Conv(k7), conv_only (bias kept, no norm / act)
    w_t, b_t = params['tail']
    return conv_block(x, w_t, 7, padding=3, pad_mode='reflect',
                      fuse_norm=False, relu=False, bias=b_t, out_dtype=jnp.float32)


if __name__ == "__main__":
    key = jax.random.PRNGKey(0)
    kx, kp = jax.random.split(key)

    # small config: spatial_dims=2, in=4, out=3, n_down_blocks=1, n_res_blocks=2, nf=8
    N, Cin, Hs, Ws = 2, 4, 16, 16
    Cout, n_down, n_res, nf = 3, 1, 2, 8

    x = jax.random.normal(kx, (N, Cin, Hs, Ws), jnp.float32)
    raw = init_params(kp, Cin, Cout, n_down, n_res, nf)
    params = prepare_params(raw)

    fwd = jax.jit(functools.partial(preset_generator_resnet_forward, params=params))
    out = jax.block_until_ready(fwd(x))

    assert out.shape == (N, Cout, Hs, Ws), out.shape
    assert jnp.all(jnp.isfinite(out))
    print("KERNEL_OK")
</pallas_src>

<mosaic_0001>
module attributes {stable_mosaic.version = 11 : i64} {
  func.func @kernel(%arg0: i32, %arg1: memref<1x4x490xbf16, #tpu.memory_space<vmem>>, %arg2: memref<8x196xbf16, #tpu.memory_space<vmem>>, %arg3: memref<1x8x352xbf16, #tpu.memory_space<vmem>>) attributes {dimension_semantics = [#tpu.dimension_semantics<parallel>], iteration_bounds = array<i64: 2>, scalar_prefetch = 0 : i64, scratch_operands = 0 : i64, tpu.core_type = #tpu.core_type<tc>, window_params = [{transform_indices = @transform_0, window_bounds = array<i64: 1, 4, 490>}, {pipeline_mode = #tpu.pipeline_mode<synchronous>, transform_indices = @transform_1, window_bounds = array<i64: 8, 196>}, {transform_indices = @transform_2, window_bounds = array<i64: 1, 8, 352>}]} {
    %c0 = arith.constant 0 : index
    %c0_0 = arith.constant 0 : index
    %c0_1 = arith.constant 0 : index
    %0 = vector.load %arg1[%c0, %c0_0, %c0_1] : memref<1x4x490xbf16, #tpu.memory_space<vmem>>, vector<1x4x352xbf16>
    %1 = vector.shape_cast %0 : vector<1x4x352xbf16> to vector<4x352xbf16>
    %c0_2 = arith.constant 0 : index
    %c0_3 = arith.constant 0 : index
    %c1 = arith.constant 1 : index
    %2 = vector.load %arg1[%c0_2, %c0_3, %c1] : memref<1x4x490xbf16, #tpu.memory_space<vmem>>, vector<1x4x352xbf16>
    %3 = vector.shape_cast %2 : vector<1x4x352xbf16> to vector<4x352xbf16>
    %c0_4 = arith.constant 0 : index
    %c0_5 = arith.constant 0 : index
    %c2 = arith.constant 2 : index
    %4 = vector.load %arg1[%c0_4, %c0_5, %c2] : memref<1x4x490xbf16, #tpu.memory_space<vmem>>, vector<1x4x352xbf16>
    %5 = vector.shape_cast %4 : vector<1x4x352xbf16> to vector<4x352xbf16>
    %c0_6 = arith.constant 0 : index
    %c0_7 = arith.constant 0 : index
    %c3 = arith.constant 3 : index
    %6 = vector.load %arg1[%c0_6, %c0_7, %c3] : memref<1x4x490xbf16, #tpu.memory_space<vmem>>, vector<1x4x352xbf16>
    %7 = vector.shape_cast %6 : vector<1x4x352xbf16> to vector<4x352xbf16>
    %c0_8 = arith.constant 0 : index
    %c0_9 = arith.constant 0 : index
    %c4 = arith.constant 4 : index
    %8 = vector.load %arg1[%c0_8, %c0_9, %c4] : memref<1x4x490xbf16, #tpu.memory_space<vmem>>, vector<1x4x352xbf16>
    %9 = vector.shape_cast %8 : vector<1x4x352xbf16> to vector<4x352xbf16>
    %c0_10 = arith.constant 0 : index
    %c0_11 = arith.constant 0 : index
    %c5 = arith.constant 5 : index
    %10 = vector.load %arg1[%c0_10, %c0_11, %c5] : memref<1x4x490xbf16, #tpu.memory_space<vmem>>, vector<1x4x352xbf16>
    %11 = vector.shape_cast %10 : vector<1x4x352xbf16> to vector<4x352xbf16>
    %c0_12 = arith.constant 0 : index
    %c0_13 = arith.constant 0 : index
    %c6 = arith.constant 6 : index
    %12 = vector.load %arg1[%c0_12, %c0_13, %c6] : memref<1x4x490xbf16, #tpu.memory_space<vmem>>, vector<1x4x352xbf16>
    %13 = vector.shape_cast %12 : vector<1x4x352xbf16> to vector<4x352xbf16>
    %c0_14 = arith.constant 0 : index
    %c0_15 = arith.constant 0 : index
    %c22 = arith.constant 22 : index
    %14 = vector.load %arg1[%c0_14, %c0_15, %c22] : memref<1x4x490xbf16, #tpu.memory_space<vmem>>, vector<1x4x352xbf16>
    %15 = vector.shape_cast %14 : vector<1x4x352xbf16> to vector<4x352xbf16>
    %c0_16 = arith.constant 0 : index
    %c0_17 = arith.constant 0 : index
    %c23 = arith.constant 23 : index
    %16 = vector.load %arg1[%c0_16, %c0_17, %c23] : memref<1x4x490xbf16, #tpu.memory_space<vmem>>, vector<1x4x352xbf16>
    %17 = vector.shape_cast %16 : vector<1x4x352xbf16> to vector<4x352xbf16>
    %c0_18 = arith.constant 0 : index
    %c0_19 = arith.constant 0 : index
    %c24 = arith.constant 24 : index
    %18 = vector.load %arg1[%c0_18, %c0_19, %c24] : memref<1x4x490xbf16, #tpu.memory_space<vmem>>, vector<1x4x352xbf16>
    %19 = vector.shape_cast %18 : vector<1x4x352xbf16> to vector<4x352xbf16>
    %c0_20 = arith.constant 0 : index
    %c0_21 = arith.constant 0 : index
    %c25 = arith.constant 25 : index
    %20 = vector.load %arg1[%c0_20, %c0_21, %c25] : memref<1x4x490xbf16, #tpu.memory_space<vmem>>, vector<1x4x352xbf16>
    %21 = vector.shape_cast %20 : vector<1x4x352xbf16> to vector<4x352xbf16>
    %c0_22 = arith.constant 0 : index
    %c0_23 = arith.constant 0 : index
    %c26 = arith.constant 26 : index
    %22 = vector.load %arg1[%c0_22, %c0_23, %c26] : memref<1x4x490xbf16, #tpu.memory_space<vmem>>, vector<1x4x352xbf16>
    %23 = vector.shape_cast %22 : vector<1x4x352xbf16> to vector<4x352xbf16>
    %c0_24 = arith.constant 0 : index
    %c0_25 = arith.constant 0 : index
    %c27 = arith.constant 27 : index
    %24 = vector.load %arg1[%c0_24, %c0_25, %c27] : memref<1x4x490xbf16, #tpu.memory_space<vmem>>, vector<1x4x352xbf16>
    %25 = vector.shape_cast %24 : vector<1x4x352xbf16> to vector<4x352xbf16>
    %c0_26 = arith.constant 0 : index
    %c0_27 = arith.constant 0 : index
    %c28 = arith.constant 28 : index
    %26 = vector.load %arg1[%c0_26, %c0_27, %c28] : memref<1x4x490xbf16, #tpu.memory_space<vmem>>, vector<1x4x352xbf16>
    %27 = vector.shape_cast %26 : vector<1x4x352xbf16> to vector<4x352xbf16>
    %c0_28 = arith.constant 0 : index
    %c0_29 = arith.constant 0 : index
    %c44 = arith.constant 44 : index
    %28 = vector.load %arg1[%c0_28, %c0_29, %c44] : memref<1x4x490xbf16, #tpu.memory_space<vmem>>, vector<1x4x352xbf16>
    %29 = vector.shape_cast %28 : vector<1x4x352xbf16> to vector<4x352xbf16>
    %c0_30 = arith.constant 0 : index
    %c0_31 = arith.constant 0 : index
    %c45 = arith.constant 45 : index
    %30 = vector.load %arg1[%c0_30, %c0_31, %c45] : memref<1x4x490xbf16, #tpu.memory_space<vmem>>, vector<1x4x352xbf16>
    %31 = vector.shape_cast %30 : vector<1x4x352xbf16> to vector<4x352xbf16>
    %c0_32 = arith.constant 0 : index
    %c0_33 = arith.constant 0 : index
    %c46 = arith.constant 46 : index
    %32 = vector.load %arg1[%c0_32, %c0_33, %c46] : memref<1x4x490xbf16, #tpu.memory_space<vmem>>, vector<1x4x352xbf16>
    %33 = vector.shape_cast %32 : vector<1x4x352xbf16> to vector<4x352xbf16>
    %c0_34 = arith.constant 0 : index
    %c0_35 = arith.constant 0 : index
    %c47 = arith.constant 47 : index
    %34 = vector.load %arg1[%c0_34, %c0_35, %c47] : memref<1x4x490xbf16, #tpu.memory_space<vmem>>, vector<1x4x352xbf16>
    %35 = vector.shape_cast %34 : vector<1x4x352xbf16> to vector<4x352xbf16>
    %c0_36 = arith.constant 0 : index
    %c0_37 = arith.constant 0 : index
    %c48 = arith.constant 48 : index
    %36 = vector.load %arg1[%c0_36, %c0_37, %c48] : memref<1x4x490xbf16, #tpu.memory_space<vmem>>, vector<1x4x352xbf16>
    %37 = vector.shape_cast %36 : vector<1x4x352xbf16> to vector<4x352xbf16>
    %c0_38 = arith.constant 0 : index
    %c0_39 = arith.constant 0 : index
    %c49 = arith.constant 49 : index
    %38 = vector.load %arg1[%c0_38, %c0_39, %c49] : memref<1x4x490xbf16, #tpu.memory_space<vmem>>, vector<1x4x352xbf16>
    %39 = vector.shape_cast %38 : vector<1x4x352xbf16> to vector<4x352xbf16>
    %c0_40 = arith.constant 0 : index
    %c0_41 = arith.constant 0 : index
    %c50 = arith.constant 50 : index
    %40 = vector.load %arg1[%c0_40, %c0_41, %c50] : memref<1x4x490xbf16, #tpu.memory_space<vmem>>, vector<1x4x352xbf16>
    %41 = vector.shape_cast %40 : vector<1x4x352xbf16> to vector<4x352xbf16>
    %c0_42 = arith.constant 0 : index
    %c0_43 = arith.constant 0 : index
    %c66 = arith.constant 66 : index
    %42 = vector.load %arg1[%c0_42, %c0_43, %c66] : memref<1x4x490xbf16, #tpu.memory_space<vmem>>, vector<1x4x352xbf16>
    %43 = vector.shape_cast %42 : vector<1x4x352xbf16> to vector<4x352xbf16>
    %c0_44 = arith.constant 0 : index
    %c0_45 = arith.constant 0 : index
    %c67 = arith.constant 67 : index
    %44 = vector.load %arg1[%c0_44, %c0_45, %c67] : memref<1x4x490xbf16, #tpu.memory_space<vmem>>, vector<1x4x352xbf16>
    %45 = vector.shape_cast %44 : vector<1x4x352xbf16> to vector<4x352xbf16>
    %c0_46 = arith.constant 0 : index
    %c0_47 = arith.constant 0 : index
    %c68 = arith.constant 68 : index
    %46 = vector.load %arg1[%c0_46, %c0_47, %c68] : memref<1x4x490xbf16, #tpu.memory_space<vmem>>, vector<1x4x352xbf16>
    %47 = vector.shape_cast %46 : vector<1x4x352xbf16> to vector<4x352xbf16>
    %c0_48 = arith.constant 0 : index
    %c0_49 = arith.constant 0 : index
    %c69 = arith.constant 69 : index
    %48 = vector.load %arg1[%c0_48, %c0_49, %c69] : memref<1x4x490xbf16, #tpu.memory_space<vmem>>, vector<1x4x352xbf16>
    %49 = vector.shape_cast %48 : vector<1x4x352xbf16> to vector<4x352xbf16>
    %c0_50 = arith.constant 0 : index
    %c0_51 = arith.constant 0 : index
    %c70 = arith.constant 70 : index
    %50 = vector.load %arg1[%c0_50, %c0_51, %c70] : memref<1x4x490xbf16, #tpu.memory_space<vmem>>, vector<1x4x352xbf16>
    %51 = vector.shape_cast %50 : vector<1x4x352xbf16> to vector<4x352xbf16>
    %c0_52 = arith.constant 0 : index
    %c0_53 = arith.constant 0 : index
    %c71 = arith.constant 71 : index
    %52 = vector.load %arg1[%c0_52, %c0_53, %c71] : memref<1x4x490xbf16, #tpu.memory_space<vmem>>, vector<1x4x352xbf16>
    %53 = vector.shape_cast %52 : vector<1x4x352xbf16> to vector<4x352xbf16>
    %c0_54 = arith.constant 0 : index
    %c0_55 = arith.constant 0 : index
    %c72 = arith.constant 72 : index
    %54 = vector.load %arg1[%c0_54, %c0_55, %c72] : memref<1x4x490xbf16, #tpu.memory_space<vmem>>, vector<1x4x352xbf16>
    %55 = vector.shape_cast %54 : vector<1x4x352xbf16> to vector<4x352xbf16>
    %c0_56 = arith.constant 0 : index
    %c0_57 = arith.constant 0 : index
    %c88 = arith.constant 88 : index
    %56 = vector.load %arg1[%c0_56, %c0_57, %c88] : memref<1x4x490xbf16, #tpu.memory_space<vmem>>, vector<1x4x352xbf16>
    %57 = vector.shape_cast %56 : vector<1x4x352xbf16> to vector<4x352xbf16>
    %c0_58 = arith.constant 0 : index
    %c0_59 = arith.constant 0 : index
    %c89 = arith.constant 89 : index
    %58 = vector.load %arg1[%c0_58, %c0_59, %c89] : memref<1x4x490xbf16, #tpu.memory_space<vmem>>, vector<1x4x352xbf16>
    %59 = vector.shape_cast %58 : vector<1x4x352xbf16> to vector<4x352xbf16>
    %c0_60 = arith.constant 0 : index
    %c0_61 = arith.constant 0 : index
    %c90 = arith.constant 90 : index
    %60 = vector.load %arg1[%c0_60, %c0_61, %c90] : memref<1x4x490xbf16, #tpu.memory_space<vmem>>, vector<1x4x352xbf16>
    %61 = vector.shape_cast %60 : vector<1x4x352xbf16> to vector<4x352xbf16>
    %c0_62 = arith.constant 0 : index
    %c0_63 = arith.constant 0 : index
    %c91 = arith.constant 91 : index
    %62 = vector.load %arg1[%c0_62, %c0_63, %c91] : memref<1x4x490xbf16, #tpu.memory_space<vmem>>, vector<1x4x352xbf16>
    %63 = vector.shape_cast %62 : vector<1x4x352xbf16> to vector<4x352xbf16>
    %c0_64 = arith.constant 0 : index
    %c0_65 = arith.constant 0 : index
    %c92 = arith.constant 92 : index
    %64 = vector.load %arg1[%c0_64, %c0_65, %c92] : memref<1x4x490xbf16, #tpu.memory_space<vmem>>, vector<1x4x352xbf16>
    %65 = vector.shape_cast %64 : vector<1x4x352xbf16> to vector<4x352xbf16>
    %c0_66 = arith.constant 0 : index
    %c0_67 = arith.constant 0 : index
    %c93 = arith.constant 93 : index
    %66 = vector.load %arg1[%c0_66, %c0_67, %c93] : memref<1x4x490xbf16, #tpu.memory_space<vmem>>, vector<1x4x352xbf16>
    %67 = vector.shape_cast %66 : vector<1x4x352xbf16> to vector<4x352xbf16>
    %c0_68 = arith.constant 0 : index
    %c0_69 = arith.constant 0 : index
    %c94 = arith.constant 94 : index
    %68 = vector.load %arg1[%c0_68, %c0_69, %c94] : memref<1x4x490xbf16, #tpu.memory_space<vmem>>, vector<1x4x352xbf16>
    %69 = vector.shape_cast %68 : vector<1x4x352xbf16> to vector<4x352xbf16>
    %c0_70 = arith.constant 0 : index
    %c0_71 = arith.constant 0 : index
    %c110 = arith.constant 110 : index
    %70 = vector.load %arg1[%c0_70, %c0_71, %c110] : memref<1x4x490xbf16, #tpu.memory_space<vmem>>, vector<1x4x352xbf16>
    %71 = vector.shape_cast %70 : vector<1x4x352xbf16> to vector<4x352xbf16>
    %c0_72 = arith.constant 0 : index
    %c0_73 = arith.constant 0 : index
    %c111 = arith.constant 111 : index
    %72 = vector.load %arg1[%c0_72, %c0_73, %c111] : memref<1x4x490xbf16, #tpu.memory_space<vmem>>, vector<1x4x352xbf16>
    %73 = vector.shape_cast %72 : vector<1x4x352xbf16> to vector<4x352xbf16>
    %c0_74 = arith.constant 0 : index
    %c0_75 = arith.constant 0 : index
    %c112 = arith.constant 112 : index
    %74 = vector.load %arg1[%c0_74, %c0_75, %c112] : memref<1x4x490xbf16, #tpu.memory_space<vmem>>, vector<1x4x352xbf16>
    %75 = vector.shape_cast %74 : vector<1x4x352xbf16> to vector<4x352xbf16>
    %c0_76 = arith.constant 0 : index
    %c0_77 = arith.constant 0 : index
    %c113 = arith.constant 113 : index
    %76 = vector.load %arg1[%c0_76, %c0_77, %c113] : memref<1x4x490xbf16, #tpu.memory_space<vmem>>, vector<1x4x352xbf16>
    %77 = vector.shape_cast %76 : vector<1x4x352xbf16> to vector<4x352xbf16>
    %c0_78 = arith.constant 0 : index
    %c0_79 = arith.constant 0 : index
    %c114 = arith.constant 114 : index
    %78 = vector.load %arg1[%c0_78, %c0_79, %c114] : memref<1x4x490xbf16, #tpu.memory_space<vmem>>, vector<1x4x352xbf16>
    %79 = vector.shape_cast %78 : vector<1x4x352xbf16> to vector<4x352xbf16>
    %c0_80 = arith.constant 0 : index
    %c0_81 = arith.constant 0 : index
    %c115 = arith.constant 115 : index
    %80 = vector.load %arg1[%c0_80, %c0_81, %c115] : memref<1x4x490xbf16, #tpu.memory_space<vmem>>, vector<1x4x352xbf16>
    %81 = vector.shape_cast %80 : vector<1x4x352xbf16> to vector<4x352xbf16>
    %c0_82 = arith.constant 0 : index
    %c0_83 = arith.constant 0 : index
    %c116 = arith.constant 116 : index
    %82 = vector.load %arg1[%c0_82, %c0_83, %c116] : memref<1x4x490xbf16, #tpu.memory_space<vmem>>, vector<1x4x352xbf16>
    %83 = vector.shape_cast %82 : vector<1x4x352xbf16> to vector<4x352xbf16>
    %c0_84 = arith.constant 0 : index
    %c0_85 = arith.constant 0 : index
    %c132 = arith.constant 132 : index
    %84 = vector.load %arg1[%c0_84, %c0_85, %c132] : memref<1x4x490xbf16, #tpu.memory_space<vmem>>, vector<1x4x352xbf16>
    %85 = vector.shape_cast %84 : vector<1x4x352xbf16> to vector<4x352xbf16>
    %c0_86 = arith.constant 0 : index
    %c0_87 = arith.constant 0 : index
    %c133 = arith.constant 133 : index
    %86 = vector.load %arg1[%c0_86, %c0_87, %c133] : memref<1x4x490xbf16, #tpu.memory_space<vmem>>, vector<1x4x352xbf16>
    %87 = vector.shape_cast %86 : vector<1x4x352xbf16> to vector<4x352xbf16>
    %c0_88 = arith.constant 0 : index
    %c0_89 = arith.constant 0 : index
    %c134 = arith.constant 134 : index
    %88 = vector.load %arg1[%c0_88, %c0_89, %c134] : memref<1x4x490xbf16, #tpu.memory_space<vmem>>, vector<1x4x352xbf16>
    %89 = vector.shape_cast %88 : vector<1x4x352xbf16> to vector<4x352xbf16>
    %c0_90 = arith.constant 0 : index
    %c0_91 = arith.constant 0 : index
    %c135 = arith.constant 135 : index
    %90 = vector.load %arg1[%c0_90, %c0_91, %c135] : memref<1x4x490xbf16, #tpu.memory_space<vmem>>, vector<1x4x352xbf16>
    %91 = vector.shape_cast %90 : vector<1x4x352xbf16> to vector<4x352xbf16>
    %c0_92 = arith.constant 0 : index
    %c0_93 = arith.constant 0 : index
    %c136 = arith.constant 136 : index
    %92 = vector.load %arg1[%c0_92, %c0_93, %c136] : memref<1x4x490xbf16, #tpu.memory_space<vmem>>, vector<1x4x352xbf16>
    %93 = vector.shape_cast %92 : vector<1x4x352xbf16> to vector<4x352xbf16>
    %c0_94 = arith.constant 0 : index
    %c0_95 = arith.constant 0 : index
    %c137 = arith.constant 137 : index
    %94 = vector.load %arg1[%c0_94, %c0_95, %c137] : memref<1x4x490xbf16, #tpu.memory_space<vmem>>, vector<1x4x352xbf16>
    %95 = vector.shape_cast %94 : vector<1x4x352xbf16> to vector<4x352xbf16>
    %c0_96 = arith.constant 0 : index
    %c0_97 = arith.constant 0 : index
    %c138 = arith.constant 138 : index
    %96 = vector.load %arg1[%c0_96, %c0_97, %c138] : memref<1x4x490xbf16, #tpu.memory_space<vmem>>, vector<1x4x352xbf16>
    %97 = vector.shape_cast %96 : vector<1x4x352xbf16> to vector<4x352xbf16>
    %98 = tpu.concatenate %1, %3, %5, %7, %9, %11, %13, %15, %17, %19, %21, %23, %25, %27, %29, %31 in 0 : vector<4x352xbf16>, vector<4x352xbf16>, vector<4x352xbf16>, vector<4x352xbf16>, vector<4x352xbf16>, vector<4x352xbf16>, vector<4x352xbf16>, vector<4x352xbf16>, vector<4x352xbf16>, vector<4x352xbf16>, vector<4x352xbf16>, vector<4x352xbf16>, vector<4x352xbf16>, vector<4x352xbf16>, vector<4x352xbf16>, vector<4x352xbf16> -> vector<64x352xbf16>
    %99 = tpu.concatenate %33, %35, %37, %39, %41, %43, %45, %47, %49, %51, %53, %55, %57, %59, %61, %63 in 0 : vector<4x352xbf16>, vector<4x352xbf16>, vector<4x352xbf16>, vector<4x352xbf16>, vector<4x352xbf16>, vector<4x352xbf16>, vector<4x352xbf16>, vector<4x352xbf16>, vector<4x352xbf16>, vector<4x352xbf16>, vector<4x352xbf16>, vector<4x352xbf16>, vector<4x352xbf16>, vector<4x352xbf16>, vector<4x352xbf16>, vector<4x352xbf16> -> vector<64x352xbf16>
    %100 = tpu.concatenate %65, %67, %69, %71, %73, %75, %77, %79, %81, %83, %85, %87, %89, %91, %93, %95 in 0 : vector<4x352xbf16>, vector<4x352xbf16>, vector<4x352xbf16>, vector<4x352xbf16>, vector<4x352xbf16>, vector<4x352xbf16>, vector<4x352xbf16>, vector<4x352xbf16>, vector<4x352xbf16>, vector<4x352xbf16>, vector<4x352xbf16>, vector<4x352xbf16>, vector<4x352xbf16>, vector<4x352xbf16>, vector<4x352xbf16>, vector<4x352xbf16> -> vector<64x352xbf16>
    %101 = tpu.concatenate %98, %99, %100, %97 in 0 : vector<64x352xbf16>, vector<64x352xbf16>, vector<64x352xbf16>, vector<4x352xbf16> -> vector<196x352xbf16>
    %c0_98 = arith.constant 0 : index
    %c0_99 = arith.constant 0 : index
    %102 = vector.load %arg2[%c0_98, %c0_99] : memref<8x196xbf16, #tpu.memory_space<vmem>>, vector<8x196xbf16>
    %cst = arith.constant dense<0.000000e+00> : vector<8x352xf32>
    %103 = tpu.matmul %102, %101, %cst {dimension_numbers = #tpu.dot_dimension_numbers<[1], [0], [0], [1], [0, 0, 1, 1], [], []>} : vector<8x196xbf16>, vector<196x352xbf16>, vector<8x352xf32> -> vector<8x352xf32>
    %104 = tpu.iota {dimensions = array<i32: 1>} : vector<1x352xi32>
    %c22_i32 = arith.constant 22 : i32
    %c0_i32 = arith.constant 0 : i32
    %105 = arith.cmpi eq, %c22_i32, %c0_i32 : i32
    %c1_i32 = arith.constant 1 : i32
    %106 = arith.select %105, %c1_i32, %c22_i32 : i32
    %107 = vector.broadcast %106 : i32 to vector<1x352xi32>
    %108 = arith.remsi %104, %107 : vector<1x352xi32>
    %c0_i32_100 = arith.constant 0 : i32
    %109 = vector.broadcast %c0_i32_100 : i32 to vector<1x352xi32>
    %110 = arith.cmpi ne, %108, %109 : vector<1x352xi32>
    %c0_i32_101 = arith.constant 0 : i32
    %111 = vector.broadcast %c0_i32_101 : i32 to vector<1x352xi32>
    %112 = arith.cmpi slt, %108, %111 : vector<1x352xi32>
    %c0_i32_102 = arith.constant 0 : i32
    %113 = arith.cmpi slt, %106, %c0_i32_102 : i32
    %114 = vector.broadcast %113 : i1 to vector<1x352xi1>
    %115 = vector.broadcast %114 : vector<1x352xi1> to vector<1x352xi1>
    %116 = arith.xori %112, %115 : vector<1x352xi1>
    %117 = arith.andi %116, %110 : vector<1x352xi1>
    %118 = vector.broadcast %106 : i32 to vector<1x352xi32>
    %119 = arith.addi %108, %118 : vector<1x352xi32>
    %120 = arith.select %117, %119, %108 : vector<1x352xi1>, vector<1x352xi32>
    %c16_i32 = arith.constant 16 : i32
    %121 = vector.broadcast %c16_i32 : i32 to vector<1x352xi32>
    %122 = arith.cmpi slt, %120, %121 : vector<1x352xi32>
    %123 = arith.extui %122 : vector<1x352xi1> to vector<1x352xi32>
    %124 = arith.sitofp %123 : vector<1x352xi32> to vector<1x352xf32>
    %125 = vector.broadcast %124 : vector<1x352xf32> to vector<8x352xf32>
    %126 = arith.mulf %103, %125 : vector<8x352xf32>
    %cst_103 = arith.constant dense<0.000000e+00> : vector<8xf32>
    %127 = vector.multi_reduction <add>, %126, %cst_103 [1] : vector<8x352xf32> to vector<8xf32>
    %128 = vector.shape_cast %127 : vector<8xf32> to vector<8x1xf32>
    %cst_104 = arith.constant 3.906250e-03 : f32
    %129 = vector.broadcast %cst_104 : f32 to vector<8x1xf32>
    %130 = arith.mulf %128, %129 : vector<8x1xf32>
    %131 = vector.broadcast %130 : vector<8x1xf32> to vector<8x352xf32>
    %132 = arith.subf %103, %131 : vector<8x352xf32>
    %133 = vector.broadcast %124 : vector<1x352xf32> to vector<8x352xf32>
    %134 = arith.mulf %132, %133 : vector<8x352xf32>
    %135 = arith.mulf %134, %134 : vector<8x352xf32>
    %cst_105 = arith.constant dense<0.000000e+00> : vector<8xf32>
    %136 = vector.multi_reduction <add>, %135, %cst_105 [1] : vector<8x352xf32> to vector<8xf32>
    %137 = vector.shape_cast %136 : vector<8xf32> to vector<8x1xf32>
    %cst_106 = arith.constant 3.906250e-03 : f32
    %138 = vector.broadcast %cst_106 : f32 to vector<8x1xf32>
    %139 = arith.mulf %137, %138 : vector<8x1xf32>
    %140 = vector.broadcast %130 : vector<8x1xf32> to vector<8x352xf32>
    %141 = arith.subf %103, %140 : vector<8x352xf32>
    %cst_107 = arith.constant 9.99999974E-6 : f32
    %142 = vector.broadcast %cst_107 : f32 to vector<8x1xf32>
    %143 = arith.addf %139, %142 : vector<8x1xf32>
    %144 = math.rsqrt %143 : vector<8x1xf32>
    %145 = vector.broadcast %144 : vector<8x1xf32> to vector<8x352xf32>
    %146 = arith.mulf %141, %145 : vector<8x352xf32>
    %cst_108 = arith.constant 0.000000e+00 : f32
    %147 = vector.broadcast %cst_108 : f32 to vector<8x352xf32>
    %148 = arith.maximumf %146, %147 : vector<8x352xf32>
    %149 = arith.truncf %148 : vector<8x352xf32> to vector<8x352xbf16>
    %c0_109 = arith.constant 0 : index
    %c0_110 = arith.constant 0 : index
    %c0_111 = arith.constant 0 : index
    %150 = vector.load %arg3[%c0_109, %c0_110, %c0_111] : memref<1x8x352xbf16, #tpu.memory_space<vmem>>, vector<1x8x352xbf16>
    %151 = vector.shape_cast %150 : vector<1x8x352xbf16> to vector<8x352xbf16>
    %152 = vector.shape_cast %149 : vector<8x352xbf16> to vector<1x8x352xbf16>
    tpu.vector_store %arg3[%c0_109, %c0_110, %c0_111], %152 {strides = array<i32>} : memref<1x8x352xbf16, #tpu.memory_space<vmem>>, vector<1x8x352xbf16>,
    return
  }
  func.func @transform_0(%arg0: i32) -> (i32, i32, i32) {
    %c0_i32 = arith.constant 0 : i32
    %c0_i32_0 = arith.constant 0 : i32
    %c0_i32_1 = arith.constant 0 : i32
    return %arg0, %c0_i32, %c0_i32_0 : i32, i32, i32
  }
  func.func @transform_1(%arg0: i32) -> (i32, i32) {
    %c0_i32 = arith.constant 0 : i32
    %c0_i32_0 = arith.constant 0 : i32
    %c0_i32_1 = arith.constant 0 : i32
    return %c0_i32, %c0_i32_0 : i32, i32
  }
  func.func @transform_2(%arg0: i32) -> (i32, i32, i32) {
    %c0_i32 = arith.constant 0 : i32
    %c0_i32_0 = arith.constant 0 : i32
    %c0_i32_1 = arith.constant 0 : i32
    return %arg0, %c0_i32, %c0_i32_0 : i32, i32, i32
  }
}

module attributes {stable_mosaic.version = 11 : i64} {
  func.func @kernel(%arg0: i32, %arg1: memref<1x32x82xbf16, #tpu.memory_space<vmem>>, %arg2: memref<16x72xbf16, #tpu.memory_space<vmem>>, %arg3: memref<1x16x72xbf16, #tpu.memory_space<vmem>>) attributes {dimension_semantics = [#tpu.dimension_semantics<parallel>], iteration_bounds = array<i64: 2>, scalar_prefetch = 0 : i64, scratch_operands = 0 : i64, tpu.core_type = #tpu.core_type<tc>, window_params = [{transform_indices = @transform_0, window_bounds = array<i64: 1, 32, 82>}, {pipeline_mode = #tpu.pipeline_mode<synchronous>, transform_indices = @transform_1, window_bounds = array<i64: 16, 72>}, {transform_indices = @transform_2, window_bounds = array<i64: 1, 16, 72>}]} {
    %c0 = arith.constant 0 : index
    %c0_0 = arith.constant 0 : index
    %c0_1 = arith.constant 0 : index
    %0 = vector.load %arg1[%c0, %c0_0, %c0_1] : memref<1x32x82xbf16, #tpu.memory_space<vmem>>, vector<1x8x72xbf16>
    %1 = vector.shape_cast %0 : vector<1x8x72xbf16> to vector<8x72xbf16>
    %c0_2 = arith.constant 0 : index
    %c0_3 = arith.constant 0 : index
    %c1 = arith.constant 1 : index
    %2 = vector.load %arg1[%c0_2, %c0_3, %c1] : memref<1x32x82xbf16, #tpu.memory_space<vmem>>, vector<1x8x72xbf16>
    %3 = vector.shape_cast %2 : vector<1x8x72xbf16> to vector<8x72xbf16>
    %c0_4 = arith.constant 0 : index
    %c0_5 = arith.constant 0 : index
    %c9 = arith.constant 9 : index
    %4 = vector.load %arg1[%c0_4, %c0_5, %c9] : memref<1x32x82xbf16, #tpu.memory_space<vmem>>, vector<1x8x72xbf16>
    %5 = vector.shape_cast %4 : vector<1x8x72xbf16> to vector<8x72xbf16>
    %c0_6 = arith.constant 0 : index
    %c0_7 = arith.constant 0 : index
    %c10 = arith.constant 10 : index
    %6 = vector.load %arg1[%c0_6, %c0_7, %c10] : memref<1x32x82xbf16, #tpu.memory_space<vmem>>, vector<1x8x72xbf16>
    %7 = vector.shape_cast %6 : vector<1x8x72xbf16> to vector<8x72xbf16>
    %c0_8 = arith.constant 0 : index
    %c8 = arith.constant 8 : index
    %c0_9 = arith.constant 0 : index
    %8 = vector.load %arg1[%c0_8, %c8, %c0_9] : memref<1x32x82xbf16, #tpu.memory_space<vmem>>, vector<1x8x72xbf16>
    %9 = vector.shape_cast %8 : vector<1x8x72xbf16> to vector<8x72xbf16>
    %c0_10 = arith.constant 0 : index
    %c8_11 = arith.constant 8 : index
    %c9_12 = arith.constant 9 : index
    %10 = vector.load %arg1[%c0_10, %c8_11, %c9_12] : memref<1x32x82xbf16, #tpu.memory_space<vmem>>, vector<1x8x72xbf16>
    %11 = vector.shape_cast %10 : vector<1x8x72xbf16> to vector<8x72xbf16>
    %c0_13 = arith.constant 0 : index
    %c16 = arith.constant 16 : index
    %c0_14 = arith.constant 0 : index
    %12 = vector.load %arg1[%c0_13, %c16, %c0_14] : memref<1x32x82xbf16, #tpu.memory_space<vmem>>, vector<1x8x72xbf16>
    %13 = vector.shape_cast %12 : vector<1x8x72xbf16> to vector<8x72xbf16>
    %c0_15 = arith.constant 0 : index
    %c16_16 = arith.constant 16 : index
    %c1_17 = arith.constant 1 : index
    %14 = vector.load %arg1[%c0_15, %c16_16, %c1_17] : memref<1x32x82xbf16, #tpu.memory_space<vmem>>, vector<1x8x72xbf16>
    %15 = vector.shape_cast %14 : vector<1x8x72xbf16> to vector<8x72xbf16>
    %c0_18 = arith.constant 0 : index
    %c24 = arith.constant 24 : index
    %c0_19 = arith.constant 0 : index
    %16 = vector.load %arg1[%c0_18, %c24, %c0_19] : memref<1x32x82xbf16, #tpu.memory_space<vmem>>, vector<1x8x72xbf16>
    %17 = vector.shape_cast %16 : vector<1x8x72xbf16> to vector<8x72xbf16>
    %18 = tpu.concatenate %1, %3, %5, %7, %9, %11, %13, %15, %17 in 0 : vector<8x72xbf16>, vector<8x72xbf16>, vector<8x72xbf16>, vector<8x72xbf16>, vector<8x72xbf16>, vector<8x72xbf16>, vector<8x72xbf16>, vector<8x72xbf16>, vector<8x72xbf16> -> vector<72x72xbf16>
    %c0_20 = arith.constant 0 : index
    %c0_21 = arith.constant 0 : index
    %19 = vector.load %arg2[%c0_20, %c0_21] : memref<16x72xbf16, #tpu.memory_space<vmem>>, vector<16x72xbf16>
    %cst = arith.constant dense<0.000000e+00> : vector<16x72xf32>
    %20 = tpu.matmul %19, %18, %cst {dimension_numbers = #tpu.dot_dimension_numbers<[1], [0], [0], [1], [0, 0, 1, 1], [], []>} : vector<16x72xbf16>, vector<72x72xbf16>, vector<16x72xf32> -> vector<16x72xf32>
    %21 = tpu.iota {dimensions = array<i32: 1>} : vector<1x72xi32>
    %c9_i32 = arith.constant 9 : i32
    %c0_i32 = arith.constant 0 : i32
    %22 = arith.cmpi eq, %c9_i32, %c0_i32 : i32
    %c1_i32 = arith.constant 1 : i32
    %23 = arith.select %22, %c1_i32, %c9_i32 : i32
    %24 = vector.broadcast %23 : i32 to vector<1x72xi32>
    %25 = arith.remsi %21, %24 : vector<1x72xi32>
    %c0_i32_22 = arith.constant 0 : i32
    %26 = vector.broadcast %c0_i32_22 : i32 to vector<1x72xi32>
    %27 = arith.cmpi ne, %25, %26 : vector<1x72xi32>
    %c0_i32_23 = arith.constant 0 : i32
    %28 = vector.broadcast %c0_i32_23 : i32 to vector<1x72xi32>
    %29 = arith.cmpi slt, %25, %28 : vector<1x72xi32>
    %c0_i32_24 = arith.constant 0 : i32
    %30 = arith.cmpi slt, %23, %c0_i32_24 : i32
    %31 = vector.broadcast %30 : i1 to vector<1x72xi1>
    %32 = vector.broadcast %31 : vector<1x72xi1> to vector<1x72xi1>
    %33 = arith.xori %29, %32 : vector<1x72xi1>
    %34 = arith.andi %33, %27 : vector<1x72xi1>
    %35 = vector.broadcast %23 : i32 to vector<1x72xi32>
    %36 = arith.addi %25, %35 : vector<1x72xi32>
    %37 = arith.select %34, %36, %25 : vector<1x72xi1>, vector<1x72xi32>
    %c8_i32 = arith.constant 8 : i32
    %38 = vector.broadcast %c8_i32 : i32 to vector<1x72xi32>
    %39 = arith.cmpi slt, %37, %38 : vector<1x72xi32>
    %40 = arith.extui %39 : vector<1x72xi1> to vector<1x72xi32>
    %41 = arith.sitofp %40 : vector<1x72xi32> to vector<1x72xf32>
    %42 = vector.broadcast %41 : vector<1x72xf32> to vector<16x72xf32>
    %43 = arith.mulf %20, %42 : vector<16x72xf32>
    %cst_25 = arith.constant dense<0.000000e+00> : vector<16xf32>
    %44 = vector.multi_reduction <add>, %43, %cst_25 [1] : vector<16x72xf32> to vector<16xf32>
    %45 = vector.shape_cast %44 : vector<16xf32> to vector<16x1xf32>
    %cst_26 = arith.constant 1.562500e-02 : f32
    %46 = vector.broadcast %cst_26 : f32 to vector<16x1xf32>
    %47 = arith.mulf %45, %46 : vector<16x1xf32>
    %48 = vector.broadcast %47 : vector<16x1xf32> to vector<16x72xf32>
    %49 = arith.subf %20, %48 : vector<16x72xf32>
    %50 = vector.broadcast %41 : vector<1x72xf32> to vector<16x72xf32>
    %51 = arith.mulf %49, %50 : vector<16x72xf32>
    %52 = arith.mulf %51, %51 : vector<16x72xf32>
    %cst_27 = arith.constant dense<0.000000e+00> : vector<16xf32>
    %53 = vector.multi_reduction <add>, %52, %cst_27 [1] : vector<16x72xf32> to vector<16xf32>
    %54 = vector.shape_cast %53 : vector<16xf32> to vector<16x1xf32>
    %cst_28 = arith.constant 1.562500e-02 : f32
    %55 = vector.broadcast %cst_28 : f32 to vector<16x1xf32>
    %56 = arith.mulf %54, %55 : vector<16x1xf32>
    %57 = vector.broadcast %47 : vector<16x1xf32> to vector<16x72xf32>
    %58 = arith.subf %20, %57 : vector<16x72xf32>
    %cst_29 = arith.constant 9.99999974E-6 : f32
    %59 = vector.broadcast %cst_29 : f32 to vector<16x1xf32>
    %60 = arith.addf %56, %59 : vector<16x1xf32>
    %61 = math.rsqrt %60 : vector<16x1xf32>
    %62 = vector.broadcast %61 : vector<16x1xf32> to vector<16x72xf32>
    %63 = arith.mulf %58, %62 : vector<16x72xf32>
    %cst_30 = arith.constant 0.000000e+00 : f32
    %64 = vector.broadcast %cst_30 : f32 to vector<16x72xf32>
    %65 = arith.maximumf %63, %64 : vector<16x72xf32>
    %66 = arith.truncf %65 : vector<16x72xf32> to vector<16x72xbf16>
    %c0_31 = arith.constant 0 : index
    %c0_32 = arith.constant 0 : index
    %c0_33 = arith.constant 0 : index
    %67 = vector.load %arg3[%c0_31, %c0_32, %c0_33] : memref<1x16x72xbf16, #tpu.memory_space<vmem>>, vector<1x16x72xbf16>
    %68 = vector.shape_cast %67 : vector<1x16x72xbf16> to vector<16x72xbf16>
    %69 = vector.shape_cast %66 : vector<16x72xbf16> to vector<1x16x72xbf16>
    tpu.vector_store %arg3[%c0_31, %c0_32, %c0_33], %69 {strides = array<i32>} : memref<1x16x72xbf16, #tpu.memory_space<vmem>>, vector<1x16x72xbf16>,
    return
  }
  func.func @transform_0(%arg0: i32) -> (i32, i32, i32) {
    %c0_i32 = arith.constant 0 : i32
    %c0_i32_0 = arith.constant 0 : i32
    %c0_i32_1 = arith.constant 0 : i32
    return %arg0, %c0_i32, %c0_i32_0 : i32, i32, i32
  }
  func.func @transform_1(%arg0: i32) -> (i32, i32) {
    %c0_i32 = arith.constant 0 : i32
    %c0_i32_0 = arith.constant 0 : i32
    %c0_i32_1 = arith.constant 0 : i32
    return %c0_i32, %c0_i32_0 : i32, i32
  }
  func.func @transform_2(%arg0: i32) -> (i32, i32, i32) {
    %c0_i32 = arith.constant 0 : i32
    %c0_i32_0 = arith.constant 0 : i32
    %c0_i32_1 = arith.constant 0 : i32
    return %arg0, %c0_i32, %c0_i32_0 : i32, i32, i32
  }
}

module attributes {stable_mosaic.version = 11 : i64} {
  func.func @kernel(%arg0: i32, %arg1: memref<1x16x102xbf16, #tpu.memory_space<vmem>>, %arg2: memref<16x144xbf16, #tpu.memory_space<vmem>>, %arg3: memref<1x16x80xbf16, #tpu.memory_space<vmem>>) attributes {dimension_semantics = [#tpu.dimension_semantics<parallel>], iteration_bounds = array<i64: 2>, scalar_prefetch = 0 : i64, scratch_operands = 0 : i64, tpu.core_type = #tpu.core_type<tc>, window_params = [{transform_indices = @transform_0, window_bounds = array<i64: 1, 16, 102>}, {pipeline_mode = #tpu.pipeline_mode<synchronous>, transform_indices = @transform_1, window_bounds = array<i64: 16, 144>}, {transform_indices = @transform_2, window_bounds = array<i64: 1, 16, 80>}]} {
    %c0 = arith.constant 0 : index
    %c0_0 = arith.constant 0 : index
    %c0_1 = arith.constant 0 : index
    %0 = vector.load %arg1[%c0, %c0_0, %c0_1] : memref<1x16x102xbf16, #tpu.memory_space<vmem>>, vector<1x16x80xbf16>
    %1 = vector.shape_cast %0 : vector<1x16x80xbf16> to vector<16x80xbf16>
    %c0_2 = arith.constant 0 : index
    %c0_3 = arith.constant 0 : index
    %c1 = arith.constant 1 : index
    %2 = vector.load %arg1[%c0_2, %c0_3, %c1] : memref<1x16x102xbf16, #tpu.memory_space<vmem>>, vector<1x16x80xbf16>
    %3 = vector.shape_cast %2 : vector<1x16x80xbf16> to vector<16x80xbf16>
    %c0_4 = arith.constant 0 : index
    %c0_5 = arith.constant 0 : index
    %c2 = arith.constant 2 : index
    %4 = vector.load %arg1[%c0_4, %c0_5, %c2] : memref<1x16x102xbf16, #tpu.memory_space<vmem>>, vector<1x16x80xbf16>
    %5 = vector.shape_cast %4 : vector<1x16x80xbf16> to vector<16x80xbf16>
    %c0_6 = arith.constant 0 : index
    %c0_7 = arith.constant 0 : index
    %c10 = arith.constant 10 : index
    %6 = vector.load %arg1[%c0_6, %c0_7, %c10] : memref<1x16x102xbf16, #tpu.memory_space<vmem>>, vector<1x16x80xbf16>
    %7 = vector.shape_cast %6 : vector<1x16x80xbf16> to vector<16x80xbf16>
    %c0_8 = arith.constant 0 : index
    %c0_9 = arith.constant 0 : index
    %c11 = arith.constant 11 : index
    %8 = vector.load %arg1[%c0_8, %c0_9, %c11] : memref<1x16x102xbf16, #tpu.memory_space<vmem>>, vector<1x16x80xbf16>
    %9 = vector.shape_cast %8 : vector<1x16x80xbf16> to vector<16x80xbf16>
    %c0_10 = arith.constant 0 : index
    %c0_11 = arith.constant 0 : index
    %c12 = arith.constant 12 : index
    %10 = vector.load %arg1[%c0_10, %c0_11, %c12] : memref<1x16x102xbf16, #tpu.memory_space<vmem>>, vector<1x16x80xbf16>
    %11 = vector.shape_cast %10 : vector<1x16x80xbf16> to vector<16x80xbf16>
    %c0_12 = arith.constant 0 : index
    %c0_13 = arith.constant 0 : index
    %c20 = arith.constant 20 : index
    %12 = vector.load %arg1[%c0_12, %c0_13, %c20] : memref<1x16x102xbf16, #tpu.memory_space<vmem>>, vector<1x16x80xbf16>
    %13 = vector.shape_cast %12 : vector<1x16x80xbf16> to vector<16x80xbf16>
    %c0_14 = arith.constant 0 : index
    %c0_15 = arith.constant 0 : index
    %c21 = arith.constant 21 : index
    %14 = vector.load %arg1[%c0_14, %c0_15, %c21] : memref<1x16x102xbf16, #tpu.memory_space<vmem>>, vector<1x16x80xbf16>
    %15 = vector.shape_cast %14 : vector<1x16x80xbf16> to vector<16x80xbf16>
    %c0_16 = arith.constant 0 : index
    %c0_17 = arith.constant 0 : index
    %c22 = arith.constant 22 : index
    %16 = vector.load %arg1[%c0_16, %c0_17, %c22] : memref<1x16x102xbf16, #tpu.memory_space<vmem>>, vector<1x16x80xbf16>
    %17 = vector.shape_cast %16 : vector<1x16x80xbf16> to vector<16x80xbf16>
    %18 = tpu.concatenate %1, %3, %5, %7, %9, %11, %13, %15, %17 in 0 : vector<16x80xbf16>, vector<16x80xbf16>, vector<16x80xbf16>, vector<16x80xbf16>, vector<16x80xbf16>, vector<16x80xbf16>, vector<16x80xbf16>, vector<16x80xbf16>, vector<16x80xbf16> -> vector<144x80xbf16>
    %c0_18 = arith.constant 0 : index
    %c0_19 = arith.constant 0 : index
    %19 = vector.load %arg2[%c0_18, %c0_19] : memref<16x144xbf16, #tpu.memory_space<vmem>>, vector<16x144xbf16>
    %cst = arith.constant dense<0.000000e+00> : vector<16x80xf32>
    %20 = tpu.matmul %19, %18, %cst {dimension_numbers = #tpu.dot_dimension_numbers<[1], [0], [0], [1], [0, 0, 1, 1], [], []>} : vector<16x144xbf16>, vector<144x80xbf16>, vector<16x80xf32> -> vector<16x80xf32>
    %21 = tpu.iota {dimensions = array<i32: 1>} : vector<1x80xi32>
    %c10_i32 = arith.constant 10 : i32
    %c0_i32 = arith.constant 0 : i32
    %22 = arith.cmpi eq, %c10_i32, %c0_i32 : i32
    %c1_i32 = arith.constant 1 : i32
    %23 = arith.select %22, %c1_i32, %c10_i32 : i32
    %24 = vector.broadcast %23 : i32 to vector<1x80xi32>
    %25 = arith.remsi %21, %24 : vector<1x80xi32>
    %c0_i32_20 = arith.constant 0 : i32
    %26 = vector.broadcast %c0_i32_20 : i32 to vector<1x80xi32>
    %27 = arith.cmpi ne, %25, %26 : vector<1x80xi32>
    %c0_i32_21 = arith.constant 0 : i32
    %28 = vector.broadcast %c0_i32_21 : i32 to vector<1x80xi32>
    %29 = arith.cmpi slt, %25, %28 : vector<1x80xi32>
    %c0_i32_22 = arith.constant 0 : i32
    %30 = arith.cmpi slt, %23, %c0_i32_22 : i32
    %31 = vector.broadcast %30 : i1 to vector<1x80xi1>
    %32 = vector.broadcast %31 : vector<1x80xi1> to vector<1x80xi1>
    %33 = arith.xori %29, %32 : vector<1x80xi1>
    %34 = arith.andi %33, %27 : vector<1x80xi1>
    %35 = vector.broadcast %23 : i32 to vector<1x80xi32>
    %36 = arith.addi %25, %35 : vector<1x80xi32>
    %37 = arith.select %34, %36, %25 : vector<1x80xi1>, vector<1x80xi32>
    %c8_i32 = arith.constant 8 : i32
    %38 = vector.broadcast %c8_i32 : i32 to vector<1x80xi32>
    %39 = arith.cmpi slt, %37, %38 : vector<1x80xi32>
    %40 = arith.extui %39 : vector<1x80xi1> to vector<1x80xi32>
    %41 = arith.sitofp %40 : vector<1x80xi32> to vector<1x80xf32>
    %42 = vector.broadcast %41 : vector<1x80xf32> to vector<16x80xf32>
    %43 = arith.mulf %20, %42 : vector<16x80xf32>
    %cst_23 = arith.constant dense<0.000000e+00> : vector<16xf32>
    %44 = vector.multi_reduction <add>, %43, %cst_23 [1] : vector<16x80xf32> to vector<16xf32>
    %45 = vector.shape_cast %44 : vector<16xf32> to vector<16x1xf32>
    %cst_24 = arith.constant 1.562500e-02 : f32
    %46 = vector.broadcast %cst_24 : f32 to vector<16x1xf32>
    %47 = arith.mulf %45, %46 : vector<16x1xf32>
    %48 = vector.broadcast %47 : vector<16x1xf32> to vector<16x80xf32>
    %49 = arith.subf %20, %48 : vector<16x80xf32>
    %50 = vector.broadcast %41 : vector<1x80xf32> to vector<16x80xf32>
    %51 = arith.mulf %49, %50 : vector<16x80xf32>
    %52 = arith.mulf %51, %51 : vector<16x80xf32>
    %cst_25 = arith.constant dense<0.000000e+00> : vector<16xf32>
    %53 = vector.multi_reduction <add>, %52, %cst_25 [1] : vector<16x80xf32> to vector<16xf32>
    %54 = vector.shape_cast %53 : vector<16xf32> to vector<16x1xf32>
    %cst_26 = arith.constant 1.562500e-02 : f32
    %55 = vector.broadcast %cst_26 : f32 to vector<16x1xf32>
    %56 = arith.mulf %54, %55 : vector<16x1xf32>
    %57 = vector.broadcast %47 : vector<16x1xf32> to vector<16x80xf32>
    %58 = arith.subf %20, %57 : vector<16x80xf32>
    %cst_27 = arith.constant 9.99999974E-6 : f32
    %59 = vector.broadcast %cst_27 : f32 to vector<16x1xf32>
    %60 = arith.addf %56, %59 : vector<16x1xf32>
    %61 = math.rsqrt %60 : vector<16x1xf32>
    %62 = vector.broadcast %61 : vector<16x1xf32> to vector<16x80xf32>
    %63 = arith.mulf %58, %62 : vector<16x80xf32>
    %cst_28 = arith.constant 0.000000e+00 : f32
    %64 = vector.broadcast %cst_28 : f32 to vector<16x80xf32>
    %65 = arith.maximumf %63, %64 : vector<16x80xf32>
    %66 = arith.truncf %65 : vector<16x80xf32> to vector<16x80xbf16>
    %c0_29 = arith.constant 0 : index
    %c0_30 = arith.constant 0 : index
    %c0_31 = arith.constant 0 : index
    %67 = vector.load %arg3[%c0_29, %c0_30, %c0_31] : memref<1x16x80xbf16, #tpu.memory_space<vmem>>, vector<1x16x80xbf16>
    %68 = vector.shape_cast %67 : vector<1x16x80xbf16> to vector<16x80xbf16>
    %69 = vector.shape_cast %66 : vector<16x80xbf16> to vector<1x16x80xbf16>
    tpu.vector_store %arg3[%c0_29, %c0_30, %c0_31], %69 {strides = array<i32>} : memref<1x16x80xbf16, #tpu.memory_space<vmem>>, vector<1x16x80xbf16>,
    return
  }
  func.func @transform_0(%arg0: i32) -> (i32, i32, i32) {
    %c0_i32 = arith.constant 0 : i32
    %c0_i32_0 = arith.constant 0 : i32
    %c0_i32_1 = arith.constant 0 : i32
    return %arg0, %c0_i32, %c0_i32_0 : i32, i32, i32
  }
  func.func @transform_1(%arg0: i32) -> (i32, i32) {
    %c0_i32 = arith.constant 0 : i32
    %c0_i32_0 = arith.constant 0 : i32
    %c0_i32_1 = arith.constant 0 : i32
    return %c0_i32, %c0_i32_0 : i32, i32
  }
  func.func @transform_2(%arg0: i32) -> (i32, i32, i32) {
    %c0_i32 = arith.constant 0 : i32
    %c0_i32_0 = arith.constant 0 : i32
    %c0_i32_1 = arith.constant 0 : i32
    return %arg0, %c0_i32, %c0_i32_0 : i32, i32, i32
  }
}

module attributes {stable_mosaic.version = 11 : i64} {
  func.func @kernel(%arg0: i32, %arg1: memref<1x16x102xbf16, #tpu.memory_space<vmem>>, %arg2: memref<16x144xbf16, #tpu.memory_space<vmem>>, %arg3: memref<1x16x80xbf16, #tpu.memory_space<vmem>>, %arg4: memref<1x16x80xbf16, #tpu.memory_space<vmem>>) attributes {dimension_semantics = [#tpu.dimension_semantics<parallel>], iteration_bounds = array<i64: 2>, scalar_prefetch = 0 : i64, scratch_operands = 0 : i64, tpu.core_type = #tpu.core_type<tc>, window_params = [{transform_indices = @transform_0, window_bounds = array<i64: 1, 16, 102>}, {pipeline_mode = #tpu.pipeline_mode<synchronous>, transform_indices = @transform_1, window_bounds = array<i64: 16, 144>}, {transform_indices = @transform_2, window_bounds = array<i64: 1, 16, 80>}, {transform_indices = @transform_3, window_bounds = array<i64: 1, 16, 80>}]} {
    %c0 = arith.constant 0 : index
    %c0_0 = arith.constant 0 : index
    %c0_1 = arith.constant 0 : index
    %0 = vector.load %arg1[%c0, %c0_0, %c0_1] : memref<1x16x102xbf16, #tpu.memory_space<vmem>>, vector<1x16x80xbf16>
    %1 = vector.shape_cast %0 : vector<1x16x80xbf16> to vector<16x80xbf16>
    %c0_2 = arith.constant 0 : index
    %c0_3 = arith.constant 0 : index
    %c1 = arith.constant 1 : index
    %2 = vector.load %arg1[%c0_2, %c0_3, %c1] : memref<1x16x102xbf16, #tpu.memory_space<vmem>>, vector<1x16x80xbf16>
    %3 = vector.shape_cast %2 : vector<1x16x80xbf16> to vector<16x80xbf16>
    %c0_4 = arith.constant 0 : index
    %c0_5 = arith.constant 0 : index
    %c2 = arith.constant 2 : index
    %4 = vector.load %arg1[%c0_4, %c0_5, %c2] : memref<1x16x102xbf16, #tpu.memory_space<vmem>>, vector<1x16x80xbf16>
    %5 = vector.shape_cast %4 : vector<1x16x80xbf16> to vector<16x80xbf16>
    %c0_6 = arith.constant 0 : index
    %c0_7 = arith.constant 0 : index
    %c10 = arith.constant 10 : index
    %6 = vector.load %arg1[%c0_6, %c0_7, %c10] : memref<1x16x102xbf16, #tpu.memory_space<vmem>>, vector<1x16x80xbf16>
    %7 = vector.shape_cast %6 : vector<1x16x80xbf16> to vector<16x80xbf16>
    %c0_8 = arith.constant 0 : index
    %c0_9 = arith.constant 0 : index
    %c11 = arith.constant 11 : index
    %8 = vector.load %arg1[%c0_8, %c0_9, %c11] : memref<1x16x102xbf16, #tpu.memory_space<vmem>>, vector<1x16x80xbf16>
    %9 = vector.shape_cast %8 : vector<1x16x80xbf16> to vector<16x80xbf16>
    %c0_10 = arith.constant 0 : index
    %c0_11 = arith.constant 0 : index
    %c12 = arith.constant 12 : index
    %10 = vector.load %arg1[%c0_10, %c0_11, %c12] : memref<1x16x102xbf16, #tpu.memory_space<vmem>>, vector<1x16x80xbf16>
    %11 = vector.shape_cast %10 : vector<1x16x80xbf16> to vector<16x80xbf16>
    %c0_12 = arith.constant 0 : index
    %c0_13 = arith.constant 0 : index
    %c20 = arith.constant 20 : index
    %12 = vector.load %arg1[%c0_12, %c0_13, %c20] : memref<1x16x102xbf16, #tpu.memory_space<vmem>>, vector<1x16x80xbf16>
    %13 = vector.shape_cast %12 : vector<1x16x80xbf16> to vector<16x80xbf16>
    %c0_14 = arith.constant 0 : index
    %c0_15 = arith.constant 0 : index
    %c21 = arith.constant 21 : index
    %14 = vector.load %arg1[%c0_14, %c0_15, %c21] : memref<1x16x102xbf16, #tpu.memory_space<vmem>>, vector<1x16x80xbf16>
    %15 = vector.shape_cast %14 : vector<1x16x80xbf16> to vector<16x80xbf16>
    %c0_16 = arith.constant 0 : index
    %c0_17 = arith.constant 0 : index
    %c22 = arith.constant 22 : index
    %16 = vector.load %arg1[%c0_16, %c0_17, %c22] : memref<1x16x102xbf16, #tpu.memory_space<vmem>>, vector<1x16x80xbf16>
    %17 = vector.shape_cast %16 : vector<1x16x80xbf16> to vector<16x80xbf16>
    %18 = tpu.concatenate %1, %3, %5, %7, %9, %11, %13, %15, %17 in 0 : vector<16x80xbf16>, vector<16x80xbf16>, vector<16x80xbf16>, vector<16x80xbf16>, vector<16x80xbf16>, vector<16x80xbf16>, vector<16x80xbf16>, vector<16x80xbf16>, vector<16x80xbf16> -> vector<144x80xbf16>
    %c0_18 = arith.constant 0 : index
    %c0_19 = arith.constant 0 : index
    %19 = vector.load %arg2[%c0_18, %c0_19] : memref<16x144xbf16, #tpu.memory_space<vmem>>, vector<16x144xbf16>
    %cst = arith.constant dense<0.000000e+00> : vector<16x80xf32>
    %20 = tpu.matmul %19, %18, %cst {dimension_numbers = #tpu.dot_dimension_numbers<[1], [0], [0], [1], [0, 0, 1, 1], [], []>} : vector<16x144xbf16>, vector<144x80xbf16>, vector<16x80xf32> -> vector<16x80xf32>
    %21 = tpu.iota {dimensions = array<i32: 1>} : vector<1x80xi32>
    %c10_i32 = arith.constant 10 : i32
    %c0_i32 = arith.constant 0 : i32
    %22 = arith.cmpi eq, %c10_i32, %c0_i32 : i32
    %c1_i32 = arith.constant 1 : i32
    %23 = arith.select %22, %c1_i32, %c10_i32 : i32
    %24 = vector.broadcast %23 : i32 to vector<1x80xi32>
    %25 = arith.remsi %21, %24 : vector<1x80xi32>
    %c0_i32_20 = arith.constant 0 : i32
    %26 = vector.broadcast %c0_i32_20 : i32 to vector<1x80xi32>
    %27 = arith.cmpi ne, %25, %26 : vector<1x80xi32>
    %c0_i32_21 = arith.constant 0 : i32
    %28 = vector.broadcast %c0_i32_21 : i32 to vector<1x80xi32>
    %29 = arith.cmpi slt, %25, %28 : vector<1x80xi32>
    %c0_i32_22 = arith.constant 0 : i32
    %30 = arith.cmpi slt, %23, %c0_i32_22 : i32
    %31 = vector.broadcast %30 : i1 to vector<1x80xi1>
    %32 = vector.broadcast %31 : vector<1x80xi1> to vector<1x80xi1>
    %33 = arith.xori %29, %32 : vector<1x80xi1>
    %34 = arith.andi %33, %27 : vector<1x80xi1>
    %35 = vector.broadcast %23 : i32 to vector<1x80xi32>
    %36 = arith.addi %25, %35 : vector<1x80xi32>
    %37 = arith.select %34, %36, %25 : vector<1x80xi1>, vector<1x80xi32>
    %c8_i32 = arith.constant 8 : i32
    %38 = vector.broadcast %c8_i32 : i32 to vector<1x80xi32>
    %39 = arith.cmpi slt, %37, %38 : vector<1x80xi32>
    %40 = arith.extui %39 : vector<1x80xi1> to vector<1x80xi32>
    %41 = arith.sitofp %40 : vector<1x80xi32> to vector<1x80xf32>
    %42 = vector.broadcast %41 : vector<1x80xf32> to vector<16x80xf32>
    %43 = arith.mulf %20, %42 : vector<16x80xf32>
    %cst_23 = arith.constant dense<0.000000e+00> : vector<16xf32>
    %44 = vector.multi_reduction <add>, %43, %cst_23 [1] : vector<16x80xf32> to vector<16xf32>
    %45 = vector.shape_cast %44 : vector<16xf32> to vector<16x1xf32>
    %cst_24 = arith.constant 1.562500e-02 : f32
    %46 = vector.broadcast %cst_24 : f32 to vector<16x1xf32>
    %47 = arith.mulf %45, %46 : vector<16x1xf32>
    %48 = vector.broadcast %47 : vector<16x1xf32> to vector<16x80xf32>
    %49 = arith.subf %20, %48 : vector<16x80xf32>
    %50 = vector.broadcast %41 : vector<1x80xf32> to vector<16x80xf32>
    %51 = arith.mulf %49, %50 : vector<16x80xf32>
    %52 = arith.mulf %51, %51 : vector<16x80xf32>
    %cst_25 = arith.constant dense<0.000000e+00> : vector<16xf32>
    %53 = vector.multi_reduction <add>, %52, %cst_25 [1] : vector<16x80xf32> to vector<16xf32>
    %54 = vector.shape_cast %53 : vector<16xf32> to vector<16x1xf32>
    %cst_26 = arith.constant 1.562500e-02 : f32
    %55 = vector.broadcast %cst_26 : f32 to vector<16x1xf32>
    %56 = arith.mulf %54, %55 : vector<16x1xf32>
    %57 = vector.broadcast %47 : vector<16x1xf32> to vector<16x80xf32>
    %58 = arith.subf %20, %57 : vector<16x80xf32>
    %cst_27 = arith.constant 9.99999974E-6 : f32
    %59 = vector.broadcast %cst_27 : f32 to vector<16x1xf32>
    %60 = arith.addf %56, %59 : vector<16x1xf32>
    %61 = math.rsqrt %60 : vector<16x1xf32>
    %62 = vector.broadcast %61 : vector<16x1xf32> to vector<16x80xf32>
    %63 = arith.mulf %58, %62 : vector<16x80xf32>
    %cst_28 = arith.constant 0.000000e+00 : f32
    %64 = vector.broadcast %cst_28 : f32 to vector<16x80xf32>
    %65 = arith.maximumf %63, %64 : vector<16x80xf32>
    %c0_29 = arith.constant 0 : index
    %c0_30 = arith.constant 0 : index
    %c0_31 = arith.constant 0 : index
    %66 = vector.load %arg3[%c0_29, %c0_30, %c0_31] : memref<1x16x80xbf16, #tpu.memory_space<vmem>>, vector<1x16x80xbf16>
    %67 = vector.shape_cast %66 : vector<1x16x80xbf16> to vector<16x80xbf16>
    %68 = arith.extf %67 : vector<16x80xbf16> to vector<16x80xf32>
    %69 = arith.addf %65, %68 : vector<16x80xf32>
    %70 = arith.truncf %69 : vector<16x80xf32> to vector<16x80xbf16>
    %c0_32 = arith.constant 0 : index
    %c0_33 = arith.constant 0 : index
    %c0_34 = arith.constant 0 : index
    %71 = vector.load %arg4[%c0_32, %c0_33, %c0_34] : memref<1x16x80xbf16, #tpu.memory_space<vmem>>, vector<1x16x80xbf16>
    %72 = vector.shape_cast %71 : vector<1x16x80xbf16> to vector<16x80xbf16>
    %73 = vector.shape_cast %70 : vector<16x80xbf16> to vector<1x16x80xbf16>
    tpu.vector_store %arg4[%c0_32, %c0_33, %c0_34], %73 {strides = array<i32>} : memref<1x16x80xbf16, #tpu.memory_space<vmem>>, vector<1x16x80xbf16>,
    return
  }
  func.func @transform_0(%arg0: i32) -> (i32, i32, i32) {
    %c0_i32 = arith.constant 0 : i32
    %c0_i32_0 = arith.constant 0 : i32
    %c0_i32_1 = arith.constant 0 : i32
    return %arg0, %c0_i32, %c0_i32_0 : i32, i32, i32
  }
  func.func @transform_1(%arg0: i32) -> (i32, i32) {
    %c0_i32 = arith.constant 0 : i32
    %c0_i32_0 = arith.constant 0 : i32
    %c0_i32_1 = arith.constant 0 : i32
    return %c0_i32, %c0_i32_0 : i32, i32
  }
  func.func @transform_2(%arg0: i32) -> (i32, i32, i32) {
    %c0_i32 = arith.constant 0 : i32
    %c0_i32_0 = arith.constant 0 : i32
    %c0_i32_1 = arith.constant 0 : i32
    return %arg0, %c0_i32, %c0_i32_0 : i32, i32, i32
  }
  func.func @transform_3(%arg0: i32) -> (i32, i32, i32) {
    %c0_i32 = arith.constant 0 : i32
    %c0_i32_0 = arith.constant 0 : i32
    %c0_i32_1 = arith.constant 0 : i32
    return %arg0, %c0_i32, %c0_i32_0 : i32, i32, i32
  }
}

module attributes {stable_mosaic.version = 11 : i64} {
  func.func @kernel(%arg0: i32, %arg1: memref<1x16x82xbf16, #tpu.memory_space<vmem>>, %arg2: memref<32x64xbf16, #tpu.memory_space<vmem>>, %arg3: memref<1x4x8x72xbf16, #tpu.memory_space<vmem>>) attributes {dimension_semantics = [#tpu.dimension_semantics<parallel>], iteration_bounds = array<i64: 2>, scalar_prefetch = 0 : i64, scratch_operands = 0 : i64, tpu.core_type = #tpu.core_type<tc>, window_params = [{transform_indices = @transform_0, window_bounds = array<i64: 1, 16, 82>}, {pipeline_mode = #tpu.pipeline_mode<synchronous>, transform_indices = @transform_1, window_bounds = array<i64: 32, 64>}, {transform_indices = @transform_2, window_bounds = array<i64: 1, 4, 8, 72>}]} {
    %c0 = arith.constant 0 : index
    %c0_0 = arith.constant 0 : index
    %c0_1 = arith.constant 0 : index
    %0 = vector.load %arg1[%c0, %c0_0, %c0_1] : memref<1x16x82xbf16, #tpu.memory_space<vmem>>, vector<1x16x72xbf16>
    %1 = vector.shape_cast %0 : vector<1x16x72xbf16> to vector<16x72xbf16>
    %c0_2 = arith.constant 0 : index
    %c0_3 = arith.constant 0 : index
    %c1 = arith.constant 1 : index
    %2 = vector.load %arg1[%c0_2, %c0_3, %c1] : memref<1x16x82xbf16, #tpu.memory_space<vmem>>, vector<1x16x72xbf16>
    %3 = vector.shape_cast %2 : vector<1x16x72xbf16> to vector<16x72xbf16>
    %c0_4 = arith.constant 0 : index
    %c0_5 = arith.constant 0 : index
    %c9 = arith.constant 9 : index
    %4 = vector.load %arg1[%c0_4, %c0_5, %c9] : memref<1x16x82xbf16, #tpu.memory_space<vmem>>, vector<1x16x72xbf16>
    %5 = vector.shape_cast %4 : vector<1x16x72xbf16> to vector<16x72xbf16>
    %c0_6 = arith.constant 0 : index
    %c0_7 = arith.constant 0 : index
    %c10 = arith.constant 10 : index
    %6 = vector.load %arg1[%c0_6, %c0_7, %c10] : memref<1x16x82xbf16, #tpu.memory_space<vmem>>, vector<1x16x72xbf16>
    %7 = vector.shape_cast %6 : vector<1x16x72xbf16> to vector<16x72xbf16>
    %8 = tpu.concatenate %1, %3, %5, %7 in 0 : vector<16x72xbf16>, vector<16x72xbf16>, vector<16x72xbf16>, vector<16x72xbf16> -> vector<64x72xbf16>
    %c0_8 = arith.constant 0 : index
    %c0_9 = arith.constant 0 : index
    %9 = vector.load %arg2[%c0_8, %c0_9] : memref<32x64xbf16, #tpu.memory_space<vmem>>, vector<32x64xbf16>
    %cst = arith.constant dense<0.000000e+00> : vector<32x72xf32>
    %10 = tpu.matmul %9, %8, %cst {dimension_numbers = #tpu.dot_dimension_numbers<[1], [0], [0], [1], [0, 0, 1, 1], [], []>} : vector<32x64xbf16>, vector<64x72xbf16>, vector<32x72xf32> -> vector<32x72xf32>
    %11 = tpu.iota {dimensions = array<i32: 1>} : vector<1x72xi32>
    %c9_i32 = arith.constant 9 : i32
    %c0_i32 = arith.constant 0 : i32
    %12 = arith.cmpi eq, %c9_i32, %c0_i32 : i32
    %c1_i32 = arith.constant 1 : i32
    %13 = arith.select %12, %c1_i32, %c9_i32 : i32
    %14 = vector.broadcast %13 : i32 to vector<1x72xi32>
    %15 = arith.remsi %11, %14 : vector<1x72xi32>
    %c0_i32_10 = arith.constant 0 : i32
    %16 = vector.broadcast %c0_i32_10 : i32 to vector<1x72xi32>
    %17 = arith.cmpi ne, %15, %16 : vector<1x72xi32>
    %c0_i32_11 = arith.constant 0 : i32
    %18 = vector.broadcast %c0_i32_11 : i32 to vector<1x72xi32>
    %19 = arith.cmpi slt, %15, %18 : vector<1x72xi32>
    %c0_i32_12 = arith.constant 0 : i32
    %20 = arith.cmpi slt, %13, %c0_i32_12 : i32
    %21 = vector.broadcast %20 : i1 to vector<1x72xi1>
    %22 = vector.broadcast %21 : vector<1x72xi1> to vector<1x72xi1>
    %23 = arith.xori %19, %22 : vector<1x72xi1>
    %24 = arith.andi %23, %17 : vector<1x72xi1>
    %25 = vector.broadcast %13 : i32 to vector<1x72xi32>
    %26 = arith.addi %15, %25 : vector<1x72xi32>
    %27 = arith.select %24, %26, %15 : vector<1x72xi1>, vector<1x72xi32>
    %c8_i32 = arith.constant 8 : i32
    %28 = vector.broadcast %c8_i32 : i32 to vector<1x72xi32>
    %29 = arith.cmpi slt, %27, %28 : vector<1x72xi32>
    %30 = arith.extui %29 : vector<1x72xi1> to vector<1x72xi32>
    %31 = arith.sitofp %30 : vector<1x72xi32> to vector<1x72xf32>
    %cst_13 = arith.constant 0.000000e+00 : f32
    %32 = vector.broadcast %cst_13 : f32 to vector<8x1xf32>
    %33 = vector.extract_strided_slice %10 {offsets = [0, 0], sizes = [8, 72], strides = [1, 1]} : vector<32x72xf32> to vector<8x72xf32>
    %34 = vector.broadcast %31 : vector<1x72xf32> to vector<8x72xf32>
    %35 = arith.mulf %33, %34 : vector<8x72xf32>
    %cst_14 = arith.constant dense<0.000000e+00> : vector<8xf32>
    %36 = vector.multi_reduction <add>, %35, %cst_14 [1] : vector<8x72xf32> to vector<8xf32>
    %37 = vector.shape_cast %36 : vector<8xf32> to vector<8x1xf32>
    %38 = arith.addf %32, %37 : vector<8x1xf32>
    %39 = vector.extract_strided_slice %10 {offsets = [8, 0], sizes = [8, 72], strides = [1, 1]} : vector<32x72xf32> to vector<8x72xf32>
    %40 = vector.broadcast %31 : vector<1x72xf32> to vector<8x72xf32>
    %41 = arith.mulf %39, %40 : vector<8x72xf32>
    %cst_15 = arith.constant dense<0.000000e+00> : vector<8xf32>
    %42 = vector.multi_reduction <add>, %41, %cst_15 [1] : vector<8x72xf32> to vector<8xf32>
    %43 = vector.shape_cast %42 : vector<8xf32> to vector<8x1xf32>
    %44 = arith.addf %38, %43 : vector<8x1xf32>
    %45 = vector.extract_strided_slice %10 {offsets = [16, 0], sizes = [8, 72], strides = [1, 1]} : vector<32x72xf32> to vector<8x72xf32>
    %46 = vector.broadcast %31 : vector<1x72xf32> to vector<8x72xf32>
    %47 = arith.mulf %45, %46 : vector<8x72xf32>
    %cst_16 = arith.constant dense<0.000000e+00> : vector<8xf32>
    %48 = vector.multi_reduction <add>, %47, %cst_16 [1] : vector<8x72xf32> to vector<8xf32>
    %49 = vector.shape_cast %48 : vector<8xf32> to vector<8x1xf32>
    %50 = arith.addf %44, %49 : vector<8x1xf32>
    %51 = vector.extract_strided_slice %10 {offsets = [24, 0], sizes = [8, 72], strides = [1, 1]} : vector<32x72xf32> to vector<8x72xf32>
    %52 = vector.broadcast %31 : vector<1x72xf32> to vector<8x72xf32>
    %53 = arith.mulf %51, %52 : vector<8x72xf32>
    %cst_17 = arith.constant dense<0.000000e+00> : vector<8xf32>
    %54 = vector.multi_reduction <add>, %53, %cst_17 [1] : vector<8x72xf32> to vector<8xf32>
    %55 = vector.shape_cast %54 : vector<8xf32> to vector<8x1xf32>
    %56 = arith.addf %50, %55 : vector<8x1xf32>
    %cst_18 = arith.constant 3.906250e-03 : f32
    %57 = vector.broadcast %cst_18 : f32 to vector<8x1xf32>
    %58 = arith.mulf %56, %57 : vector<8x1xf32>
    %cst_19 = arith.constant 0.000000e+00 : f32
    %59 = vector.broadcast %cst_19 : f32 to vector<8x1xf32>
    %60 = vector.extract_strided_slice %10 {offsets = [0, 0], sizes = [8, 72], strides = [1, 1]} : vector<32x72xf32> to vector<8x72xf32>
    %61 = vector.broadcast %58 : vector<8x1xf32> to vector<8x72xf32>
    %62 = arith.subf %60, %61 : vector<8x72xf32>
    %63 = vector.broadcast %31 : vector<1x72xf32> to vector<8x72xf32>
    %64 = arith.mulf %62, %63 : vector<8x72xf32>
    %65 = arith.mulf %64, %64 : vector<8x72xf32>
    %cst_20 = arith.constant dense<0.000000e+00> : vector<8xf32>
    %66 = vector.multi_reduction <add>, %65, %cst_20 [1] : vector<8x72xf32> to vector<8xf32>
    %67 = vector.shape_cast %66 : vector<8xf32> to vector<8x1xf32>
    %68 = arith.addf %59, %67 : vector<8x1xf32>
    %69 = vector.extract_strided_slice %10 {offsets = [8, 0], sizes = [8, 72], strides = [1, 1]} : vector<32x72xf32> to vector<8x72xf32>
    %70 = vector.broadcast %58 : vector<8x1xf32> to vector<8x72xf32>
    %71 = arith.subf %69, %70 : vector<8x72xf32>
    %72 = vector.broadcast %31 : vector<1x72xf32> to vector<8x72xf32>
    %73 = arith.mulf %71, %72 : vector<8x72xf32>
    %74 = arith.mulf %73, %73 : vector<8x72xf32>
    %cst_21 = arith.constant dense<0.000000e+00> : vector<8xf32>
    %75 = vector.multi_reduction <add>, %74, %cst_21 [1] : vector<8x72xf32> to vector<8xf32>
    %76 = vector.shape_cast %75 : vector<8xf32> to vector<8x1xf32>
    %77 = arith.addf %68, %76 : vector<8x1xf32>
    %78 = vector.extract_strided_slice %10 {offsets = [16, 0], sizes = [8, 72], strides = [1, 1]} : vector<32x72xf32> to vector<8x72xf32>
    %79 = vector.broadcast %58 : vector<8x1xf32> to vector<8x72xf32>
    %80 = arith.subf %78, %79 : vector<8x72xf32>
    %81 = vector.broadcast %31 : vector<1x72xf32> to vector<8x72xf32>
    %82 = arith.mulf %80, %81 : vector<8x72xf32>
    %83 = arith.mulf %82, %82 : vector<8x72xf32>
    %cst_22 = arith.constant dense<0.000000e+00> : vector<8xf32>
    %84 = vector.multi_reduction <add>, %83, %cst_22 [1] : vector<8x72xf32> to vector<8xf32>
    %85 = vector.shape_cast %84 : vector<8xf32> to vector<8x1xf32>
    %86 = arith.addf %77, %85 : vector<8x1xf32>
    %87 = vector.extract_strided_slice %10 {offsets = [24, 0], sizes = [8, 72], strides = [1, 1]} : vector<32x72xf32> to vector<8x72xf32>
    %88 = vector.broadcast %58 : vector<8x1xf32> to vector<8x72xf32>
    %89 = arith.subf %87, %88 : vector<8x72xf32>
    %90 = vector.broadcast %31 : vector<1x72xf32> to vector<8x72xf32>
    %91 = arith.mulf %89, %90 : vector<8x72xf32>
    %92 = arith.mulf %91, %91 : vector<8x72xf32>
    %cst_23 = arith.constant dense<0.000000e+00> : vector<8xf32>
    %93 = vector.multi_reduction <add>, %92, %cst_23 [1] : vector<8x72xf32> to vector<8xf32>
    %94 = vector.shape_cast %93 : vector<8xf32> to vector<8x1xf32>
    %95 = arith.addf %86, %94 : vector<8x1xf32>
    %cst_24 = arith.constant 3.906250e-03 : f32
    %96 = vector.broadcast %cst_24 : f32 to vector<8x1xf32>
    %97 = arith.mulf %95, %96 : vector<8x1xf32>
    %cst_25 = arith.constant 9.99999974E-6 : f32
    %98 = vector.broadcast %cst_25 : f32 to vector<8x1xf32>
    %99 = arith.addf %97, %98 : vector<8x1xf32>
    %100 = math.rsqrt %99 : vector<8x1xf32>
    %101 = vector.extract_strided_slice %10 {offsets = [0, 0], sizes = [8, 72], strides = [1, 1]} : vector<32x72xf32> to vector<8x72xf32>
    %102 = vector.broadcast %58 : vector<8x1xf32> to vector<8x72xf32>
    %103 = arith.subf %101, %102 : vector<8x72xf32>
    %104 = vector.broadcast %100 : vector<8x1xf32> to vector<8x72xf32>
    %105 = arith.mulf %103, %104 : vector<8x72xf32>
    %cst_26 = arith.constant 0.000000e+00 : f32
    %106 = vector.broadcast %cst_26 : f32 to vector<8x72xf32>
    %107 = arith.maximumf %105, %106 : vector<8x72xf32>
    %108 = arith.truncf %107 : vector<8x72xf32> to vector<8x72xbf16>
    %c0_27 = arith.constant 0 : index
    %c0_28 = arith.constant 0 : index
    %c0_29 = arith.constant 0 : index
    %c0_30 = arith.constant 0 : index
    %109 = vector.load %arg3[%c0_27, %c0_28, %c0_29, %c0_30] : memref<1x4x8x72xbf16, #tpu.memory_space<vmem>>, vector<1x1x8x72xbf16>
    %110 = vector.shape_cast %109 : vector<1x1x8x72xbf16> to vector<8x72xbf16>
    %111 = vector.shape_cast %108 : vector<8x72xbf16> to vector<1x1x8x72xbf16>
    tpu.vector_store %arg3[%c0_27, %c0_28, %c0_29, %c0_30], %111 {strides = array<i32>} : memref<1x4x8x72xbf16, #tpu.memory_space<vmem>>, vector<1x1x8x72xbf16>,
    %112 = vector.extract_strided_slice %10 {offsets = [8, 0], sizes = [8, 72], strides = [1, 1]} : vector<32x72xf32> to vector<8x72xf32>
    %113 = vector.broadcast %58 : vector<8x1xf32> to vector<8x72xf32>
    %114 = arith.subf %112, %113 : vector<8x72xf32>
    %115 = vector.broadcast %100 : vector<8x1xf32> to vector<8x72xf32>
    %116 = arith.mulf %114, %115 : vector<8x72xf32>
    %cst_31 = arith.constant 0.000000e+00 : f32
    %117 = vector.broadcast %cst_31 : f32 to vector<8x72xf32>
    %118 = arith.maximumf %116, %117 : vector<8x72xf32>
    %119 = arith.truncf %118 : vector<8x72xf32> to vector<8x72xbf16>
    %c0_32 = arith.constant 0 : index
    %c1_33 = arith.constant 1 : index
    %c0_34 = arith.constant 0 : index
    %c0_35 = arith.constant 0 : index
    %120 = vector.load %arg3[%c0_32, %c1_33, %c0_34, %c0_35] : memref<1x4x8x72xbf16, #tpu.memory_space<vmem>>, vector<1x1x8x72xbf16>
    %121 = vector.shape_cast %120 : vector<1x1x8x72xbf16> to vector<8x72xbf16>
    %122 = vector.shape_cast %119 : vector<8x72xbf16> to vector<1x1x8x72xbf16>
    tpu.vector_store %arg3[%c0_32, %c1_33, %c0_34, %c0_35], %122 {strides = array<i32>} : memref<1x4x8x72xbf16, #tpu.memory_space<vmem>>, vector<1x1x8x72xbf16>,
    %123 = vector.extract_strided_slice %10 {offsets = [16, 0], sizes = [8, 72], strides = [1, 1]} : vector<32x72xf32> to vector<8x72xf32>
    %124 = vector.broadcast %58 : vector<8x1xf32> to vector<8x72xf32>
    %125 = arith.subf %123, %124 : vector<8x72xf32>
    %126 = vector.broadcast %100 : vector<8x1xf32> to vector<8x72xf32>
    %127 = arith.mulf %125, %126 : vector<8x72xf32>
    %cst_36 = arith.constant 0.000000e+00 : f32
    %128 = vector.broadcast %cst_36 : f32 to vector<8x72xf32>
    %129 = arith.maximumf %127, %128 : vector<8x72xf32>
    %130 = arith.truncf %129 : vector<8x72xf32> to vector<8x72xbf16>
    %c0_37 = arith.constant 0 : index
    %c2 = arith.constant 2 : index
    %c0_38 = arith.constant 0 : index
    %c0_39 = arith.constant 0 : index
    %131 = vector.load %arg3[%c0_37, %c2, %c0_38, %c0_39] : memref<1x4x8x72xbf16, #tpu.memory_space<vmem>>, vector<1x1x8x72xbf16>
    %132 = vector.shape_cast %131 : vector<1x1x8x72xbf16> to vector<8x72xbf16>
    %133 = vector.shape_cast %130 : vector<8x72xbf16> to vector<1x1x8x72xbf16>
    tpu.vector_store %arg3[%c0_37, %c2, %c0_38, %c0_39], %133 {strides = array<i32>} : memref<1x4x8x72xbf16, #tpu.memory_space<vmem>>, vector<1x1x8x72xbf16>,
    %134 = vector.extract_strided_slice %10 {offsets = [24, 0], sizes = [8, 72], strides = [1, 1]} : vector<32x72xf32> to vector<8x72xf32>
    %135 = vector.broadcast %58 : vector<8x1xf32> to vector<8x72xf32>
    %136 = arith.subf %134, %135 : vector<8x72xf32>
    %137 = vector.broadcast %100 : vector<8x1xf32> to vector<8x72xf32>
    %138 = arith.mulf %136, %137 : vector<8x72xf32>
    %cst_40 = arith.constant 0.000000e+00 : f32
    %139 = vector.broadcast %cst_40 : f32 to vector<8x72xf32>
    %140 = arith.maximumf %138, %139 : vector<8x72xf32>
    %141 = arith.truncf %140 : vector<8x72xf32> to vector<8x72xbf16>
    %c0_41 = arith.constant 0 : index
    %c3 = arith.constant 3 : index
    %c0_42 = arith.constant 0 : index
    %c0_43 = arith.constant 0 : index
    %142 = vector.load %arg3[%c0_41, %c3, %c0_42, %c0_43] : memref<1x4x8x72xbf16, #tpu.memory_space<vmem>>, vector<1x1x8x72xbf16>
    %143 = vector.shape_cast %142 : vector<1x1x8x72xbf16> to vector<8x72xbf16>
    %144 = vector.shape_cast %141 : vector<8x72xbf16> to vector<1x1x8x72xbf16>
    tpu.vector_store %arg3[%c0_41, %c3, %c0_42, %c0_43], %144 {strides = array<i32>} : memref<1x4x8x72xbf16, #tpu.memory_space<vmem>>, vector<1x1x8x72xbf16>,
    return
  }
  func.func @transform_0(%arg0: i32) -> (i32, i32, i32) {
    %c0_i32 = arith.constant 0 : i32
    %c0_i32_0 = arith.constant 0 : i32
    %c0_i32_1 = arith.constant 0 : i32
    return %arg0, %c0_i32, %c0_i32_0 : i32, i32, i32
  }
  func.func @transform_1(%arg0: i32) -> (i32, i32) {
    %c0_i32 = arith.constant 0 : i32
    %c0_i32_0 = arith.constant 0 : i32
    %c0_i32_1 = arith.constant 0 : i32
    return %c0_i32, %c0_i32_0 : i32, i32
  }
  func.func @transform_2(%arg0: i32) -> (i32, i32, i32, i32) {
    %c0_i32 = arith.constant 0 : i32
    %c0_i32_0 = arith.constant 0 : i32
    %c0_i32_1 = arith.constant 0 : i32
    %c0_i32_2 = arith.constant 0 : i32
    return %arg0, %c0_i32, %c0_i32_0, %c0_i32_1 : i32, i32, i32, i32
  }
}

module attributes {stable_mosaic.version = 11 : i64} {
  func.func @kernel(%arg0: i32, %arg1: memref<1x8x490xbf16, #tpu.memory_space<vmem>>, %arg2: memref<3x392xbf16, #tpu.memory_space<vmem>>, %arg3: memref<3x1xf32, #tpu.memory_space<vmem>>, %arg4: memref<1x3x352xf32, #tpu.memory_space<vmem>>) attributes {dimension_semantics = [#tpu.dimension_semantics<parallel>], iteration_bounds = array<i64: 2>, scalar_prefetch = 0 : i64, scratch_operands = 0 : i64, tpu.core_type = #tpu.core_type<tc>, window_params = [{transform_indices = @transform_0, window_bounds = array<i64: 1, 8, 490>}, {pipeline_mode = #tpu.pipeline_mode<synchronous>, transform_indices = @transform_1, window_bounds = array<i64: 3, 392>}, {pipeline_mode = #tpu.pipeline_mode<synchronous>, transform_indices = @transform_2, window_bounds = array<i64: 3, 1>}, {transform_indices = @transform_3, window_bounds = array<i64: 1, 3, 352>}]} {
    %c0 = arith.constant 0 : index
    %c0_0 = arith.constant 0 : index
    %c0_1 = arith.constant 0 : index
    %0 = vector.load %arg1[%c0, %c0_0, %c0_1] : memref<1x8x490xbf16, #tpu.memory_space<vmem>>, vector<1x8x352xbf16>
    %1 = vector.shape_cast %0 : vector<1x8x352xbf16> to vector<8x352xbf16>
    %c0_2 = arith.constant 0 : index
    %c0_3 = arith.constant 0 : index
    %c1 = arith.constant 1 : index
    %2 = vector.load %arg1[%c0_2, %c0_3, %c1] : memref<1x8x490xbf16, #tpu.memory_space<vmem>>, vector<1x8x352xbf16>
    %3 = vector.shape_cast %2 : vector<1x8x352xbf16> to vector<8x352xbf16>
    %c0_4 = arith.constant 0 : index
    %c0_5 = arith.constant 0 : index
    %c2 = arith.constant 2 : index
    %4 = vector.load %arg1[%c0_4, %c0_5, %c2] : memref<1x8x490xbf16, #tpu.memory_space<vmem>>, vector<1x8x352xbf16>
    %5 = vector.shape_cast %4 : vector<1x8x352xbf16> to vector<8x352xbf16>
    %c0_6 = arith.constant 0 : index
    %c0_7 = arith.constant 0 : index
    %c3 = arith.constant 3 : index
    %6 = vector.load %arg1[%c0_6, %c0_7, %c3] : memref<1x8x490xbf16, #tpu.memory_space<vmem>>, vector<1x8x352xbf16>
    %7 = vector.shape_cast %6 : vector<1x8x352xbf16> to vector<8x352xbf16>
    %c0_8 = arith.constant 0 : index
    %c0_9 = arith.constant 0 : index
    %c4 = arith.constant 4 : index
    %8 = vector.load %arg1[%c0_8, %c0_9, %c4] : memref<1x8x490xbf16, #tpu.memory_space<vmem>>, vector<1x8x352xbf16>
    %9 = vector.shape_cast %8 : vector<1x8x352xbf16> to vector<8x352xbf16>
    %c0_10 = arith.constant 0 : index
    %c0_11 = arith.constant 0 : index
    %c5 = arith.constant 5 : index
    %10 = vector.load %arg1[%c0_10, %c0_11, %c5] : memref<1x8x490xbf16, #tpu.memory_space<vmem>>, vector<1x8x352xbf16>
    %11 = vector.shape_cast %10 : vector<1x8x352xbf16> to vector<8x352xbf16>
    %c0_12 = arith.constant 0 : index
    %c0_13 = arith.constant 0 : index
    %c6 = arith.constant 6 : index
    %12 = vector.load %arg1[%c0_12, %c0_13, %c6] : memref<1x8x490xbf16, #tpu.memory_space<vmem>>, vector<1x8x352xbf16>
    %13 = vector.shape_cast %12 : vector<1x8x352xbf16> to vector<8x352xbf16>
    %c0_14 = arith.constant 0 : index
    %c0_15 = arith.constant 0 : index
    %c22 = arith.constant 22 : index
    %14 = vector.load %arg1[%c0_14, %c0_15, %c22] : memref<1x8x490xbf16, #tpu.memory_space<vmem>>, vector<1x8x352xbf16>
    %15 = vector.shape_cast %14 : vector<1x8x352xbf16> to vector<8x352xbf16>
    %c0_16 = arith.constant 0 : index
    %c0_17 = arith.constant 0 : index
    %c23 = arith.constant 23 : index
    %16 = vector.load %arg1[%c0_16, %c0_17, %c23] : memref<1x8x490xbf16, #tpu.memory_space<vmem>>, vector<1x8x352xbf16>
    %17 = vector.shape_cast %16 : vector<1x8x352xbf16> to vector<8x352xbf16>
    %c0_18 = arith.constant 0 : index
    %c0_19 = arith.constant 0 : index
    %c24 = arith.constant 24 : index
    %18 = vector.load %arg1[%c0_18, %c0_19, %c24] : memref<1x8x490xbf16, #tpu.memory_space<vmem>>, vector<1x8x352xbf16>
    %19 = vector.shape_cast %18 : vector<1x8x352xbf16> to vector<8x352xbf16>
    %c0_20 = arith.constant 0 : index
    %c0_21 = arith.constant 0 : index
    %c25 = arith.constant 25 : index
    %20 = vector.load %arg1[%c0_20, %c0_21, %c25] : memref<1x8x490xbf16, #tpu.memory_space<vmem>>, vector<1x8x352xbf16>
    %21 = vector.shape_cast %20 : vector<1x8x352xbf16> to vector<8x352xbf16>
    %c0_22 = arith.constant 0 : index
    %c0_23 = arith.constant 0 : index
    %c26 = arith.constant 26 : index
    %22 = vector.load %arg1[%c0_22, %c0_23, %c26] : memref<1x8x490xbf16, #tpu.memory_space<vmem>>, vector<1x8x352xbf16>
    %23 = vector.shape_cast %22 : vector<1x8x352xbf16> to vector<8x352xbf16>
    %c0_24 = arith.constant 0 : index
    %c0_25 = arith.constant 0 : index
    %c27 = arith.constant 27 : index
    %24 = vector.load %arg1[%c0_24, %c0_25, %c27] : memref<1x8x490xbf16, #tpu.memory_space<vmem>>, vector<1x8x352xbf16>
    %25 = vector.shape_cast %24 : vector<1x8x352xbf16> to vector<8x352xbf16>
    %c0_26 = arith.constant 0 : index
    %c0_27 = arith.constant 0 : index
    %c28 = arith.constant 28 : index
    %26 = vector.load %arg1[%c0_26, %c0_27, %c28] : memref<1x8x490xbf16, #tpu.memory_space<vmem>>, vector<1x8x352xbf16>
    %27 = vector.shape_cast %26 : vector<1x8x352xbf16> to vector<8x352xbf16>
    %c0_28 = arith.constant 0 : index
    %c0_29 = arith.constant 0 : index
    %c44 = arith.constant 44 : index
    %28 = vector.load %arg1[%c0_28, %c0_29, %c44] : memref<1x8x490xbf16, #tpu.memory_space<vmem>>, vector<1x8x352xbf16>
    %29 = vector.shape_cast %28 : vector<1x8x352xbf16> to vector<8x352xbf16>
    %c0_30 = arith.constant 0 : index
    %c0_31 = arith.constant 0 : index
    %c45 = arith.constant 45 : index
    %30 = vector.load %arg1[%c0_30, %c0_31, %c45] : memref<1x8x490xbf16, #tpu.memory_space<vmem>>, vector<1x8x352xbf16>
    %31 = vector.shape_cast %30 : vector<1x8x352xbf16> to vector<8x352xbf16>
    %c0_32 = arith.constant 0 : index
    %c0_33 = arith.constant 0 : index
    %c46 = arith.constant 46 : index
    %32 = vector.load %arg1[%c0_32, %c0_33, %c46] : memref<1x8x490xbf16, #tpu.memory_space<vmem>>, vector<1x8x352xbf16>
    %33 = vector.shape_cast %32 : vector<1x8x352xbf16> to vector<8x352xbf16>
    %c0_34 = arith.constant 0 : index
    %c0_35 = arith.constant 0 : index
    %c47 = arith.constant 47 : index
    %34 = vector.load %arg1[%c0_34, %c0_35, %c47] : memref<1x8x490xbf16, #tpu.memory_space<vmem>>, vector<1x8x352xbf16>
    %35 = vector.shape_cast %34 : vector<1x8x352xbf16> to vector<8x352xbf16>
    %c0_36 = arith.constant 0 : index
    %c0_37 = arith.constant 0 : index
    %c48 = arith.constant 48 : index
    %36 = vector.load %arg1[%c0_36, %c0_37, %c48] : memref<1x8x490xbf16, #tpu.memory_space<vmem>>, vector<1x8x352xbf16>
    %37 = vector.shape_cast %36 : vector<1x8x352xbf16> to vector<8x352xbf16>
    %c0_38 = arith.constant 0 : index
    %c0_39 = arith.constant 0 : index
    %c49 = arith.constant 49 : index
    %38 = vector.load %arg1[%c0_38, %c0_39, %c49] : memref<1x8x490xbf16, #tpu.memory_space<vmem>>, vector<1x8x352xbf16>
    %39 = vector.shape_cast %38 : vector<1x8x352xbf16> to vector<8x352xbf16>
    %c0_40 = arith.constant 0 : index
    %c0_41 = arith.constant 0 : index
    %c50 = arith.constant 50 : index
    %40 = vector.load %arg1[%c0_40, %c0_41, %c50] : memref<1x8x490xbf16, #tpu.memory_space<vmem>>, vector<1x8x352xbf16>
    %41 = vector.shape_cast %40 : vector<1x8x352xbf16> to vector<8x352xbf16>
    %c0_42 = arith.constant 0 : index
    %c0_43 = arith.constant 0 : index
    %c66 = arith.constant 66 : index
    %42 = vector.load %arg1[%c0_42, %c0_43, %c66] : memref<1x8x490xbf16, #tpu.memory_space<vmem>>, vector<1x8x352xbf16>
    %43 = vector.shape_cast %42 : vector<1x8x352xbf16> to vector<8x352xbf16>
    %c0_44 = arith.constant 0 : index
    %c0_45 = arith.constant 0 : index
    %c67 = arith.constant 67 : index
    %44 = vector.load %arg1[%c0_44, %c0_45, %c67] : memref<1x8x490xbf16, #tpu.memory_space<vmem>>, vector<1x8x352xbf16>
    %45 = vector.shape_cast %44 : vector<1x8x352xbf16> to vector<8x352xbf16>
    %c0_46 = arith.constant 0 : index
    %c0_47 = arith.constant 0 : index
    %c68 = arith.constant 68 : index
    %46 = vector.load %arg1[%c0_46, %c0_47, %c68] : memref<1x8x490xbf16, #tpu.memory_space<vmem>>, vector<1x8x352xbf16>
    %47 = vector.shape_cast %46 : vector<1x8x352xbf16> to vector<8x352xbf16>
    %c0_48 = arith.constant 0 : index
    %c0_49 = arith.constant 0 : index
    %c69 = arith.constant 69 : index
    %48 = vector.load %arg1[%c0_48, %c0_49, %c69] : memref<1x8x490xbf16, #tpu.memory_space<vmem>>, vector<1x8x352xbf16>
    %49 = vector.shape_cast %48 : vector<1x8x352xbf16> to vector<8x352xbf16>
    %c0_50 = arith.constant 0 : index
    %c0_51 = arith.constant 0 : index
    %c70 = arith.constant 70 : index
    %50 = vector.load %arg1[%c0_50, %c0_51, %c70] : memref<1x8x490xbf16, #tpu.memory_space<vmem>>, vector<1x8x352xbf16>
    %51 = vector.shape_cast %50 : vector<1x8x352xbf16> to vector<8x352xbf16>
    %c0_52 = arith.constant 0 : index
    %c0_53 = arith.constant 0 : index
    %c71 = arith.constant 71 : index
    %52 = vector.load %arg1[%c0_52, %c0_53, %c71] : memref<1x8x490xbf16, #tpu.memory_space<vmem>>, vector<1x8x352xbf16>
    %53 = vector.shape_cast %52 : vector<1x8x352xbf16> to vector<8x352xbf16>
    %c0_54 = arith.constant 0 : index
    %c0_55 = arith.constant 0 : index
    %c72 = arith.constant 72 : index
    %54 = vector.load %arg1[%c0_54, %c0_55, %c72] : memref<1x8x490xbf16, #tpu.memory_space<vmem>>, vector<1x8x352xbf16>
    %55 = vector.shape_cast %54 : vector<1x8x352xbf16> to vector<8x352xbf16>
    %c0_56 = arith.constant 0 : index
    %c0_57 = arith.constant 0 : index
    %c88 = arith.constant 88 : index
    %56 = vector.load %arg1[%c0_56, %c0_57, %c88] : memref<1x8x490xbf16, #tpu.memory_space<vmem>>, vector<1x8x352xbf16>
    %57 = vector.shape_cast %56 : vector<1x8x352xbf16> to vector<8x352xbf16>
    %c0_58 = arith.constant 0 : index
    %c0_59 = arith.constant 0 : index
    %c89 = arith.constant 89 : index
    %58 = vector.load %arg1[%c0_58, %c0_59, %c89] : memref<1x8x490xbf16, #tpu.memory_space<vmem>>, vector<1x8x352xbf16>
    %59 = vector.shape_cast %58 : vector<1x8x352xbf16> to vector<8x352xbf16>
    %c0_60 = arith.constant 0 : index
    %c0_61 = arith.constant 0 : index
    %c90 = arith.constant 90 : index
    %60 = vector.load %arg1[%c0_60, %c0_61, %c90] : memref<1x8x490xbf16, #tpu.memory_space<vmem>>, vector<1x8x352xbf16>
    %61 = vector.shape_cast %60 : vector<1x8x352xbf16> to vector<8x352xbf16>
    %c0_62 = arith.constant 0 : index
    %c0_63 = arith.constant 0 : index
    %c91 = arith.constant 91 : index
    %62 = vector.load %arg1[%c0_62, %c0_63, %c91] : memref<1x8x490xbf16, #tpu.memory_space<vmem>>, vector<1x8x352xbf16>
    %63 = vector.shape_cast %62 : vector<1x8x352xbf16> to vector<8x352xbf16>
    %c0_64 = arith.constant 0 : index
    %c0_65 = arith.constant 0 : index
    %c92 = arith.constant 92 : index
    %64 = vector.load %arg1[%c0_64, %c0_65, %c92] : memref<1x8x490xbf16, #tpu.memory_space<vmem>>, vector<1x8x352xbf16>
    %65 = vector.shape_cast %64 : vector<1x8x352xbf16> to vector<8x352xbf16>
    %c0_66 = arith.constant 0 : index
    %c0_67 = arith.constant 0 : index
    %c93 = arith.constant 93 : index
    %66 = vector.load %arg1[%c0_66, %c0_67, %c93] : memref<1x8x490xbf16, #tpu.memory_space<vmem>>, vector<1x8x352xbf16>
    %67 = vector.shape_cast %66 : vector<1x8x352xbf16> to vector<8x352xbf16>
    %c0_68 = arith.constant 0 : index
    %c0_69 = arith.constant 0 : index
    %c94 = arith.constant 94 : index
    %68 = vector.load %arg1[%c0_68, %c0_69, %c94] : memref<1x8x490xbf16, #tpu.memory_space<vmem>>, vector<1x8x352xbf16>
    %69 = vector.shape_cast %68 : vector<1x8x352xbf16> to vector<8x352xbf16>
    %c0_70 = arith.constant 0 : index
    %c0_71 = arith.constant 0 : index
    %c110 = arith.constant 110 : index
    %70 = vector.load %arg1[%c0_70, %c0_71, %c110] : memref<1x8x490xbf16, #tpu.memory_space<vmem>>, vector<1x8x352xbf16>
    %71 = vector.shape_cast %70 : vector<1x8x352xbf16> to vector<8x352xbf16>
    %c0_72 = arith.constant 0 : index
    %c0_73 = arith.constant 0 : index
    %c111 = arith.constant 111 : index
    %72 = vector.load %arg1[%c0_72, %c0_73, %c111] : memref<1x8x490xbf16, #tpu.memory_space<vmem>>, vector<1x8x352xbf16>
    %73 = vector.shape_cast %72 : vector<1x8x352xbf16> to vector<8x352xbf16>
    %c0_74 = arith.constant 0 : index
    %c0_75 = arith.constant 0 : index
    %c112 = arith.constant 112 : index
    %74 = vector.load %arg1[%c0_74, %c0_75, %c112] : memref<1x8x490xbf16, #tpu.memory_space<vmem>>, vector<1x8x352xbf16>
    %75 = vector.shape_cast %74 : vector<1x8x352xbf16> to vector<8x352xbf16>
    %c0_76 = arith.constant 0 : index
    %c0_77 = arith.constant 0 : index
    %c113 = arith.constant 113 : index
    %76 = vector.load %arg1[%c0_76, %c0_77, %c113] : memref<1x8x490xbf16, #tpu.memory_space<vmem>>, vector<1x8x352xbf16>
    %77 = vector.shape_cast %76 : vector<1x8x352xbf16> to vector<8x352xbf16>
    %c0_78 = arith.constant 0 : index
    %c0_79 = arith.constant 0 : index
    %c114 = arith.constant 114 : index
    %78 = vector.load %arg1[%c0_78, %c0_79, %c114] : memref<1x8x490xbf16, #tpu.memory_space<vmem>>, vector<1x8x352xbf16>
    %79 = vector.shape_cast %78 : vector<1x8x352xbf16> to vector<8x352xbf16>
    %c0_80 = arith.constant 0 : index
    %c0_81 = arith.constant 0 : index
    %c115 = arith.constant 115 : index
    %80 = vector.load %arg1[%c0_80, %c0_81, %c115] : memref<1x8x490xbf16, #tpu.memory_space<vmem>>, vector<1x8x352xbf16>
    %81 = vector.shape_cast %80 : vector<1x8x352xbf16> to vector<8x352xbf16>
    %c0_82 = arith.constant 0 : index
    %c0_83 = arith.constant 0 : index
    %c116 = arith.constant 116 : index
    %82 = vector.load %arg1[%c0_82, %c0_83, %c116] : memref<1x8x490xbf16, #tpu.memory_space<vmem>>, vector<1x8x352xbf16>
    %83 = vector.shape_cast %82 : vector<1x8x352xbf16> to vector<8x352xbf16>
    %c0_84 = arith.constant 0 : index
    %c0_85 = arith.constant 0 : index
    %c132 = arith.constant 132 : index
    %84 = vector.load %arg1[%c0_84, %c0_85, %c132] : memref<1x8x490xbf16, #tpu.memory_space<vmem>>, vector<1x8x352xbf16>
    %85 = vector.shape_cast %84 : vector<1x8x352xbf16> to vector<8x352xbf16>
    %c0_86 = arith.constant 0 : index
    %c0_87 = arith.constant 0 : index
    %c133 = arith.constant 133 : index
    %86 = vector.load %arg1[%c0_86, %c0_87, %c133] : memref<1x8x490xbf16, #tpu.memory_space<vmem>>, vector<1x8x352xbf16>
    %87 = vector.shape_cast %86 : vector<1x8x352xbf16> to vector<8x352xbf16>
    %c0_88 = arith.constant 0 : index
    %c0_89 = arith.constant 0 : index
    %c134 = arith.constant 134 : index
    %88 = vector.load %arg1[%c0_88, %c0_89, %c134] : memref<1x8x490xbf16, #tpu.memory_space<vmem>>, vector<1x8x352xbf16>
    %89 = vector.shape_cast %88 : vector<1x8x352xbf16> to vector<8x352xbf16>
    %c0_90 = arith.constant 0 : index
    %c0_91 = arith.constant 0 : index
    %c135 = arith.constant 135 : index
    %90 = vector.load %arg1[%c0_90, %c0_91, %c135] : memref<1x8x490xbf16, #tpu.memory_space<vmem>>, vector<1x8x352xbf16>
    %91 = vector.shape_cast %90 : vector<1x8x352xbf16> to vector<8x352xbf16>
    %c0_92 = arith.constant 0 : index
    %c0_93 = arith.constant 0 : index
    %c136 = arith.constant 136 : index
    %92 = vector.load %arg1[%c0_92, %c0_93, %c136] : memref<1x8x490xbf16, #tpu.memory_space<vmem>>, vector<1x8x352xbf16>
    %93 = vector.shape_cast %92 : vector<1x8x352xbf16> to vector<8x352xbf16>
    %c0_94 = arith.constant 0 : index
    %c0_95 = arith.constant 0 : index
    %c137 = arith.constant 137 : index
    %94 = vector.load %arg1[%c0_94, %c0_95, %c137] : memref<1x8x490xbf16, #tpu.memory_space<vmem>>, vector<1x8x352xbf16>
    %95 = vector.shape_cast %94 : vector<1x8x352xbf16> to vector<8x352xbf16>
    %c0_96 = arith.constant 0 : index
    %c0_97 = arith.constant 0 : index
    %c138 = arith.constant 138 : index
    %96 = vector.load %arg1[%c0_96, %c0_97, %c138] : memref<1x8x490xbf16, #tpu.memory_space<vmem>>, vector<1x8x352xbf16>
    %97 = vector.shape_cast %96 : vector<1x8x352xbf16> to vector<8x352xbf16>
    %98 = tpu.concatenate %1, %3, %5, %7, %9, %11, %13, %15, %17, %19, %21, %23, %25, %27, %29, %31 in 0 : vector<8x352xbf16>, vector<8x352xbf16>, vector<8x352xbf16>, vector<8x352xbf16>, vector<8x352xbf16>, vector<8x352xbf16>, vector<8x352xbf16>, vector<8x352xbf16>, vector<8x352xbf16>, vector<8x352xbf16>, vector<8x352xbf16>, vector<8x352xbf16>, vector<8x352xbf16>, vector<8x352xbf16>, vector<8x352xbf16>, vector<8x352xbf16> -> vector<128x352xbf16>
    %99 = tpu.concatenate %33, %35, %37, %39, %41, %43, %45, %47, %49, %51, %53, %55, %57, %59, %61, %63 in 0 : vector<8x352xbf16>, vector<8x352xbf16>, vector<8x352xbf16>, vector<8x352xbf16>, vector<8x352xbf16>, vector<8x352xbf16>, vector<8x352xbf16>, vector<8x352xbf16>, vector<8x352xbf16>, vector<8x352xbf16>, vector<8x352xbf16>, vector<8x352xbf16>, vector<8x352xbf16>, vector<8x352xbf16>, vector<8x352xbf16>, vector<8x352xbf16> -> vector<128x352xbf16>
    %100 = tpu.concatenate %65, %67, %69, %71, %73, %75, %77, %79, %81, %83, %85, %87, %89, %91, %93, %95 in 0 : vector<8x352xbf16>, vector<8x352xbf16>, vector<8x352xbf16>, vector<8x352xbf16>, vector<8x352xbf16>, vector<8x352xbf16>, vector<8x352xbf16>, vector<8x352xbf16>, vector<8x352xbf16>, vector<8x352xbf16>, vector<8x352xbf16>, vector<8x352xbf16>, vector<8x352xbf16>, vector<8x352xbf16>, vector<8x352xbf16>, vector<8x352xbf16> -> vector<128x352xbf16>
    %101 = tpu.concatenate %98, %99, %100, %97 in 0 : vector<128x352xbf16>, vector<128x352xbf16>, vector<128x352xbf16>, vector<8x352xbf16> -> vector<392x352xbf16>
    %c0_98 = arith.constant 0 : index
    %c0_99 = arith.constant 0 : index
    %102 = vector.load %arg2[%c0_98, %c0_99] : memref<3x392xbf16, #tpu.memory_space<vmem>>, vector<3x392xbf16>
    %cst = arith.constant dense<0.000000e+00> : vector<3x352xf32>
    %103 = tpu.matmul %102, %101, %cst {dimension_numbers = #tpu.dot_dimension_numbers<[1], [0], [0], [1], [0, 0, 1, 1], [], []>} : vector<3x392xbf16>, vector<392x352xbf16>, vector<3x352xf32> -> vector<3x352xf32>
    %c0_100 = arith.constant 0 : index
    %c0_101 = arith.constant 0 : index
    %104 = vector.load %arg3[%c0_100, %c0_101] : memref<3x1xf32, #tpu.memory_space<vmem>>, vector<3x1xf32>
    %105 = vector.broadcast %104 : vector<3x1xf32> to vector<3x352xf32>
    %106 = arith.addf %103, %105 : vector<3x352xf32>
    %c0_102 = arith.constant 0 : index
    %c0_103 = arith.constant 0 : index
    %c0_104 = arith.constant 0 : index
    %107 = vector.load %arg4[%c0_102, %c0_103, %c0_104] : memref<1x3x352xf32, #tpu.memory_space<vmem>>, vector<1x3x352xf32>
    %108 = vector.shape_cast %107 : vector<1x3x352xf32> to vector<3x352xf32>
    %109 = vector.shape_cast %106 : vector<3x352xf32> to vector<1x3x352xf32>
    tpu.vector_store %arg4[%c0_102, %c0_103, %c0_104], %109 {strides = array<i32>} : memref<1x3x352xf32, #tpu.memory_space<vmem>>, vector<1x3x352xf32>,
    return
  }
  func.func @transform_0(%arg0: i32) -> (i32, i32, i32) {
    %c0_i32 = arith.constant 0 : i32
    %c0_i32_0 = arith.constant 0 : i32
    %c0_i32_1 = arith.constant 0 : i32
    return %arg0, %c0_i32, %c0_i32_0 : i32, i32, i32
  }
  func.func @transform_1(%arg0: i32) -> (i32, i32) {
    %c0_i32 = arith.constant 0 : i32
    %c0_i32_0 = arith.constant 0 : i32
    %c0_i32_1 = arith.constant 0 : i32
    return %c0_i32, %c0_i32_0 : i32, i32
  }
  func.func @transform_2(%arg0: i32) -> (i32, i32) {
    %c0_i32 = arith.constant 0 : i32
    %c0_i32_0 = arith.constant 0 : i32
    %c0_i32_1 = arith.constant 0 : i32
    return %c0_i32, %c0_i32_0 : i32, i32
  }
  func.func @transform_3(%arg0: i32) -> (i32, i32, i32) {
    %c0_i32 = arith.constant 0 : i32
    %c0_i32_0 = arith.constant 0 : i32
    %c0_i32_1 = arith.constant 0 : i32
    return %arg0, %c0_i32, %c0_i32_0 : i32, i32, i32
  }
}

</mosaic_0001>

<llo_original>
// kernel: preset_generator_resnet_forward.9
$region0: #{preset_generator_resnet_forward.9}
  #allocation0 [shape = 'u32[]', space=smem, size = 0x4, offset = 0x4, fixed_abs, tag = 'smem constant byte address 0x4 - core index']
  #allocation1 [shape = 'u32[144,128]{1,0:T(1,128)}', space=vmem, size = 0x12000, scoped, tag = 'internal scratch']
  %s0 = inlined_call_operand.vmem [shape: bf16[2,32,82], index: 0, kind: input, shape index: {}]
  %s1 = inlined_call_operand.vmem [shape: bf16[16,72], index: 1, kind: input, shape index: {}]
  %s2 = inlined_call_operand.vmem [shape: bf16[2,16,72], index: 2, kind: output, shape index: {}]
  %s3 = sld [smem:[#allocation0]]
  $region41: #{preset_generator_resnet_forward.9} parent=0
    _
  %s5 = ssub.s32 1, %s3
  %s6 = scalar_select 0, %s5, %s3
  loop: start=0, step=1, limit=4
  $region2: #{preset_generator_resnet_forward.9} parent=0 // loop_pre_header
    _
  $region3: #{preset_generator_resnet_forward.9} parent=0 // loop_header
    %s8 = sphi 0, %s12
    %p9 = scmp.ge.s32.totalorder %s8, 4
    %s18 = sphi 0, %s20
    %s21 = sphi 0, %s18
    %s22 = sphi 0, %s21
    %s38 = sphi 0, %s22
    %s42 = sphi 0, %s42
    %s44 = sphi 0, %s42
    %s45 = sphi 0, %s44
    %s59 = sphi 0, %s45
    %s65 = sphi 0, %s67
    %s68 = sphi 0, %s65
    %s69 = sphi 0, %s68
    %s85 = sphi 0, %s69
  $region4: #{preset_generator_resnet_forward.9} parent=0 // loop_header_branch
    %11 = sbr.rel (%p9) target = $region8
  $region5: #{preset_generator_resnet_forward.9} parent=0 // loop_body
    %s13 = ssub.s32 %s8, 1
    %s14 = ssub.s32 %s8, 2
    %s15 = sadd.s32 %s8, 1
    %s16 = ssub.s32 %s8, %s15
    %p17 = scmp.eq.s32.totalorder %s16, 0
    %s19 = sadd.s32 %s18, 1
    %s20 = scalar_select %p17, %s18, %s19
    %p23 = pneg %p17
    %p24 = scmp.eq.s32.totalorder %s8, 1
    %p25 = por %p23, %p24
    %p26 = scmp.ne.s32.totalorder %s18, %s21
    %p27 = scmp.eq.s32.totalorder %s8, 0
    %p28 = por %p26, %p27
    %p29 = scmp.ne.s32.totalorder %s18, %s21
    %p30 = scmp.eq.s32.totalorder %s13, 1
    %p31 = por %p29, %p30
    %p32 = scmp.ne.s32.totalorder %s21, %s22
    %p33 = scmp.eq.s32.totalorder %s13, 0
    %p34 = por %p32, %p33
    %p35 = scmp.ne.s32.totalorder %s21, %s22
    %p36 = scmp.eq.s32.totalorder %s14, 1
    %p37 = por %p35, %p36
    %p39 = scmp.ne.s32.totalorder %s22, %s38
    %p40 = scmp.eq.s32.totalorder %s14, 0
    %p41 = por %p39, %p40
    %s43 = sadd.s32 %s42, 1
    %p46 = scmp.eq.s32.totalorder %s8, 1
    %p47 = scmp.ne.s32.totalorder %s42, %s44
    %p48 = scmp.eq.s32.totalorder %s8, 0
    %p49 = por %p47, %p48
    %p50 = scmp.ne.s32.totalorder %s42, %s44
    %p51 = scmp.eq.s32.totalorder %s13, 1
    %p52 = por %p50, %p51
    %p53 = scmp.ne.s32.totalorder %s44, %s45
    %p54 = scmp.eq.s32.totalorder %s13, 0
    %p55 = por %p53, %p54
    %p56 = scmp.ne.s32.totalorder %s44, %s45
    %p57 = scmp.eq.s32.totalorder %s14, 1
    %p58 = por %p56, %p57
    %p60 = scmp.ne.s32.totalorder %s45, %s59
    %p61 = scmp.eq.s32.totalorder %s14, 0
    %p62 = por %p60, %p61
    %s63 = ssub.s32 %s8, %s15
    %p64 = scmp.eq.s32.totalorder %s63, 0
    %s66 = sadd.s32 %s65, 1
    %s67 = scalar_select %p64, %s65, %s66
    %p70 = pneg %p64
    %p71 = scmp.eq.s32.totalorder %s8, 1
    %p72 = por %p70, %p71
    %p73 = scmp.ne.s32.totalorder %s65, %s68
    %p74 = scmp.eq.s32.totalorder %s8, 0
    %p75 = por %p73, %p74
    %p76 = scmp.ne.s32.totalorder %s65, %s68
    %p77 = scmp.eq.s32.totalorder %s13, 1
    %p78 = por %p76, %p77
    %p79 = scmp.ne.s32.totalorder %s68, %s69
    %p80 = scmp.eq.s32.totalorder %s13, 0
    %p81 = por %p79, %p80
    %p82 = scmp.ne.s32.totalorder %s68, %s69
    %p83 = scmp.eq.s32.totalorder %s14, 1
    %p84 = por %p82, %p83
    %p86 = scmp.ne.s32.totalorder %s69, %s85
    %p87 = scmp.eq.s32.totalorder %s14, 0
    %p88 = por %p86, %p87
    %p89 = scmp.le.s32.totalorder 1, %s8
    %p90 = scmp.lt.s32.totalorder %s8, 3
    %p91 = pnand %p89, %p90
    %p92 = pneg %p91
    // Predicated region
    $region9: #{preset_generator_resnet_forward.9} parent=5 // pred_check
      _
    $region10: #{preset_generator_resnet_forward.9} parent=5 // pred_check_branch
      %94 = sbr.rel (%p91) target = $region12
    $region11: #{preset_generator_resnet_forward.9} parent=5 // pred_region
      %s95 = ssub.s32 %s8, 1
      // Predicated region
      $region13: #{preset_generator_resnet_forward.9} parent=11 // pred_check
        %p96 = pneg %p55
      $region14: #{preset_generator_resnet_forward.9} parent=11 // pred_check_branch
        %98 = sbr.rel (%p96) target = $region16
      $region15: #{preset_generator_resnet_forward.9} parent=11 // pred_region
        _
      $region16: #{preset_generator_resnet_forward.9} parent=11 // pred_fallthru
        _
    $region12: #{preset_generator_resnet_forward.9} parent=5 // pred_fallthru
      _
    %p99 = scmp.lt.s32.totalorder %s8, 2
    // Predicated region
    $region17: #{preset_generator_resnet_forward.9} parent=5 // pred_check
      %p100 = pneg %p99
    $region18: #{preset_generator_resnet_forward.9} parent=5 // pred_check_branch
      %102 = sbr.rel (%p100) target = $region20
    $region19: #{preset_generator_resnet_forward.9} parent=5 // pred_region
      // Predicated region
      $region21: #{preset_generator_resnet_forward.9} parent=19 // pred_check
        %p103 = pneg %p28
      $region22: #{preset_generator_resnet_forward.9} parent=19 // pred_check_branch
        %105 = sbr.rel (%p103) target = $region24
      $region23: #{preset_generator_resnet_forward.9} parent=19 // pred_region
        %p106 = scmp.lt.s32.totalorder %s8, 1
        %s107 = scalar_select %p106, %s8, 1
        %s108 = smul.addr %s107, 4
        %s109 = smul.addr %s108, 4
        %s110 = scalar_lea.vmem %s0, %s109
      $region24: #{preset_generator_resnet_forward.9} parent=19 // pred_fallthru
        _
    $region20: #{preset_generator_resnet_forward.9} parent=5 // pred_fallthru
      _
    %p111 = scmp.le.s32.totalorder 1, %s8
    %p112 = scmp.lt.s32.totalorder %s8, 3
    %p113 = pnand %p111, %p112
    %p114 = pneg %p113
    // Predicated region
    $region25: #{preset_generator_resnet_forward.9} parent=5 // pred_check
      _
    $region26: #{preset_generator_resnet_forward.9} parent=5 // pred_check_branch
      %116 = sbr.rel (%p113) target = $region28
    $region27: #{preset_generator_resnet_forward.9} parent=5 // pred_region
      %s117 = ssub.s32 %s8, 1
      %p118 = scmp.lt.s32.totalorder %s13, 1
      %s119 = scalar_select %p118, %s13, 1
      %s120 = smul.addr %s119, 4
      %s121 = smul.addr %s120, 4
      %s122 = scalar_lea.vmem %s0, %s121
      %p123 = pneg %p34
      %p124 = pneg %p31
      %p125 = pneg %p55
      %p126 = pneg %p52
      %p127 = pneg %p81
      %p128 = pneg %p78
      %p129 = scmp.lt.s32.totalorder %s13, 1
      %s130 = scalar_select %p129, %s13, 1
      %s131 = smul.addr %s130, 2
      %s132 = smul.addr %s131, 4
      %s133 = scalar_lea.vmem %s2, %s132
      %p134 = scmp.lt.s32.totalorder %s13, 1
      %s135 = scalar_select %p134, %s13, 1
      %s136 = smul.addr %s135, 4
      %s137 = smul.addr %s136, 4
      %s138 = scalar_lea.vmem %s0, %s137
      %p139 = scmp.lt.s32.totalorder %s13, 1
      %s140 = scalar_select %p139, %s13, 1
      %s141 = smul.addr %s140, 2
      %s142 = smul.addr %s141, 4
      %s143 = scalar_lea.vmem %s2, %s142
      %v145 = vld [vmem:[%s138] sm:$0xf]
      %v146 = vld [vmem:[%s138 + $0x4] sm:$0xf]
      %v147 = vld [vmem:[%s138 + $0x8] sm:$0xf]
      %v148 = vld [vmem:[%s138 + $0xc] sm:$0xf]
      %v150 = vunpack.c.l.b16 %v145
      %v151 = vpack.c.b16 %v150, %v150
      %152 = vrot.lane.b32.xlu0 %v151, 127
      %v153 = vpop.permute.xlu0 %152
      %154 = vrot.lane.b32.xlu0 %v151, 119
      %v155 = vpop.permute.xlu0 %154
      %156 = vrot.lane.b32.xlu0 %v151, 118
      %v157 = vpop.permute.xlu0 %156
      %v159 = vunpack.c.l.b16 %v146
      %v160 = vpack.c.b16 %v159, %v159
      %161 = vrot.lane.b32.xlu0 %v160, 119
      %v162 = vpop.permute.xlu0 %161
      %v164 = vunpack.c.l.b16 %v147
      %v165 = vpack.c.b16 %v164, %v164
      %166 = vrot.lane.b32.xlu0 %v165, 127
      %v167 = vpop.permute.xlu0 %166
      %vm168 = vcmask 1043456
      %v171 = vsel %vm168, %v145, %v153
      %v175 = vsel %vm168, %v155, %v157
      %v179 = vsel %vm168, %v146, %v162
      %v183 = vsel %vm168, %v147, %v167
      %v185 = vld [vmem:[%s1] sm:$0xf]
      %v186 = vld [vmem:[%s1 + $0x4] sm:$0xf]
      %v189 = vunpack.c.l.b16 %v185
      %v190 = vunpack.c.l.b16 %v186
      %v191 = vpack.c.b16 %v190, %v189
      %vm192 = vcmask 588800
      %v194 = vsel %vm192, %v191, 0
      %v197 = vsel %vm168, %v148, 0
      %199 = vmatprep.subr.bf16.mxu0 0
      %200 = vmatpush1.bf16.msra.mxu0 %v171
      %201 = vmatprep.subr.bf16.mxu0 0
      %202 = vmatpush1.bf16.msra.mxu0 %v175
      %203 = vmatprep.subr.bf16.mxu0 0
      %204 = vmatpush1.bf16.msra.mxu0 %v179
      %205 = vmatprep.subr.bf16.mxu0 0
      %206 = vmatpush1.bf16.msra.mxu0 %v183
      %207 = vmatprep.subr.bf16.mxu0 0
      %208 = vmatpush1.bf16.msra.mxu0 %v197
      %209 = vmatprep.subr.bf16.mxu0 0
      %210 = vmatpush1.bf16.msra.mxu0 0
      %211 = vmatprep.subr.bf16.mxu0 0
      %212 = vmatpush1.bf16.msra.mxu0 0
      %213 = vmatprep.subr.bf16.mxu0 0
      %214 = vmatpush1.bf16.msra.mxu0 0
      %215 = vmatprep.subr.bf16.mxu0 0
      %216 = vmatpush1.bf16.msra.mxu0 0
      %217 = vmatprep.subr.bf16.mxu0 0
      %218 = vmatpush1.bf16.msra.mxu0 0
      %219 = vmatprep.subr.bf16.mxu0 0
      %220 = vmatpush1.bf16.msra.mxu0 0
      %221 = vmatprep.subr.bf16.mxu0 0
      %222 = vmatpush1.bf16.msra.mxu0 0
      %223 = vmatprep.subr.bf16.mxu0 0
      %224 = vmatpush1.bf16.msra.mxu0 0
      %225 = vmatprep.subr.bf16.mxu0 0
      %226 = vmatpush1.bf16.msra.mxu0 0
      %227 = vmatprep.subr.bf16.mxu0 0
      %228 = vmatpush1.bf16.msra.mxu0 0
      %229 = vmatprep.subr.bf16.mxu0 0
      %230 = vmatpush1.bf16.msra.mxu0 0
      %231 = vmatprep.mubr.bf16.mxu0 0
      %232 = vmatmul.mubr.bf16.gmra.mrb[0].mxu0 %v194
      %v233 = vpop.f32.mrb[0].mxu0
      %v234 = vadd.f32 0.0, %v233
      %v235 = vpop.f32.mrb[0].mxu0
      %v236 = vpop.f32.mrb[0].mxu0
      %v237 = vadd.f32 0.0, %v236
      %v238 = vpop.f32.mrb[0].mxu0
      %239 = vdwg.mxu0
      %v240 = vlaneseq
      %v241 = vand.u32 %v240, 127
      %vm242 = vcmp.lt.s32.totalorder %v241, 0
      %v243 = vsub.s32 0, %v241
      %v244 = vsel %vm242, %v243, %v241
      %v245 = vmul.u32.u64.compose %v244, 3817748708
      %v246 = vextract.low.u32 %v245
      %v247 = vextract.high.u32 %v245
      %v248 = vshrl.u32 %v247, 3
      %v249 = vmul.u32 %v248, 9
      %v250 = vsub.s32 %v244, %v249
      %v251 = vsub.s32 0, %v250
      %v252 = vsel %vm242, %v251, %v250
      %vm253 = vcmp.ne.s32.totalorder %v252, 0
      %vm254 = vcmp.lt.s32.totalorder %v252, 0
      %vm255 = vmand %vm254, %vm253
      %v256 = vadd.s32 %v252, 9
      %v257 = vsel %vm255, %v256, %v252
      %vm258 = vcmp.lt.s32.totalorder %v257, 8
      %v259 = vsel %vm258, 1, 0
      %v260 = vcvt.s32.f32 %v259
      %v261 = vmul.f32 %v234, %v260
      %v262 = vmul.f32 %v237, %v260
      %v263 = vsel %vm192, %v261, 0.0
      %264 = vadd.xlane.f32.xlu0 %v263
      %v265 = vpop.xlane.xlu0 %264
      %v266 = vsel %vm192, %v262, 0.0
      %267 = vadd.xlane.f32.xlu0 %v266
      %v268 = vpop.xlane.xlu0 %267
      %v269 = vmul.f32 %v265, 0.015625
      %v270 = vmul.f32 %v268, 0.015625
      %v271 = vsub.f32 %v234, %v269
      %v272 = vsub.f32 %v237, %v270
      %v273 = vmul.f32 %v271, %v260
      %v274 = vmul.f32 %v272, %v260
      %v275 = vmul.f32 %v273, %v273
      %v276 = vmul.f32 %v274, %v274
      %v277 = vsel %vm192, %v275, 0.0
      %278 = vadd.xlane.f32.xlu0 %v277
      %v279 = vpop.xlane.xlu0 %278
      %v280 = vsel %vm192, %v276, 0.0
      %281 = vadd.xlane.f32.xlu0 %v280
      %v282 = vpop.xlane.xlu0 %281
      %v283 = vmul.f32 %v279, 0.015625
      %v284 = vmul.f32 %v282, 0.015625
      %v285 = vadd.f32 %v283, 1e-05
      %v286 = vadd.f32 %v284, 1e-05
      %v287 = vrsqrt.pop %v285
      %v288 = vrsqrt.pop %v286
      %v289 = vmul.f32 %v271, %v287
      %v290 = vmul.f32 %v272, %v288
      %v291 = vmax.f32 %v289, 0.0
      %v292 = vmax.f32 %v290, 0.0
      %v293 = vpack.c.bf16 %v292, %v291
      %v295 = vunpack.c.l.b16 %v293
      %v296 = vunpack.c.h.b16 %v293
      %v297 = vpack.c.b16 %v295, %v295
      %v298 = vpack.c.b16 %v296, %v296
      %vm301 = vcmask 584704
      %302 = vst.msk [vmem:[%s143] sm:$0xf] %vm301, %v297
      %303 = vst.msk [vmem:[%s143 + $0x4] sm:$0xf] %vm301, %v298
      %p304 = scmp.lt.s32.totalorder %s13, 1
      %s305 = scalar_select %p304, %s13, 1
      %s306 = smul.addr %s305, 2
      %s307 = smul.addr %s306, 4
      %s308 = scalar_lea.vmem %s2, %s307
      // Predicated region
      $region29: #{preset_generator_resnet_forward.9} parent=27 // pred_check
        %p309 = pneg %p78
      $region30: #{preset_generator_resnet_forward.9} parent=27 // pred_check_branch
        %311 = sbr.rel (%p309) target = $region32
      $region31: #{preset_generator_resnet_forward.9} parent=27 // pred_region
        _
      $region32: #{preset_generator_resnet_forward.9} parent=27 // pred_fallthru
        _
    $region28: #{preset_generator_resnet_forward.9} parent=5 // pred_fallthru
      _
    %p312 = scmp.le.s32.totalorder 2, %s8
    // Predicated region
    $region33: #{preset_generator_resnet_forward.9} parent=5 // pred_check
      %p313 = pneg %p312
    $region34: #{preset_generator_resnet_forward.9} parent=5 // pred_check_branch
      %315 = sbr.rel (%p313) target = $region36
    $region35: #{preset_generator_resnet_forward.9} parent=5 // pred_region
      %s316 = ssub.s32 %s8, 2
      // Predicated region
      $region37: #{preset_generator_resnet_forward.9} parent=35 // pred_check
        %p317 = pneg %p84
      $region38: #{preset_generator_resnet_forward.9} parent=35 // pred_check_branch
        %319 = sbr.rel (%p317) target = $region40
      $region39: #{preset_generator_resnet_forward.9} parent=35 // pred_region
        %p320 = scmp.lt.s32.totalorder %s14, 1
        %s321 = scalar_select %p320, %s14, 1
        %s322 = smul.addr %s321, 2
        %s323 = smul.addr %s322, 4
        %s324 = scalar_lea.vmem %s2, %s323
      $region40: #{preset_generator_resnet_forward.9} parent=35 // pred_fallthru
        _
    $region36: #{preset_generator_resnet_forward.9} parent=5 // pred_fallthru
      _
  $region6: #{preset_generator_resnet_forward.9} parent=0 // loop_footer
    %s12 = sadd.s32 1, %s8
  $region7: #{preset_generator_resnet_forward.9} parent=0 // loop_footer_branch
    %7 = sbr.rel target = $region3
  $region8: #{preset_generator_resnet_forward.9} parent=0 // loop_exit
    _

// kernel: preset_generator_resnet_forward.8
$region0: #{preset_generator_resnet_forward.8}
  #allocation0 [shape = 'u32[]', space=smem, size = 0x4, offset = 0x4, fixed_abs, tag = 'smem constant byte address 0x4 - core index']
  #allocation1 [shape = 'u32[144,128]{1,0:T(1,128)}', space=vmem, size = 0x12000, scoped, tag = 'internal scratch']
  %s0 = inlined_call_operand.vmem [shape: bf16[2,4,490], index: 0, kind: input, shape index: {}]
  %s1 = inlined_call_operand.vmem [shape: bf16[8,196], index: 1, kind: input, shape index: {}]
  %s2 = inlined_call_operand.vmem [shape: bf16[2,8,352], index: 2, kind: output, shape index: {}]
  %s3 = sld [smem:[#allocation0]]
  $region41: #{preset_generator_resnet_forward.8} parent=0
    _
  %s5 = ssub.s32 1, %s3
  %s6 = scalar_select 0, %s5, %s3
  loop: start=0, step=1, limit=4
  $region2: #{preset_generator_resnet_forward.8} parent=0 // loop_pre_header
    _
  $region3: #{preset_generator_resnet_forward.8} parent=0 // loop_header
    %s8 = sphi 0, %s12
    %p9 = scmp.ge.s32.totalorder %s8, 4
    %s18 = sphi 0, %s20
    %s21 = sphi 0, %s18
    %s22 = sphi 0, %s21
    %s38 = sphi 0, %s22
    %s42 = sphi 0, %s42
    %s44 = sphi 0, %s42
    %s45 = sphi 0, %s44
    %s59 = sphi 0, %s45
    %s65 = sphi 0, %s67
    %s68 = sphi 0, %s65
    %s69 = sphi 0, %s68
    %s85 = sphi 0, %s69
  $region4: #{preset_generator_resnet_forward.8} parent=0 // loop_header_branch
    %11 = sbr.rel (%p9) target = $region8
  $region5: #{preset_generator_resnet_forward.8} parent=0 // loop_body
    %s13 = ssub.s32 %s8, 1
    %s14 = ssub.s32 %s8, 2
    %s15 = sadd.s32 %s8, 1
    %s16 = ssub.s32 %s8, %s15
    %p17 = scmp.eq.s32.totalorder %s16, 0
    %s19 = sadd.s32 %s18, 1
    %s20 = scalar_select %p17, %s18, %s19
    %p23 = pneg %p17
    %p24 = scmp.eq.s32.totalorder %s8, 1
    %p25 = por %p23, %p24
    %p26 = scmp.ne.s32.totalorder %s18, %s21
    %p27 = scmp.eq.s32.totalorder %s8, 0
    %p28 = por %p26, %p27
    %p29 = scmp.ne.s32.totalorder %s18, %s21
    %p30 = scmp.eq.s32.totalorder %s13, 1
    %p31 = por %p29, %p30
    %p32 = scmp.ne.s32.totalorder %s21, %s22
    %p33 = scmp.eq.s32.totalorder %s13, 0
    %p34 = por %p32, %p33
    %p35 = scmp.ne.s32.totalorder %s21, %s22
    %p36 = scmp.eq.s32.totalorder %s14, 1
    %p37 = por %p35, %p36
    %p39 = scmp.ne.s32.totalorder %s22, %s38
    %p40 = scmp.eq.s32.totalorder %s14, 0
    %p41 = por %p39, %p40
    %s43 = sadd.s32 %s42, 1
    %p46 = scmp.eq.s32.totalorder %s8, 1
    %p47 = scmp.ne.s32.totalorder %s42, %s44
    %p48 = scmp.eq.s32.totalorder %s8, 0
    %p49 = por %p47, %p48
    %p50 = scmp.ne.s32.totalorder %s42, %s44
    %p51 = scmp.eq.s32.totalorder %s13, 1
    %p52 = por %p50, %p51
    %p53 = scmp.ne.s32.totalorder %s44, %s45
    %p54 = scmp.eq.s32.totalorder %s13, 0
    %p55 = por %p53, %p54
    %p56 = scmp.ne.s32.totalorder %s44, %s45
    %p57 = scmp.eq.s32.totalorder %s14, 1
    %p58 = por %p56, %p57
    %p60 = scmp.ne.s32.totalorder %s45, %s59
    %p61 = scmp.eq.s32.totalorder %s14, 0
    %p62 = por %p60, %p61
    %s63 = ssub.s32 %s8, %s15
    %p64 = scmp.eq.s32.totalorder %s63, 0
    %s66 = sadd.s32 %s65, 1
    %s67 = scalar_select %p64, %s65, %s66
    %p70 = pneg %p64
    %p71 = scmp.eq.s32.totalorder %s8, 1
    %p72 = por %p70, %p71
    %p73 = scmp.ne.s32.totalorder %s65, %s68
    %p74 = scmp.eq.s32.totalorder %s8, 0
    %p75 = por %p73, %p74
    %p76 = scmp.ne.s32.totalorder %s65, %s68
    %p77 = scmp.eq.s32.totalorder %s13, 1
    %p78 = por %p76, %p77
    %p79 = scmp.ne.s32.totalorder %s68, %s69
    %p80 = scmp.eq.s32.totalorder %s13, 0
    %p81 = por %p79, %p80
    %p82 = scmp.ne.s32.totalorder %s68, %s69
    %p83 = scmp.eq.s32.totalorder %s14, 1
    %p84 = por %p82, %p83
    %p86 = scmp.ne.s32.totalorder %s69, %s85
    %p87 = scmp.eq.s32.totalorder %s14, 0
    %p88 = por %p86, %p87
    %p89 = scmp.le.s32.totalorder 1, %s8
    %p90 = scmp.lt.s32.totalorder %s8, 3
    %p91 = pnand %p89, %p90
    %p92 = pneg %p91
    // Predicated region
    $region9: #{preset_generator_resnet_forward.8} parent=5 // pred_check
      _
    $region10: #{preset_generator_resnet_forward.8} parent=5 // pred_check_branch
      %94 = sbr.rel (%p91) target = $region12
    $region11: #{preset_generator_resnet_forward.8} parent=5 // pred_region
      %s95 = ssub.s32 %s8, 1
      // Predicated region
      $region13: #{preset_generator_resnet_forward.8} parent=11 // pred_check
        %p96 = pneg %p55
      $region14: #{preset_generator_resnet_forward.8} parent=11 // pred_check_branch
        %98 = sbr.rel (%p96) target = $region16
      $region15: #{preset_generator_resnet_forward.8} parent=11 // pred_region
        _
      $region16: #{preset_generator_resnet_forward.8} parent=11 // pred_fallthru
        _
    $region12: #{preset_generator_resnet_forward.8} parent=5 // pred_fallthru
      _
    %p99 = scmp.lt.s32.totalorder %s8, 2
    // Predicated region
    $region17: #{preset_generator_resnet_forward.8} parent=5 // pred_check
      %p100 = pneg %p99
    $region18: #{preset_generator_resnet_forward.8} parent=5 // pred_check_branch
      %102 = sbr.rel (%p100) target = $region20
    $region19: #{preset_generator_resnet_forward.8} parent=5 // pred_region
      // Predicated region
      $region21: #{preset_generator_resnet_forward.8} parent=19 // pred_check
        %p103 = pneg %p28
      $region22: #{preset_generator_resnet_forward.8} parent=19 // pred_check_branch
        %105 = sbr.rel (%p103) target = $region24
      $region23: #{preset_generator_resnet_forward.8} parent=19 // pred_region
        %p106 = scmp.lt.s32.totalorder %s8, 1
        %s107 = scalar_select %p106, %s8, 1
        %s108 = smul.addr %s107, 4
        %s109 = smul.addr %s108, 2
        %s110 = scalar_lea.vmem %s0, %s109
      $region24: #{preset_generator_resnet_forward.8} parent=19 // pred_fallthru
        _
    $region20: #{preset_generator_resnet_forward.8} parent=5 // pred_fallthru
      _
    %p111 = scmp.le.s32.totalorder 1, %s8
    %p112 = scmp.lt.s32.totalorder %s8, 3
    %p113 = pnand %p111, %p112
    %p114 = pneg %p113
    // Predicated region
    $region25: #{preset_generator_resnet_forward.8} parent=5 // pred_check
      _
    $region26: #{preset_generator_resnet_forward.8} parent=5 // pred_check_branch
      %116 = sbr.rel (%p113) target = $region28
    $region27: #{preset_generator_resnet_forward.8} parent=5 // pred_region
      %s117 = ssub.s32 %s8, 1
      %p118 = scmp.lt.s32.totalorder %s13, 1
      %s119 = scalar_select %p118, %s13, 1
      %s120 = smul.addr %s119, 4
      %s121 = smul.addr %s120, 2
      %s122 = scalar_lea.vmem %s0, %s121
      %p123 = pneg %p34
      %p124 = pneg %p31
      %p125 = pneg %p55
      %p126 = pneg %p52
      %p127 = pneg %p81
      %p128 = pneg %p78
      %p129 = scmp.lt.s32.totalorder %s13, 1
      %s130 = scalar_select %p129, %s13, 1
      %s131 = smul.addr %s130, 3
      %s132 = smul.addr %s131, 4
      %s133 = scalar_lea.vmem %s2, %s132
      %p134 = scmp.lt.s32.totalorder %s13, 1
      %s135 = scalar_select %p134, %s13, 1
      %s136 = smul.addr %s135, 4
      %s137 = smul.addr %s136, 2
      %s138 = scalar_lea.vmem %s0, %s137
      %p139 = scmp.lt.s32.totalorder %s13, 1
      %s140 = scalar_select %p139, %s13, 1
      %s141 = smul.addr %s140, 3
      %s142 = smul.addr %s141, 4
      %s143 = scalar_lea.vmem %s2, %s142
      %v145 = vld [vmem:[%s138] sm:$0x3f]
      %v146 = vld [vmem:[%s138] sm:$0xff]
      %v147 = vld [vmem:[%s138 + $0x2] sm:$0x3f]
      %v149 = vcombine.high %v145, %v145
      %v151 = vunpack.c.l.s4 1983009808
      %v152 = vunpack.c.0.s8 %v151
      %v153 = vlaneseq
      %v154 = vshrl.u32 %v153, 7
      %v155 = vsub.s32 %v152, %v154
      %v156 = vrot.slane %v145, %v155
      %v158 = vunpack.c.l.s4 1983009808
      %v159 = vunpack.c.0.s8 %v158
      %v160 = vlaneseq
      %v161 = vshrl.u32 %v160, 7
      %v162 = vsub.s32 %v159, %v161
      %v163 = vrot.slane %v149, %v162
      %v164 = vcombine.high %v156, %v156
      %v165 = vcombine.low %v145, %v145
      %v167 = vunpack.c.l.s4 1983009808
      %v168 = vunpack.c.0.s8 %v167
      %v169 = vlaneseq
      %v170 = vshrl.u32 %v169, 7
      %v171 = vsub.s32 %v168, %v170
      %v172 = vrot.slane %v165, %v171
      %v173 = vcombine.high %v172, %v172
      %174 = vrot.lane.b32.xlu0 %v172, 127
      %v175 = vpop.permute.xlu0 %174
      %176 = vrot.lane.b32.xlu0 %v173, 127
      %v177 = vpop.permute.xlu0 %176
      %178 = vrot.lane.b32.xlu0 %v156, 127
      %v179 = vpop.permute.xlu0 %178
      %vm180 = vcmask 1039360
      %v181 = vsel %vm180, %v175, %v177
      %v182 = vsel %vm180, %v177, %v179
      %v183 = vcombine.low %v156, %v156
      %v184 = vcombine.low %v163, %v163
      %185 = vrot.lane.b32.xlu0 %v183, 126
      %v186 = vpop.permute.xlu0 %185
      %187 = vrot.lane.b32.xlu0 %v156, 126
      %v188 = vpop.permute.xlu0 %187
      %189 = vrot.lane.b32.xlu0 %v184, 126
      %v190 = vpop.permute.xlu0 %189
      %vm191 = vcmask 1031168
      %v192 = vsel %vm191, %v186, %v188
      %v193 = vsel %vm191, %v188, %v190
      %v194 = vcombine.low %v172, %v172
      %195 = vrot.lane.b32.xlu0 %v194, 125
      %v196 = vpop.permute.xlu0 %195
      %197 = vrot.lane.b32.xlu0 %v172, 125
      %v198 = vpop.permute.xlu0 %197
      %199 = vrot.lane.b32.xlu0 %v183, 125
      %v200 = vpop.permute.xlu0 %199
      %vm201 = vcmask 1022976
      %v202 = vsel %vm201, %v196, %v198
      %v203 = vsel %vm201, %v198, %v200
      %204 = vrot.lane.b32.xlu0 %v156, 124
      %v205 = vpop.permute.xlu0 %204
      %206 = vrot.lane.b32.xlu0 %v164, 124
      %v207 = vpop.permute.xlu0 %206
      %208 = vrot.lane.b32.xlu0 %v163, 124
      %v209 = vpop.permute.xlu0 %208
      %vm210 = vcmask 1014784
      %v211 = vsel %vm210, %v205, %v207
      %v212 = vsel %vm210, %v207, %v209
      %213 = vrot.lane.b32.xlu0 %v172, 123
      %v214 = vpop.permute.xlu0 %213
      %215 = vrot.lane.b32.xlu0 %v173, 123
      %v216 = vpop.permute.xlu0 %215
      %217 = vrot.lane.b32.xlu0 %v156, 123
      %v218 = vpop.permute.xlu0 %217
      %vm219 = vcmask 1006592
      %v220 = vsel %vm219, %v214, %v216
      %v221 = vsel %vm219, %v216, %v218
      %222 = vrot.lane.b32.xlu0 %v183, 122
      %v223 = vpop.permute.xlu0 %222
      %224 = vrot.lane.b32.xlu0 %v156, 122
      %v225 = vpop.permute.xlu0 %224
      %226 = vrot.lane.b32.xlu0 %v184, 122
      %v227 = vpop.permute.xlu0 %226
      %vm228 = vcmask 998400
      %v229 = vsel %vm228, %v223, %v225
      %v230 = vsel %vm228, %v225, %v227
      %231 = vrot.lane.b32.xlu0 %v194, 106
      %v232 = vpop.permute.xlu0 %231
      %233 = vrot.lane.b32.xlu0 %v172, 106
      %v234 = vpop.permute.xlu0 %233
      %235 = vrot.lane.b32.xlu0 %v183, 106
      %v236 = vpop.permute.xlu0 %235
      %vm237 = vcmask 867328
      %v238 = vsel %vm237, %v232, %v234
      %v239 = vsel %vm237, %v234, %v236
      %240 = vrot.lane.b32.xlu0 %v156, 105
      %v241 = vpop.permute.xlu0 %240
      %242 = vrot.lane.b32.xlu0 %v164, 105
      %v243 = vpop.permute.xlu0 %242
      %244 = vrot.lane.b32.xlu0 %v163, 105
      %v245 = vpop.permute.xlu0 %244
      %vm246 = vcmask 859136
      %v247 = vsel %vm246, %v241, %v243
      %v248 = vsel %vm246, %v243, %v245
      %249 = vrot.lane.b32.xlu0 %v172, 104
      %v250 = vpop.permute.xlu0 %249
      %251 = vrot.lane.b32.xlu0 %v173, 104
      %v252 = vpop.permute.xlu0 %251
      %253 = vrot.lane.b32.xlu0 %v156, 104
      %v254 = vpop.permute.xlu0 %253
      %vm255 = vcmask 850944
      %v256 = vsel %vm255, %v250, %v252
      %v257 = vsel %vm255, %v252, %v254
      %258 = vrot.lane.b32.xlu0 %v183, 103
      %v259 = vpop.permute.xlu0 %258
      %260 = vrot.lane.b32.xlu0 %v156, 103
      %v261 = vpop.permute.xlu0 %260
      %262 = vrot.lane.b32.xlu0 %v184, 103
      %v263 = vpop.permute.xlu0 %262
      %vm264 = vcmask 842752
      %v265 = vsel %vm264, %v259, %v261
      %v266 = vsel %vm264, %v261, %v263
      %267 = vrot.lane.b32.xlu0 %v194, 102
      %v268 = vpop.permute.xlu0 %267
      %269 = vrot.lane.b32.xlu0 %v172, 102
      %v270 = vpop.permute.xlu0 %269
      %271 = vrot.lane.b32.xlu0 %v183, 102
      %v272 = vpop.permute.xlu0 %271
      %vm273 = vcmask 834560
      %v274 = vsel %vm273, %v268, %v270
      %v275 = vsel %vm273, %v270, %v272
      %276 = vrot.lane.b32.xlu0 %v156, 101
      %v277 = vpop.permute.xlu0 %276
      %278 = vrot.lane.b32.xlu0 %v164, 101
      %v279 = vpop.permute.xlu0 %278
      %280 = vrot.lane.b32.xlu0 %v163, 101
      %v281 = vpop.permute.xlu0 %280
      %vm282 = vcmask 826368
      %v283 = vsel %vm282, %v277, %v279
      %v284 = vsel %vm282, %v279, %v281
      %285 = vrot.lane.b32.xlu0 %v172, 100
      %v286 = vpop.permute.xlu0 %285
      %287 = vrot.lane.b32.xlu0 %v173, 100
      %v288 = vpop.permute.xlu0 %287
      %289 = vrot.lane.b32.xlu0 %v156, 100
      %v290 = vpop.permute.xlu0 %289
      %vm291 = vcmask 818176
      %v292 = vsel %vm291, %v286, %v288
      %v293 = vsel %vm291, %v288, %v290
      %v295 = vcombine.high %v146, %v146
      %v297 = vunpack.c.l.s4 1983009808
      %v298 = vunpack.c.0.s8 %v297
      %v299 = vlaneseq
      %v300 = vshrl.u32 %v299, 7
      %v301 = vsub.s32 %v298, %v300
      %v302 = vrot.slane %v146, %v301
      %v304 = vunpack.c.l.s4 1983009808
      %v305 = vunpack.c.0.s8 %v304
      %v306 = vlaneseq
      %v307 = vshrl.u32 %v306, 7
      %v308 = vsub.s32 %v305, %v307
      %v309 = vrot.slane %v295, %v308
      %v310 = vcombine.low %v302, %v302
      %v311 = vcombine.low %v309, %v309
      %312 = vrot.lane.b32.xlu0 %v310, 84
      %v313 = vpop.permute.xlu0 %312
      %314 = vrot.lane.b32.xlu0 %v302, 84
      %v315 = vpop.permute.xlu0 %314
      %316 = vrot.lane.b32.xlu0 %v311, 84
      %v317 = vpop.permute.xlu0 %316
      %318 = vrot.lane.b32.xlu0 %v309, 84
      %v319 = vpop.permute.xlu0 %318
      %vm320 = vcmask 687104
      %v321 = vsel %vm320, %v313, %v315
      %v322 = vsel %vm320, %v315, %v317
      %v323 = vsel %vm320, %v317, %v319
      %v324 = vcombine.low %v146, %v146
      %v326 = vunpack.c.l.s4 1983009808
      %v327 = vunpack.c.0.s8 %v326
      %v328 = vlaneseq
      %v329 = vshrl.u32 %v328, 7
      %v330 = vsub.s32 %v327, %v329
      %v331 = vrot.slane %v324, %v330
      %v332 = vcombine.low %v331, %v331
      %333 = vrot.lane.b32.xlu0 %v332, 83
      %v334 = vpop.permute.xlu0 %333
      %335 = vrot.lane.b32.xlu0 %v331, 83
      %v336 = vpop.permute.xlu0 %335
      %337 = vrot.lane.b32.xlu0 %v310, 83
      %v338 = vpop.permute.xlu0 %337
      %339 = vrot.lane.b32.xlu0 %v302, 83
      %v340 = vpop.permute.xlu0 %339
      %vm341 = vcmask 678912
      %v342 = vsel %vm341, %v334, %v336
      %v343 = vsel %vm341, %v336, %v338
      %v344 = vsel %vm341, %v338, %v340
      %vm345 = vcmask 1041408
      %v348 = vsel %vm345, %v156, %v181
      %v351 = vsel %vm345, %v164, %v182
      %v354 = vsel %vm345, %v163, %v179
      %vm355 = vcmask 1043456
      %v357 = vsel %vm355, %v348, %v192
      %v359 = vsel %vm355, %v351, %v193
      %v361 = vsel %vm355, %v354, %v190
      %vm362 = vcmask 1045504
      %v364 = vsel %vm362, %v357, %v202
      %v367 = vsel %vm362, %v359, %v203
      %v370 = vsel %vm362, %v361, %v200
      %v374 = vsel %vm345, %v211, %v220
      %v377 = vsel %vm345, %v212, %v221
      %v380 = vsel %vm345, %v209, %v218
      %v382 = vsel %vm355, %v374, %v229
      %v384 = vsel %vm355, %v377, %v230
      %v386 = vsel %vm355, %v380, %v227
      %v388 = vsel %vm362, %v382, %v238
      %v391 = vsel %vm362, %v384, %v239
      %v394 = vsel %vm362, %v386, %v236
      %v398 = vsel %vm345, %v247, %v256
      %v401 = vsel %vm345, %v248, %v257
      %v404 = vsel %vm345, %v245, %v254
      %v406 = vsel %vm355, %v398, %v265
      %v408 = vsel %vm355, %v401, %v266
      %v410 = vsel %vm355, %v404, %v263
      %v412 = vsel %vm362, %v406, %v274
      %v415 = vsel %vm362, %v408, %v275
      %v418 = vsel %vm362, %v410, %v272
      %v422 = vsel %vm345, %v283, %v292
      %v425 = vsel %vm345, %v284, %v293
      %v428 = vsel %vm345, %v281, %v290
      %v430 = vsel %vm355, %v422, %v321
      %v432 = vsel %vm355, %v425, %v322
      %v434 = vsel %vm355, %v428, %v323
      %v436 = vsel %vm362, %v430, %v342
      %v439 = vsel %vm362, %v432, %v343
      %v442 = vsel %vm362, %v434, %v344
      %v444 = vcombine.high %v302, %v302
      %v445 = vcombine.high %v309, %v309
      %v446 = vcombine.high %v331, %v331
      %447 = vrot.lane.b32.xlu0 %v331, 127
      %v448 = vpop.permute.xlu0 %447
      %449 = vrot.lane.b32.xlu0 %v446, 127
      %v450 = vpop.permute.xlu0 %449
      %451 = vrot.lane.b32.xlu0 %v302, 127
      %v452 = vpop.permute.xlu0 %451
      %453 = vrot.lane.b32.xlu0 %v444, 127
      %v454 = vpop.permute.xlu0 %453
      %v455 = vsel %vm180, %v448, %v450
      %v456 = vsel %vm180, %v450, %v452
      %v457 = vsel %vm180, %v452, %v454
      %458 = vrot.lane.b32.xlu0 %v310, 126
      %v459 = vpop.permute.xlu0 %458
      %460 = vrot.lane.b32.xlu0 %v302, 126
      %v461 = vpop.permute.xlu0 %460
      %462 = vrot.lane.b32.xlu0 %v311, 126
      %v463 = vpop.permute.xlu0 %462
      %464 = vrot.lane.b32.xlu0 %v309, 126
      %v465 = vpop.permute.xlu0 %464
      %v466 = vsel %vm191, %v459, %v461
      %v467 = vsel %vm191, %v461, %v463
      %v468 = vsel %vm191, %v463, %v465
      %469 = vrot.lane.b32.xlu0 %v332, 125
      %v470 = vpop.permute.xlu0 %469
      %471 = vrot.lane.b32.xlu0 %v331, 125
      %v472 = vpop.permute.xlu0 %471
      %473 = vrot.lane.b32.xlu0 %v310, 125
      %v474 = vpop.permute.xlu0 %473
      %475 = vrot.lane.b32.xlu0 %v302, 125
      %v476 = vpop.permute.xlu0 %475
      %v477 = vsel %vm201, %v470, %v472
      %v478 = vsel %vm201, %v472, %v474
      %v479 = vsel %vm201, %v474, %v476
      %480 = vrot.lane.b32.xlu0 %v302, 124
      %v481 = vpop.permute.xlu0 %480
      %482 = vrot.lane.b32.xlu0 %v444, 124
      %v483 = vpop.permute.xlu0 %482
      %484 = vrot.lane.b32.xlu0 %v309, 124
      %v485 = vpop.permute.xlu0 %484
      %486 = vrot.lane.b32.xlu0 %v445, 124
      %v487 = vpop.permute.xlu0 %486
      %v488 = vsel %vm210, %v481, %v483
      %v489 = vsel %vm210, %v483, %v485
      %v490 = vsel %vm210, %v485, %v487
      %491 = vrot.lane.b32.xlu0 %v331, 108
      %v492 = vpop.permute.xlu0 %491
      %493 = vrot.lane.b32.xlu0 %v446, 108
      %v494 = vpop.permute.xlu0 %493
      %495 = vrot.lane.b32.xlu0 %v302, 108
      %v496 = vpop.permute.xlu0 %495
      %497 = vrot.lane.b32.xlu0 %v444, 108
      %v498 = vpop.permute.xlu0 %497
      %vm499 = vcmask 883712
      %v500 = vsel %vm499, %v492, %v494
      %v501 = vsel %vm499, %v494, %v496
      %v502 = vsel %vm499, %v496, %v498
      %503 = vrot.lane.b32.xlu0 %v310, 107
      %v504 = vpop.permute.xlu0 %503
      %505 = vrot.lane.b32.xlu0 %v302, 107
      %v506 = vpop.permute.xlu0 %505
      %507 = vrot.lane.b32.xlu0 %v311, 107
      %v508 = vpop.permute.xlu0 %507
      %509 = vrot.lane.b32.xlu0 %v309, 107
      %v510 = vpop.permute.xlu0 %509
      %vm511 = vcmask 875520
      %v512 = vsel %vm511, %v504, %v506
      %v513 = vsel %vm511, %v506, %v508
      %v514 = vsel %vm511, %v508, %v510
      %515 = vrot.lane.b32.xlu0 %v332, 106
      %v516 = vpop.permute.xlu0 %515
      %517 = vrot.lane.b32.xlu0 %v331, 106
      %v518 = vpop.permute.xlu0 %517
      %519 = vrot.lane.b32.xlu0 %v310, 106
      %v520 = vpop.permute.xlu0 %519
      %521 = vrot.lane.b32.xlu0 %v302, 106
      %v522 = vpop.permute.xlu0 %521
      %v523 = vsel %vm237, %v516, %v518
      %v524 = vsel %vm237, %v518, %v520
      %v525 = vsel %vm237, %v520, %v522
      %526 = vrot.lane.b32.xlu0 %v302, 105
      %v527 = vpop.permute.xlu0 %526
      %528 = vrot.lane.b32.xlu0 %v444, 105
      %v529 = vpop.permute.xlu0 %528
      %530 = vrot.lane.b32.xlu0 %v309, 105
      %v531 = vpop.permute.xlu0 %530
      %532 = vrot.lane.b32.xlu0 %v445, 105
      %v533 = vpop.permute.xlu0 %532
      %v534 = vsel %vm246, %v527, %v529
      %v535 = vsel %vm246, %v529, %v531
      %v536 = vsel %vm246, %v531, %v533
      %537 = vrot.lane.b32.xlu0 %v331, 104
      %v538 = vpop.permute.xlu0 %537
      %539 = vrot.lane.b32.xlu0 %v446, 104
      %v540 = vpop.permute.xlu0 %539
      %541 = vrot.lane.b32.xlu0 %v302, 104
      %v542 = vpop.permute.xlu0 %541
      %543 = vrot.lane.b32.xlu0 %v444, 104
      %v544 = vpop.permute.xlu0 %543
      %v545 = vsel %vm255, %v538, %v540
      %v546 = vsel %vm255, %v540, %v542
      %v547 = vsel %vm255, %v542, %v544
      %548 = vrot.lane.b32.xlu0 %v310, 103
      %v549 = vpop.permute.xlu0 %548
      %550 = vrot.lane.b32.xlu0 %v302, 103
      %v551 = vpop.permute.xlu0 %550
      %552 = vrot.lane.b32.xlu0 %v311, 103
      %v553 = vpop.permute.xlu0 %552
      %554 = vrot.lane.b32.xlu0 %v309, 103
      %v555 = vpop.permute.xlu0 %554
      %v556 = vsel %vm264, %v549, %v551
      %v557 = vsel %vm264, %v551, %v553
      %v558 = vsel %vm264, %v553, %v555
      %559 = vrot.lane.b32.xlu0 %v332, 102
      %v560 = vpop.permute.xlu0 %559
      %561 = vrot.lane.b32.xlu0 %v331, 102
      %v562 = vpop.permute.xlu0 %561
      %563 = vrot.lane.b32.xlu0 %v310, 102
      %v564 = vpop.permute.xlu0 %563
      %565 = vrot.lane.b32.xlu0 %v302, 102
      %v566 = vpop.permute.xlu0 %565
      %v567 = vsel %vm273, %v560, %v562
      %v568 = vsel %vm273, %v562, %v564
      %v569 = vsel %vm273, %v564, %v566
      %570 = vrot.lane.b32.xlu0 %v302, 86
      %v571 = vpop.permute.xlu0 %570
      %572 = vrot.lane.b32.xlu0 %v444, 86
      %v573 = vpop.permute.xlu0 %572
      %574 = vrot.lane.b32.xlu0 %v309, 86
      %v575 = vpop.permute.xlu0 %574
      %576 = vrot.lane.b32.xlu0 %v445, 86
      %v577 = vpop.permute.xlu0 %576
      %vm578 = vcmask 703488
      %v579 = vsel %vm578, %v571, %v573
      %v580 = vsel %vm578, %v573, %v575
      %v581 = vsel %vm578, %v575, %v577
      %582 = vrot.lane.b32.xlu0 %v331, 85
      %v583 = vpop.permute.xlu0 %582
      %584 = vrot.lane.b32.xlu0 %v446, 85
      %v585 = vpop.permute.xlu0 %584
      %586 = vrot.lane.b32.xlu0 %v302, 85
      %v587 = vpop.permute.xlu0 %586
      %588 = vrot.lane.b32.xlu0 %v444, 85
      %v589 = vpop.permute.xlu0 %588
      %vm590 = vcmask 695296
      %v591 = vsel %vm590, %v583, %v585
      %v592 = vsel %vm590, %v585, %v587
      %v593 = vsel %vm590, %v587, %v589
      %v596 = vsel %vm345, %v302, %v455
      %v599 = vsel %vm345, %v444, %v456
      %v602 = vsel %vm345, %v309, %v457
      %v605 = vsel %vm345, %v445, %v454
      %v607 = vsel %vm355, %v596, %v466
      %v609 = vsel %vm355, %v599, %v467
      %v611 = vsel %vm355, %v602, %v468
      %v613 = vsel %vm355, %v605, %v465
      %v615 = vsel %vm362, %v607, %v477
      %v617 = vsel %vm362, %v609, %v478
      %v619 = vsel %vm362, %v611, %v479
      %v621 = vsel %vm362, %v613, %v476
      %v624 = vsel %vm345, %v488, %v500
      %v627 = vsel %vm345, %v489, %v501
      %v630 = vsel %vm345, %v490, %v502
      %v633 = vsel %vm345, %v487, %v498
      %v635 = vsel %vm355, %v624, %v512
      %v637 = vsel %vm355, %v627, %v513
      %v639 = vsel %vm355, %v630, %v514
      %v641 = vsel %vm355, %v633, %v510
      %v643 = vsel %vm362, %v635, %v523
      %v645 = vsel %vm362, %v637, %v524
      %v647 = vsel %vm362, %v639, %v525
      %v649 = vsel %vm362, %v641, %v522
      %v652 = vsel %vm345, %v534, %v545
      %v655 = vsel %vm345, %v535, %v546
      %v658 = vsel %vm345, %v536, %v547
      %v661 = vsel %vm345, %v533, %v544
      %v663 = vsel %vm355, %v652, %v556
      %v665 = vsel %vm355, %v655, %v557
      %v667 = vsel %vm355, %v658, %v558
      %v669 = vsel %vm355, %v661, %v555
      %v671 = vsel %vm362, %v663, %v567
      %v673 = vsel %vm362, %v665, %v568
      %v675 = vsel %vm362, %v667, %v569
      %v677 = vsel %vm362, %v669, %v566
      %v680 = vsel %vm345, %v579, %v591
      %v683 = vsel %vm345, %v580, %v592
      %v686 = vsel %vm345, %v581, %v593
      %v689 = vsel %vm345, %v577, %v589
      %v690 = vsel %vm355, %v680, %v321
      %v691 = vsel %vm355, %v683, %v322
      %v692 = vsel %vm355, %v686, %v323
      %v694 = vsel %vm355, %v689, %v319
      %v695 = vsel %vm362, %v690, %v342
      %v696 = vsel %vm362, %v691, %v343
      %v697 = vsel %vm362, %v692, %v344
      %v699 = vsel %vm362, %v694, %v340
      %700 = vrot.lane.b32.xlu0 %v332, 110
      %v701 = vpop.permute.xlu0 %700
      %702 = vrot.lane.b32.xlu0 %v331, 110
      %v703 = vpop.permute.xlu0 %702
      %704 = vrot.lane.b32.xlu0 %v310, 110
      %v705 = vpop.permute.xlu0 %704
      %706 = vrot.lane.b32.xlu0 %v302, 110
      %v707 = vpop.permute.xlu0 %706
      %vm708 = vcmask 900096
      %v709 = vsel %vm708, %v701, %v703
      %v710 = vsel %vm708, %v703, %v705
      %v711 = vsel %vm708, %v705, %v707
      %712 = vrot.lane.b32.xlu0 %v302, 109
      %v713 = vpop.permute.xlu0 %712
      %714 = vrot.lane.b32.xlu0 %v444, 109
      %v715 = vpop.permute.xlu0 %714
      %716 = vrot.lane.b32.xlu0 %v309, 109
      %v717 = vpop.permute.xlu0 %716
      %718 = vrot.lane.b32.xlu0 %v445, 109
      %v719 = vpop.permute.xlu0 %718
      %vm720 = vcmask 891904
      %v721 = vsel %vm720, %v713, %v715
      %v722 = vsel %vm720, %v715, %v717
      %v723 = vsel %vm720, %v717, %v719
      %v725 = vcombine.high %v147, %v147
      %v727 = vunpack.c.l.s4 1983009808
      %v728 = vunpack.c.0.s8 %v727
      %v729 = vlaneseq
      %v730 = vshrl.u32 %v729, 7
      %v731 = vsub.s32 %v728, %v730
      %v732 = vrot.slane %v147, %v731
      %v734 = vunpack.c.l.s4 1983009808
      %v735 = vunpack.c.0.s8 %v734
      %v736 = vlaneseq
      %v737 = vshrl.u32 %v736, 7
      %v738 = vsub.s32 %v735, %v737
      %v739 = vrot.slane %v725, %v738
      %v740 = vcombine.low %v732, %v732
      %v741 = vcombine.low %v739, %v739
      %742 = vrot.lane.b32.xlu0 %v740, 88
      %v743 = vpop.permute.xlu0 %742
      %744 = vrot.lane.b32.xlu0 %v732, 88
      %v745 = vpop.permute.xlu0 %744
      %746 = vrot.lane.b32.xlu0 %v741, 88
      %v747 = vpop.permute.xlu0 %746
      %vm748 = vcmask 719872
      %v749 = vsel %vm748, %v743, %v745
      %v750 = vsel %vm748, %v745, %v747
      %v751 = vcombine.low %v147, %v147
      %v753 = vunpack.c.l.s4 1983009808
      %v754 = vunpack.c.0.s8 %v753
      %v755 = vlaneseq
      %v756 = vshrl.u32 %v755, 7
      %v757 = vsub.s32 %v754, %v756
      %v758 = vrot.slane %v751, %v757
      %v759 = vcombine.low %v758, %v758
      %760 = vrot.lane.b32.xlu0 %v759, 87
      %v761 = vpop.permute.xlu0 %760
      %762 = vrot.lane.b32.xlu0 %v758, 87
      %v763 = vpop.permute.xlu0 %762
      %764 = vrot.lane.b32.xlu0 %v740, 87
      %v765 = vpop.permute.xlu0 %764
      %vm766 = vcmask 711680
      %v767 = vsel %vm766, %v761, %v763
      %v768 = vsel %vm766, %v763, %v765
      %v769 = vcombine.high %v732, %v732
      %770 = vrot.lane.b32.xlu0 %v732, 86
      %v771 = vpop.permute.xlu0 %770
      %772 = vrot.lane.b32.xlu0 %v769, 86
      %v773 = vpop.permute.xlu0 %772
      %774 = vrot.lane.b32.xlu0 %v739, 86
      %v775 = vpop.permute.xlu0 %774
      %v776 = vsel %vm578, %v771, %v773
      %v777 = vsel %vm578, %v773, %v775
      %v778 = vcombine.high %v758, %v758
      %779 = vrot.lane.b32.xlu0 %v758, 85
      %v780 = vpop.permute.xlu0 %779
      %781 = vrot.lane.b32.xlu0 %v778, 85
      %v782 = vpop.permute.xlu0 %781
      %783 = vrot.lane.b32.xlu0 %v732, 85
      %v784 = vpop.permute.xlu0 %783
      %v785 = vsel %vm590, %v780, %v782
      %v786 = vsel %vm590, %v782, %v784
      %787 = vrot.lane.b32.xlu0 %v740, 84
      %v788 = vpop.permute.xlu0 %787
      %789 = vrot.lane.b32.xlu0 %v732, 84
      %v790 = vpop.permute.xlu0 %789
      %791 = vrot.lane.b32.xlu0 %v741, 84
      %v792 = vpop.permute.xlu0 %791
      %v793 = vsel %vm320, %v788, %v790
      %v794 = vsel %vm320, %v790, %v792
      %795 = vrot.lane.b32.xlu0 %v759, 83
      %v796 = vpop.permute.xlu0 %795
      %797 = vrot.lane.b32.xlu0 %v758, 83
      %v798 = vpop.permute.xlu0 %797
      %799 = vrot.lane.b32.xlu0 %v740, 83
      %v800 = vpop.permute.xlu0 %799
      %v801 = vsel %vm341, %v796, %v798
      %v802 = vsel %vm341, %v798, %v800
      %v804 = vsel %vm362, %v607, %v709
      %v806 = vsel %vm362, %v609, %v710
      %v808 = vsel %vm362, %v611, %v711
      %v810 = vsel %vm362, %v613, %v707
      %v812 = vsel %vm345, %v721, %v500
      %v814 = vsel %vm345, %v722, %v501
      %v816 = vsel %vm345, %v723, %v502
      %v818 = vsel %vm345, %v719, %v498
      %v819 = vsel %vm355, %v812, %v512
      %v820 = vsel %vm355, %v814, %v513
      %v821 = vsel %vm355, %v816, %v514
      %v822 = vsel %vm355, %v818, %v510
      %v823 = vsel %vm362, %v819, %v523
      %v824 = vsel %vm362, %v820, %v524
      %v825 = vsel %vm362, %v821, %v525
      %v826 = vsel %vm362, %v822, %v522
      %v828 = vsel %vm355, %v652, %v743
      %v830 = vsel %vm355, %v655, %v749
      %v832 = vsel %vm355, %v658, %v750
      %v834 = vsel %vm355, %v661, %v747
      %v836 = vsel %vm362, %v828, %v761
      %v838 = vsel %vm362, %v830, %v767
      %v840 = vsel %vm362, %v832, %v768
      %v842 = vsel %vm362, %v834, %v765
      %v845 = vsel %vm345, %v771, %v780
      %v848 = vsel %vm345, %v776, %v785
      %v851 = vsel %vm345, %v777, %v786
      %v854 = vsel %vm345, %v775, %v784
      %v856 = vsel %vm355, %v845, %v788
      %v858 = vsel %vm355, %v848, %v793
      %v860 = vsel %vm355, %v851, %v794
      %v862 = vsel %vm355, %v854, %v792
      %v864 = vsel %vm362, %v856, %v796
      %v866 = vsel %vm362, %v858, %v801
      %v868 = vsel %vm362, %v860, %v802
      %v870 = vsel %vm362, %v862, %v800
      %887 = vrot.lane.b32.xlu0 %v615, 82
      %v888 = vpop.permute.xlu0 %887
      %889 = vrot.lane.b32.xlu0 %v617, 82
      %v890 = vpop.permute.xlu0 %889
      %891 = vrot.lane.b32.xlu0 %v619, 82
      %v892 = vpop.permute.xlu0 %891
      %893 = vrot.lane.b32.xlu0 %v621, 82
      %v894 = vpop.permute.xlu0 %893
      %895 = vrot.lane.b32.xlu0 %v643, 82
      %v896 = vpop.permute.xlu0 %895
      %897 = vrot.lane.b32.xlu0 %v645, 82
      %v898 = vpop.permute.xlu0 %897
      %899 = vrot.lane.b32.xlu0 %v647, 82
      %v900 = vpop.permute.xlu0 %899
      %901 = vrot.lane.b32.xlu0 %v649, 82
      %v902 = vpop.permute.xlu0 %901
      %903 = vrot.lane.b32.xlu0 %v671, 82
      %v904 = vpop.permute.xlu0 %903
      %905 = vrot.lane.b32.xlu0 %v673, 82
      %v906 = vpop.permute.xlu0 %905
      %907 = vrot.lane.b32.xlu0 %v675, 82
      %v908 = vpop.permute.xlu0 %907
      %909 = vrot.lane.b32.xlu0 %v677, 82
      %v910 = vpop.permute.xlu0 %909
      %911 = vrot.lane.b32.xlu0 %v695, 82
      %v912 = vpop.permute.xlu0 %911
      %913 = vrot.lane.b32.xlu0 %v696, 82
      %v914 = vpop.permute.xlu0 %913
      %915 = vrot.lane.b32.xlu0 %v697, 82
      %v916 = vpop.permute.xlu0 %915
      %917 = vrot.lane.b32.xlu0 %v699, 82
      %v918 = vpop.permute.xlu0 %917
      %vm919 = vcmask 670720
      %v920 = vsel %vm919, %v888, %v890
      %v921 = vsel %vm919, %v890, %v892
      %v922 = vsel %vm919, %v892, %v894
      %v923 = vsel %vm919, %v896, %v898
      %v924 = vsel %vm919, %v898, %v900
      %v925 = vsel %vm919, %v900, %v902
      %v926 = vsel %vm919, %v904, %v906
      %v927 = vsel %vm919, %v906, %v908
      %v928 = vsel %vm919, %v908, %v910
      %v929 = vsel %vm919, %v912, %v914
      %v930 = vsel %vm919, %v914, %v916
      %v931 = vsel %vm919, %v916, %v918
      %960 = vrot.lane.b32.xlu0 %v804, 36
      %v961 = vpop.permute.xlu0 %960
      %962 = vrot.lane.b32.xlu0 %v806, 36
      %v963 = vpop.permute.xlu0 %962
      %964 = vrot.lane.b32.xlu0 %v808, 36
      %v965 = vpop.permute.xlu0 %964
      %966 = vrot.lane.b32.xlu0 %v810, 36
      %v967 = vpop.permute.xlu0 %966
      %968 = vrot.lane.b32.xlu0 %v823, 36
      %v969 = vpop.permute.xlu0 %968
      %970 = vrot.lane.b32.xlu0 %v824, 36
      %v971 = vpop.permute.xlu0 %970
      %972 = vrot.lane.b32.xlu0 %v825, 36
      %v973 = vpop.permute.xlu0 %972
      %974 = vrot.lane.b32.xlu0 %v826, 36
      %v975 = vpop.permute.xlu0 %974
      %976 = vrot.lane.b32.xlu0 %v836, 36
      %v977 = vpop.permute.xlu0 %976
      %978 = vrot.lane.b32.xlu0 %v838, 36
      %v979 = vpop.permute.xlu0 %978
      %980 = vrot.lane.b32.xlu0 %v840, 36
      %v981 = vpop.permute.xlu0 %980
      %982 = vrot.lane.b32.xlu0 %v842, 36
      %v983 = vpop.permute.xlu0 %982
      %984 = vrot.lane.b32.xlu0 %v864, 36
      %v985 = vpop.permute.xlu0 %984
      %986 = vrot.lane.b32.xlu0 %v866, 36
      %v987 = vpop.permute.xlu0 %986
      %988 = vrot.lane.b32.xlu0 %v868, 36
      %v989 = vpop.permute.xlu0 %988
      %990 = vrot.lane.b32.xlu0 %v870, 36
      %v991 = vpop.permute.xlu0 %990
      %vm992 = vcmask 293888
      %v993 = vsel %vm992, %v961, %v963
      %v994 = vsel %vm992, %v963, %v965
      %v995 = vsel %vm992, %v965, %v967
      %v996 = vsel %vm992, %v969, %v971
      %v997 = vsel %vm992, %v971, %v973
      %v998 = vsel %vm992, %v973, %v975
      %v999 = vsel %vm992, %v977, %v979
      %v1000 = vsel %vm992, %v979, %v981
      %v1001 = vsel %vm992, %v981, %v983
      %v1002 = vsel %vm992, %v985, %v987
      %v1003 = vsel %vm992, %v987, %v989
      %v1004 = vsel %vm992, %v989, %v991
      %1017 = vrot.lane.b32.xlu0 %v732, 118
      %v1018 = vpop.permute.xlu0 %1017
      %1019 = vrot.lane.b32.xlu0 %v769, 118
      %v1020 = vpop.permute.xlu0 %1019
      %1021 = vrot.lane.b32.xlu0 %v739, 118
      %v1022 = vpop.permute.xlu0 %1021
      %vm1023 = vcmask 965632
      %v1024 = vsel %vm1023, %v1018, %v1020
      %v1025 = vsel %vm1023, %v1020, %v1022
      %v1026 = vld [vmem:[%s1] sm:$0xff]
      %v1028 = vunpack.c.l.b16 %v1026
      %v1029 = vunpack.c.h.b16 %v1026
      %v1030 = vpack.c.b16 %v1028, %v1028
      %v1031 = vpack.c.b16 %v1029, %v1029
      %vm1033 = vcmask 556032
      %v1035 = vsel %vm1033, %v1031, 0
      %v1038 = vsel %vm345, %v1024, 0
      %v1041 = vsel %vm345, %v1025, 0
      %v1044 = vsel %vm345, %v1022, 0
      %1046 = vmatprep.subr.bf16.mxu0 %v367
      %1047 = vmatpush1.bf16.msra.mxu0 %v364
      %1048 = vmatprep.subr.bf16.mxu0 %v391
      %1049 = vmatpush1.bf16.msra.mxu0 %v388
      %1050 = vmatprep.subr.bf16.mxu0 %v415
      %1051 = vmatpush1.bf16.msra.mxu0 %v412
      %1052 = vmatprep.subr.bf16.mxu0 %v439
      %1053 = vmatpush1.bf16.msra.mxu0 %v436
      %1054 = vmatprep.subr.bf16.mxu0 %v921
      %1055 = vmatpush1.bf16.msra.mxu0 %v920
      %1056 = vmatprep.subr.bf16.mxu0 %v924
      %1057 = vmatpush1.bf16.msra.mxu0 %v923
      %1058 = vmatprep.subr.bf16.mxu0 %v927
      %1059 = vmatpush1.bf16.msra.mxu0 %v926
      %1060 = vmatprep.subr.bf16.mxu0 %v930
      %1061 = vmatpush1.bf16.msra.mxu0 %v929
      %1062 = vmatprep.subr.bf16.mxu0 %v994
      %1063 = vmatpush1.bf16.msra.mxu0 %v993
      %1064 = vmatprep.subr.bf16.mxu0 %v997
      %1065 = vmatpush1.bf16.msra.mxu0 %v996
      %1066 = vmatprep.subr.bf16.mxu0 %v1000
      %1067 = vmatpush1.bf16.msra.mxu0 %v999
      %1068 = vmatprep.subr.bf16.mxu0 %v1003
      %1069 = vmatpush1.bf16.msra.mxu0 %v1002
      %1070 = vmatprep.subr.bf16.mxu0 %v1041
      %1071 = vmatpush1.bf16.msra.mxu0 %v1038
      %1072 = vmatprep.subr.bf16.mxu0 0
      %1073 = vmatpush1.bf16.msra.mxu0 0
      %1074 = vmatprep.subr.bf16.mxu0 0
      %1075 = vmatpush1.bf16.msra.mxu0 0
      %1076 = vmatprep.subr.bf16.mxu0 0
      %1077 = vmatpush1.bf16.msra.mxu0 0
      %1078 = vmatprep.mubr.bf16.mxu0 %v1035
      %1079 = vmatmul.mubr.bf16.gmra.mrb[0].mxu0 %v1030
      %v1080 = vpop.f32.mrb[0].mxu0
      %v1081 = vadd.f32 0.0, %v1080
      %v1082 = vpop.f32.mrb[0].mxu0
      %v1083 = vadd.f32 0.0, %v1082
      %v1084 = vpop.f32.mrb[0].mxu0
      %v1085 = vpop.f32.mrb[0].mxu0
      %1086 = vdwg.mxu0
      %1087 = vmatprep.subr.bf16.mxu0 0
      %1088 = vmatpush1.bf16.msra.mxu0 %v370
      %1089 = vmatprep.subr.bf16.mxu0 0
      %1090 = vmatpush1.bf16.msra.mxu0 %v394
      %1091 = vmatprep.subr.bf16.mxu0 0
      %1092 = vmatpush1.bf16.msra.mxu0 %v418
      %1093 = vmatprep.subr.bf16.mxu0 0
      %1094 = vmatpush1.bf16.msra.mxu0 %v442
      %1095 = vmatprep.subr.bf16.mxu0 0
      %1096 = vmatpush1.bf16.msra.mxu0 %v922
      %1097 = vmatprep.subr.bf16.mxu0 0
      %1098 = vmatpush1.bf16.msra.mxu0 %v925
      %1099 = vmatprep.subr.bf16.mxu0 0
      %1100 = vmatpush1.bf16.msra.mxu0 %v928
      %1101 = vmatprep.subr.bf16.mxu0 0
      %1102 = vmatpush1.bf16.msra.mxu0 %v931
      %1103 = vmatprep.subr.bf16.mxu0 0
      %1104 = vmatpush1.bf16.msra.mxu0 %v995
      %1105 = vmatprep.subr.bf16.mxu0 0
      %1106 = vmatpush1.bf16.msra.mxu0 %v998
      %1107 = vmatprep.subr.bf16.mxu0 0
      %1108 = vmatpush1.bf16.msra.mxu0 %v1001
      %1109 = vmatprep.subr.bf16.mxu0 0
      %1110 = vmatpush1.bf16.msra.mxu0 %v1004
      %1111 = vmatprep.subr.bf16.mxu0 0
      %1112 = vmatpush1.bf16.msra.mxu0 %v1044
      %1113 = vmatprep.subr.bf16.mxu0 0
      %1114 = vmatpush1.bf16.msra.mxu0 0
      %1115 = vmatprep.subr.bf16.mxu0 0
      %1116 = vmatpush1.bf16.msra.mxu0 0
      %1117 = vmatprep.subr.bf16.mxu0 0
      %1118 = vmatpush1.bf16.msra.mxu0 0
      %1119 = vmatprep.mubr.bf16.mxu0 %v1035
      %1120 = vmatmul.mubr.bf16.gmra.mrb[0].mxu0 %v1030
      %v1121 = vpop.f32.mrb[0].mxu0
      %v1122 = vadd.f32 0.0, %v1121
      %v1123 = vpop.f32.mrb[0].mxu0
      %v1124 = vpop.f32.mrb[0].mxu0
      %v1125 = vpop.f32.mrb[0].mxu0
      %1126 = vdwg.mxu0
      %v1127 = vlaneseq
      %v1128 = vand.u32 %v1127, 127
      %v1129 = vadd.s32 %v1128, 128
      %v1130 = vadd.s32 %v1128, 256
      %vm1131 = vcmp.lt.s32.totalorder %v1128, 0
      %v1132 = vsub.s32 0, %v1128
      %v1133 = vsel %vm1131, %v1132, %v1128
      %v1134 = vmul.u32.u64.compose %v1133, 3123612579
      %v1135 = vextract.low.u32 %v1134
      %v1136 = vextract.high.u32 %v1134
      %v1137 = vshrl.u32 %v1136, 4
      %v1138 = vmul.u32 %v1137, 22
      %v1139 = vsub.s32 %v1133, %v1138
      %v1140 = vsub.s32 0, %v1139
      %v1141 = vsel %vm1131, %v1140, %v1139
      %vm1142 = vcmp.lt.s32.totalorder %v1129, 0
      %v1143 = vsub.s32 0, %v1129
      %v1144 = vsel %vm1142, %v1143, %v1129
      %v1145 = vmul.u32.u64.compose %v1144, 3123612579
      %v1146 = vextract.low.u32 %v1145
      %v1147 = vextract.high.u32 %v1145
      %v1148 = vshrl.u32 %v1147, 4
      %v1149 = vmul.u32 %v1148, 22
      %v1150 = vsub.s32 %v1144, %v1149
      %v1151 = vsub.s32 0, %v1150
      %v1152 = vsel %vm1142, %v1151, %v1150
      %vm1153 = vcmp.lt.s32.totalorder %v1130, 0
      %v1154 = vsub.s32 0, %v1130
      %v1155 = vsel %vm1153, %v1154, %v1130
      %v1156 = vmul.u32.u64.compose %v1155, 3123612579
      %v1157 = vextract.low.u32 %v1156
      %v1158 = vextract.high.u32 %v1156
      %v1159 = vshrl.u32 %v1158, 4
      %v1160 = vmul.u32 %v1159, 22
      %v1161 = vsub.s32 %v1155, %v1160
      %v1162 = vsub.s32 0, %v1161
      %v1163 = vsel %vm1153, %v1162, %v1161
      %vm1164 = vcmp.ne.s32.totalorder %v1141, 0
      %vm1165 = vcmp.ne.s32.totalorder %v1152, 0
      %vm1166 = vcmp.ne.s32.totalorder %v1163, 0
      %vm1167 = vcmp.lt.s32.totalorder %v1141, 0
      %vm1168 = vcmp.lt.s32.totalorder %v1152, 0
      %vm1169 = vcmp.lt.s32.totalorder %v1163, 0
      %vm1170 = vmand %vm1167, %vm1164
      %vm1171 = vmand %vm1168, %vm1165
      %vm1172 = vmand %vm1169, %vm1166
      %v1173 = vadd.s32 %v1141, 22
      %v1174 = vadd.s32 %v1152, 22
      %v1175 = vadd.s32 %v1163, 22
      %v1176 = vsel %vm1170, %v1173, %v1141
      %v1177 = vsel %vm1171, %v1174, %v1152
      %v1178 = vsel %vm1172, %v1175, %v1163
      %vm1179 = vcmp.lt.s32.totalorder %v1176, 16
      %vm1180 = vcmp.lt.s32.totalorder %v1177, 16
      %vm1181 = vcmp.lt.s32.totalorder %v1178, 16
      %v1182 = vsel %vm1179, 1, 0
      %v1183 = vsel %vm1180, 1, 0
      %v1184 = vsel %vm1181, 1, 0
      %v1185 = vcvt.s32.f32 %v1182
      %v1186 = vcvt.s32.f32 %v1183
      %v1187 = vcvt.s32.f32 %v1184
      %v1188 = vmul.f32 %v1081, %v1185
      %v1189 = vmul.f32 %v1083, %v1186
      %v1190 = vmul.f32 %v1122, %v1187
      %v1191 = vadd.f32 %v1188, %v1189
      %vm1192 = vcmask 785408
      %v1193 = vsel %vm1192, %v1190, 0.0
      %v1194 = vadd.f32 %v1191, %v1193
      %1195 = vadd.xlane.f32.xlu0 %v1194
      %v1196 = vpop.xlane.xlu0 %1195
      %v1197 = vmul.f32 %v1196, 0.00390625
      %v1198 = vsub.f32 %v1081, %v1197
      %v1199 = vsub.f32 %v1083, %v1197
      %v1200 = vsub.f32 %v1122, %v1197
      %v1201 = vmul.f32 %v1198, %v1185
      %v1202 = vmul.f32 %v1199, %v1186
      %v1203 = vmul.f32 %v1200, %v1187
      %v1204 = vmul.f32 %v1201, %v1201
      %v1205 = vmul.f32 %v1202, %v1202
      %v1206 = vmul.f32 %v1203, %v1203
      %v1207 = vadd.f32 %v1204, %v1205
      %v1208 = vsel %vm1192, %v1206, 0.0
      %v1209 = vadd.f32 %v1207, %v1208
      %1210 = vadd.xlane.f32.xlu0 %v1209
      %v1211 = vpop.xlane.xlu0 %1210
      %v1212 = vmul.f32 %v1211, 0.00390625
      %v1213 = vadd.f32 %v1212, 1e-05
      %v1214 = vrsqrt.pop %v1213
      %v1215 = vmul.f32 %v1198, %v1214
      %v1216 = vmul.f32 %v1199, %v1214
      %v1217 = vmul.f32 %v1200, %v1214
      %v1218 = vmax.f32 %v1215, 0.0
      %v1219 = vmax.f32 %v1216, 0.0
      %v1220 = vmax.f32 %v1217, 0.0
      %v1221 = vpack.c.bf16 %v1218, %v1218
      %v1222 = vpack.c.bf16 %v1219, %v1219
      %v1223 = vpack.c.bf16 %v1220, %v1220
      %v1227 = vunpack.c.l.b16 %v1221
      %v1228 = vunpack.c.l.b16 %v1222
      %v1229 = vunpack.c.l.b16 %v1223
      %v1230 = vpack.c.b16 %v1228, %v1227
      %v1231 = vpack.c.b16 %v1229, %v1229
      %1234 = vst [vmem:[%s143] sm:$0xff] %v1230
      %vm1235 = vcmask 781312
      %1236 = vst.msk [vmem:[%s143 + $0x8] sm:$0xf] %vm1235, %v1231
      %p1237 = scmp.lt.s32.totalorder %s13, 1
      %s1238 = scalar_select %p1237, %s13, 1
      %s1239 = smul.addr %s1238, 3
      %s1240 = smul.addr %s1239, 4
      %s1241 = scalar_lea.vmem %s2, %s1240
      // Predicated region
      $region29: #{preset_generator_resnet_forward.8} parent=27 // pred_check
        %p1242 = pneg %p78
      $region30: #{preset_generator_resnet_forward.8} parent=27 // pred_check_branch
        %1244 = sbr.rel (%p1242) target = $region32
      $region31: #{preset_generator_resnet_forward.8} parent=27 // pred_region
        _
      $region32: #{preset_generator_resnet_forward.8} parent=27 // pred_fallthru
        _
    $region28: #{preset_generator_resnet_forward.8} parent=5 // pred_fallthru
      _
    %p1245 = scmp.le.s32.totalorder 2, %s8
    // Predicated region
    $region33: #{preset_generator_resnet_forward.8} parent=5 // pred_check
      %p1246 = pneg %p1245
    $region34: #{preset_generator_resnet_forward.8} parent=5 // pred_check_branch
      %1248 = sbr.rel (%p1246) target = $region36
    $region35: #{preset_generator_resnet_forward.8} parent=5 // pred_region
      %s1249 = ssub.s32 %s8, 2
      // Predicated region
      $region37: #{preset_generator_resnet_forward.8} parent=35 // pred_check
        %p1250 = pneg %p84
      $region38: #{preset_generator_resnet_forward.8} parent=35 // pred_check_branch
        %1252 = sbr.rel (%p1250) target = $region40
      $region39: #{preset_generator_resnet_forward.8} parent=35 // pred_region
        %p1253 = scmp.lt.s32.totalorder %s14, 1
        %s1254 = scalar_select %p1253, %s14, 1
        %s1255 = smul.addr %s1254, 3
        %s1256 = smul.addr %s1255, 4
        %s1257 = scalar_lea.vmem %s2, %s1256
      $region40: #{preset_generator_resnet_forward.8} parent=35 // pred_fallthru
        _
    $region36: #{preset_generator_resnet_forward.8} parent=5 // pred_fallthru
      _
  $region6: #{preset_generator_resnet_forward.8} parent=0 // loop_footer
    %s12 = sadd.s32 1, %s8
  $region7: #{preset_generator_resnet_forward.8} parent=0 // loop_footer_branch
    %7 = sbr.rel target = $region3
  $region8: #{preset_generator_resnet_forward.8} parent=0 // loop_exit
    _

// kernel: preset_generator_resnet_forward.10
$region0: #{preset_generator_resnet_forward.10}
  #allocation0 [shape = 'u32[]', space=smem, size = 0x4, offset = 0x4, fixed_abs, tag = 'smem constant byte address 0x4 - core index']
  #allocation1 [shape = 'u32[144,128]{1,0:T(1,128)}', space=vmem, size = 0x12000, scoped, tag = 'internal scratch']
  %s0 = inlined_call_operand.vmem [shape: bf16[2,16,102], index: 0, kind: input, shape index: {}]
  %s1 = inlined_call_operand.vmem [shape: bf16[16,144], index: 1, kind: input, shape index: {}]
  %s2 = inlined_call_operand.vmem [shape: bf16[2,16,80], index: 2, kind: output, shape index: {}]
  %s3 = sld [smem:[#allocation0]]
  $region41: #{preset_generator_resnet_forward.10} parent=0
    _
  %s5 = ssub.s32 1, %s3
  %s6 = scalar_select 0, %s5, %s3
  loop: start=0, step=1, limit=4
  $region2: #{preset_generator_resnet_forward.10} parent=0 // loop_pre_header
    _
  $region3: #{preset_generator_resnet_forward.10} parent=0 // loop_header
    %s8 = sphi 0, %s12
    %p9 = scmp.ge.s32.totalorder %s8, 4
    %s18 = sphi 0, %s20
    %s21 = sphi 0, %s18
    %s22 = sphi 0, %s21
    %s38 = sphi 0, %s22
    %s42 = sphi 0, %s42
    %s44 = sphi 0, %s42
    %s45 = sphi 0, %s44
    %s59 = sphi 0, %s45
    %s65 = sphi 0, %s67
    %s68 = sphi 0, %s65
    %s69 = sphi 0, %s68
    %s85 = sphi 0, %s69
  $region4: #{preset_generator_resnet_forward.10} parent=0 // loop_header_branch
    %11 = sbr.rel (%p9) target = $region8
  $region5: #{preset_generator_resnet_forward.10} parent=0 // loop_body
    %s13 = ssub.s32 %s8, 1
    %s14 = ssub.s32 %s8, 2
    %s15 = sadd.s32 %s8, 1
    %s16 = ssub.s32 %s8, %s15
    %p17 = scmp.eq.s32.totalorder %s16, 0
    %s19 = sadd.s32 %s18, 1
    %s20 = scalar_select %p17, %s18, %s19
    %p23 = pneg %p17
    %p24 = scmp.eq.s32.totalorder %s8, 1
    %p25 = por %p23, %p24
    %p26 = scmp.ne.s32.totalorder %s18, %s21
    %p27 = scmp.eq.s32.totalorder %s8, 0
    %p28 = por %p26, %p27
    %p29 = scmp.ne.s32.totalorder %s18, %s21
    %p30 = scmp.eq.s32.totalorder %s13, 1
    %p31 = por %p29, %p30
    %p32 = scmp.ne.s32.totalorder %s21, %s22
    %p33 = scmp.eq.s32.totalorder %s13, 0
    %p34 = por %p32, %p33
    %p35 = scmp.ne.s32.totalorder %s21, %s22
    %p36 = scmp.eq.s32.totalorder %s14, 1
    %p37 = por %p35, %p36
    %p39 = scmp.ne.s32.totalorder %s22, %s38
    %p40 = scmp.eq.s32.totalorder %s14, 0
    %p41 = por %p39, %p40
    %s43 = sadd.s32 %s42, 1
    %p46 = scmp.eq.s32.totalorder %s8, 1
    %p47 = scmp.ne.s32.totalorder %s42, %s44
    %p48 = scmp.eq.s32.totalorder %s8, 0
    %p49 = por %p47, %p48
    %p50 = scmp.ne.s32.totalorder %s42, %s44
    %p51 = scmp.eq.s32.totalorder %s13, 1
    %p52 = por %p50, %p51
    %p53 = scmp.ne.s32.totalorder %s44, %s45
    %p54 = scmp.eq.s32.totalorder %s13, 0
    %p55 = por %p53, %p54
    %p56 = scmp.ne.s32.totalorder %s44, %s45
    %p57 = scmp.eq.s32.totalorder %s14, 1
    %p58 = por %p56, %p57
    %p60 = scmp.ne.s32.totalorder %s45, %s59
    %p61 = scmp.eq.s32.totalorder %s14, 0
    %p62 = por %p60, %p61
    %s63 = ssub.s32 %s8, %s15
    %p64 = scmp.eq.s32.totalorder %s63, 0
    %s66 = sadd.s32 %s65, 1
    %s67 = scalar_select %p64, %s65, %s66
    %p70 = pneg %p64
    %p71 = scmp.eq.s32.totalorder %s8, 1
    %p72 = por %p70, %p71
    %p73 = scmp.ne.s32.totalorder %s65, %s68
    %p74 = scmp.eq.s32.totalorder %s8, 0
    %p75 = por %p73, %p74
    %p76 = scmp.ne.s32.totalorder %s65, %s68
    %p77 = scmp.eq.s32.totalorder %s13, 1
    %p78 = por %p76, %p77
    %p79 = scmp.ne.s32.totalorder %s68, %s69
    %p80 = scmp.eq.s32.totalorder %s13, 0
    %p81 = por %p79, %p80
    %p82 = scmp.ne.s32.totalorder %s68, %s69
    %p83 = scmp.eq.s32.totalorder %s14, 1
    %p84 = por %p82, %p83
    %p86 = scmp.ne.s32.totalorder %s69, %s85
    %p87 = scmp.eq.s32.totalorder %s14, 0
    %p88 = por %p86, %p87
    %p89 = scmp.le.s32.totalorder 1, %s8
    %p90 = scmp.lt.s32.totalorder %s8, 3
    %p91 = pnand %p89, %p90
    %p92 = pneg %p91
    // Predicated region
    $region9: #{preset_generator_resnet_forward.10} parent=5 // pred_check
      _
    $region10: #{preset_generator_resnet_forward.10} parent=5 // pred_check_branch
      %94 = sbr.rel (%p91) target = $region12
    $region11: #{preset_generator_resnet_forward.10} parent=5 // pred_region
      %s95 = ssub.s32 %s8, 1
      // Predicated region
      $region13: #{preset_generator_resnet_forward.10} parent=11 // pred_check
        %p96 = pneg %p55
      $region14: #{preset_generator_resnet_forward.10} parent=11 // pred_check_branch
        %98 = sbr.rel (%p96) target = $region16
      $region15: #{preset_generator_resnet_forward.10} parent=11 // pred_region
        _
      $region16: #{preset_generator_resnet_forward.10} parent=11 // pred_fallthru
        _
    $region12: #{preset_generator_resnet_forward.10} parent=5 // pred_fallthru
      _
    %p99 = scmp.lt.s32.totalorder %s8, 2
    // Predicated region
    $region17: #{preset_generator_resnet_forward.10} parent=5 // pred_check
      %p100 = pneg %p99
    $region18: #{preset_generator_resnet_forward.10} parent=5 // pred_check_branch
      %102 = sbr.rel (%p100) target = $region20
    $region19: #{preset_generator_resnet_forward.10} parent=5 // pred_region
      // Predicated region
      $region21: #{preset_generator_resnet_forward.10} parent=19 // pred_check
        %p103 = pneg %p28
      $region22: #{preset_generator_resnet_forward.10} parent=19 // pred_check_branch
        %105 = sbr.rel (%p103) target = $region24
      $region23: #{preset_generator_resnet_forward.10} parent=19 // pred_region
        %p106 = scmp.lt.s32.totalorder %s8, 1
        %s107 = scalar_select %p106, %s8, 1
        %s108 = smul.addr %s107, 2
        %s109 = smul.addr %s108, 4
        %s110 = scalar_lea.vmem %s0, %s109
      $region24: #{preset_generator_resnet_forward.10} parent=19 // pred_fallthru
        _
    $region20: #{preset_generator_resnet_forward.10} parent=5 // pred_fallthru
      _
    %p111 = scmp.le.s32.totalorder 1, %s8
    %p112 = scmp.lt.s32.totalorder %s8, 3
    %p113 = pnand %p111, %p112
    %p114 = pneg %p113
    // Predicated region
    $region25: #{preset_generator_resnet_forward.10} parent=5 // pred_check
      _
    $region26: #{preset_generator_resnet_forward.10} parent=5 // pred_check_branch
      %116 = sbr.rel (%p113) target = $region28
    $region27: #{preset_generator_resnet_forward.10} parent=5 // pred_region
      %s117 = ssub.s32 %s8, 1
      %p118 = scmp.lt.s32.totalorder %s13, 1
      %s119 = scalar_select %p118, %s13, 1
      %s120 = smul.addr %s119, 2
      %s121 = smul.addr %s120, 4
      %s122 = scalar_lea.vmem %s0, %s121
      %p123 = pneg %p34
      %p124 = pneg %p31
      %p125 = pneg %p55
      %p126 = pneg %p52
      %p127 = pneg %p81
      %p128 = pneg %p78
      %p129 = scmp.lt.s32.totalorder %s13, 1
      %s130 = scalar_select %p129, %s13, 1
      %s131 = smul.addr %s130, 2
      %s132 = smul.addr %s131, 4
      %s133 = scalar_lea.vmem %s2, %s132
      %p134 = scmp.lt.s32.totalorder %s13, 1
      %s135 = scalar_select %p134, %s13, 1
      %s136 = smul.addr %s135, 2
      %s137 = smul.addr %s136, 4
      %s138 = scalar_lea.vmem %s0, %s137
      %p139 = scmp.lt.s32.totalorder %s13, 1
      %s140 = scalar_select %p139, %s13, 1
      %s141 = smul.addr %s140, 2
      %s142 = smul.addr %s141, 4
      %s143 = scalar_lea.vmem %s2, %s142
      %v145 = vld [vmem:[%s138] sm:$0xf]
      %v146 = vld [vmem:[%s138 + $0x4] sm:$0xf]
      %v149 = vunpack.c.l.b16 %v145
      %v150 = vunpack.c.l.b16 %v146
      %v151 = vpack.c.b16 %v150, %v149
      %153 = vrot.lane.b32.xlu0 %v151, 127
      %v154 = vpop.permute.xlu0 %153
      %156 = vrot.lane.b32.xlu0 %v151, 126
      %v157 = vpop.permute.xlu0 %156
      %159 = vrot.lane.b32.xlu0 %v151, 118
      %v160 = vpop.permute.xlu0 %159
      %162 = vrot.lane.b32.xlu0 %v151, 117
      %v163 = vpop.permute.xlu0 %162
      %165 = vrot.lane.b32.xlu0 %v151, 116
      %v166 = vpop.permute.xlu0 %165
      %168 = vrot.lane.b32.xlu0 %v151, 108
      %v169 = vpop.permute.xlu0 %168
      %171 = vrot.lane.b32.xlu0 %v151, 107
      %v172 = vpop.permute.xlu0 %171
      %174 = vrot.lane.b32.xlu0 %v151, 106
      %v175 = vpop.permute.xlu0 %174
      %v177 = vld [vmem:[%s1] sm:$0xff]
      %v178 = vld [vmem:[%s1 + $0x8] sm:$0xff]
      %v181 = vunpack.c.l.b16 %v177
      %v182 = vunpack.c.h.b16 %v177
      %v183 = vunpack.c.l.b16 %v178
      %v184 = vunpack.c.h.b16 %v178
      %v185 = vpack.c.b16 %v183, %v181
      %v186 = vpack.c.b16 %v184, %v182
      %vm188 = vcmask 130048
      %v190 = vsel %vm188, %v186, 0
      %192 = vmatprep.subr.bf16.mxu0 0
      %193 = vmatpush1.bf16.msra.mxu0 %v151
      %194 = vmatprep.subr.bf16.mxu0 0
      %195 = vmatpush1.bf16.msra.mxu0 %v154
      %196 = vmatprep.subr.bf16.mxu0 0
      %197 = vmatpush1.bf16.msra.mxu0 %v157
      %198 = vmatprep.subr.bf16.mxu0 0
      %199 = vmatpush1.bf16.msra.mxu0 %v160
      %200 = vmatprep.subr.bf16.mxu0 0
      %201 = vmatpush1.bf16.msra.mxu0 %v163
      %202 = vmatprep.subr.bf16.mxu0 0
      %203 = vmatpush1.bf16.msra.mxu0 %v166
      %204 = vmatprep.subr.bf16.mxu0 0
      %205 = vmatpush1.bf16.msra.mxu0 %v169
      %206 = vmatprep.subr.bf16.mxu0 0
      %207 = vmatpush1.bf16.msra.mxu0 %v172
      %208 = vmatprep.subr.bf16.mxu0 0
      %209 = vmatpush1.bf16.msra.mxu0 %v175
      %210 = vmatprep.subr.bf16.mxu0 0
      %211 = vmatpush1.bf16.msra.mxu0 0
      %212 = vmatprep.subr.bf16.mxu0 0
      %213 = vmatpush1.bf16.msra.mxu0 0
      %214 = vmatprep.subr.bf16.mxu0 0
      %215 = vmatpush1.bf16.msra.mxu0 0
      %216 = vmatprep.subr.bf16.mxu0 0
      %217 = vmatpush1.bf16.msra.mxu0 0
      %218 = vmatprep.subr.bf16.mxu0 0
      %219 = vmatpush1.bf16.msra.mxu0 0
      %220 = vmatprep.subr.bf16.mxu0 0
      %221 = vmatpush1.bf16.msra.mxu0 0
      %222 = vmatprep.subr.bf16.mxu0 0
      %223 = vmatpush1.bf16.msra.mxu0 0
      %224 = vmatprep.mubr.bf16.mxu0 %v190
      %225 = vmatmul.mubr.bf16.gmra.mrb[0].mxu0 %v185
      %v226 = vpop.f32.mrb[0].mxu0
      %v227 = vadd.f32 0.0, %v226
      %v228 = vpop.f32.mrb[0].mxu0
      %v229 = vpop.f32.mrb[0].mxu0
      %v230 = vadd.f32 0.0, %v229
      %v231 = vpop.f32.mrb[0].mxu0
      %232 = vdwg.mxu0
      %v233 = vlaneseq
      %v234 = vand.u32 %v233, 127
      %vm235 = vcmp.lt.s32.totalorder %v234, 0
      %v236 = vsub.s32 0, %v234
      %v237 = vsel %vm235, %v236, %v234
      %v238 = vmul.u32.u64.compose %v237, 3435973837
      %v239 = vextract.low.u32 %v238
      %v240 = vextract.high.u32 %v238
      %v241 = vshrl.u32 %v240, 3
      %v242 = vmul.u32 %v241, 10
      %v243 = vsub.s32 %v237, %v242
      %v244 = vsub.s32 0, %v243
      %v245 = vsel %vm235, %v244, %v243
      %vm246 = vcmp.ne.s32.totalorder %v245, 0
      %vm247 = vcmp.lt.s32.totalorder %v245, 0
      %vm248 = vmand %vm247, %vm246
      %v249 = vadd.s32 %v245, 10
      %v250 = vsel %vm248, %v249, %v245
      %vm251 = vcmp.lt.s32.totalorder %v250, 8
      %v252 = vsel %vm251, 1, 0
      %v253 = vcvt.s32.f32 %v252
      %v254 = vmul.f32 %v227, %v253
      %v255 = vmul.f32 %v230, %v253
      %vm256 = vcmask 654336
      %v257 = vsel %vm256, %v254, 0.0
      %258 = vadd.xlane.f32.xlu0 %v257
      %v259 = vpop.xlane.xlu0 %258
      %v260 = vsel %vm256, %v255, 0.0
      %261 = vadd.xlane.f32.xlu0 %v260
      %v262 = vpop.xlane.xlu0 %261
      %v263 = vmul.f32 %v259, 0.015625
      %v264 = vmul.f32 %v262, 0.015625
      %v265 = vsub.f32 %v227, %v263
      %v266 = vsub.f32 %v230, %v264
      %v267 = vmul.f32 %v265, %v253
      %v268 = vmul.f32 %v266, %v253
      %v269 = vmul.f32 %v267, %v267
      %v270 = vmul.f32 %v268, %v268
      %v271 = vsel %vm256, %v269, 0.0
      %272 = vadd.xlane.f32.xlu0 %v271
      %v273 = vpop.xlane.xlu0 %272
      %v274 = vsel %vm256, %v270, 0.0
      %275 = vadd.xlane.f32.xlu0 %v274
      %v276 = vpop.xlane.xlu0 %275
      %v277 = vmul.f32 %v273, 0.015625
      %v278 = vmul.f32 %v276, 0.015625
      %v279 = vadd.f32 %v277, 1e-05
      %v280 = vadd.f32 %v278, 1e-05
      %v281 = vrsqrt.pop %v279
      %v282 = vrsqrt.pop %v280
      %v283 = vmul.f32 %v265, %v281
      %v284 = vmul.f32 %v266, %v282
      %v285 = vmax.f32 %v283, 0.0
      %v286 = vmax.f32 %v284, 0.0
      %v287 = vpack.c.bf16 %v286, %v285
      %v289 = vunpack.c.l.b16 %v287
      %v290 = vunpack.c.h.b16 %v287
      %v291 = vpack.c.b16 %v289, %v289
      %v292 = vpack.c.b16 %v290, %v290
      %vm295 = vcmask 650240
      %296 = vst.msk [vmem:[%s143] sm:$0xf] %vm295, %v291
      %297 = vst.msk [vmem:[%s143 + $0x4] sm:$0xf] %vm295, %v292
      %p298 = scmp.lt.s32.totalorder %s13, 1
      %s299 = scalar_select %p298, %s13, 1
      %s300 = smul.addr %s299, 2
      %s301 = smul.addr %s300, 4
      %s302 = scalar_lea.vmem %s2, %s301
      // Predicated region
      $region29: #{preset_generator_resnet_forward.10} parent=27 // pred_check
        %p303 = pneg %p78
      $region30: #{preset_generator_resnet_forward.10} parent=27 // pred_check_branch
        %305 = sbr.rel (%p303) target = $region32
      $region31: #{preset_generator_resnet_forward.10} parent=27 // pred_region
        _
      $region32: #{preset_generator_resnet_forward.10} parent=27 // pred_fallthru
        _
    $region28: #{preset_generator_resnet_forward.10} parent=5 // pred_fallthru
      _
    %p306 = scmp.le.s32.totalorder 2, %s8
    // Predicated region
    $region33: #{preset_generator_resnet_forward.10} parent=5 // pred_check
      %p307 = pneg %p306
    $region34: #{preset_generator_resnet_forward.10} parent=5 // pred_check_branch
      %309 = sbr.rel (%p307) target = $region36
    $region35: #{preset_generator_resnet_forward.10} parent=5 // pred_region
      %s310 = ssub.s32 %s8, 2
      // Predicated region
      $region37: #{preset_generator_resnet_forward.10} parent=35 // pred_check
        %p311 = pneg %p84
      $region38: #{preset_generator_resnet_forward.10} parent=35 // pred_check_branch
        %313 = sbr.rel (%p311) target = $region40
      $region39: #{preset_generator_resnet_forward.10} parent=35 // pred_region
        %p314 = scmp.lt.s32.totalorder %s14, 1
        %s315 = scalar_select %p314, %s14, 1
        %s316 = smul.addr %s315, 2
        %s317 = smul.addr %s316, 4
        %s318 = scalar_lea.vmem %s2, %s317
      $region40: #{preset_generator_resnet_forward.10} parent=35 // pred_fallthru
        _
    $region36: #{preset_generator_resnet_forward.10} parent=5 // pred_fallthru
      _
  $region6: #{preset_generator_resnet_forward.10} parent=0 // loop_footer
    %s12 = sadd.s32 1, %s8
  $region7: #{preset_generator_resnet_forward.10} parent=0 // loop_footer_branch
    %7 = sbr.rel target = $region3
  $region8: #{preset_generator_resnet_forward.10} parent=0 // loop_exit
    _

// kernel: preset_generator_resnet_forward.11
$region0: #{preset_generator_resnet_forward.11}
  #allocation0 [shape = 'u32[]', space=smem, size = 0x4, offset = 0x4, fixed_abs, tag = 'smem constant byte address 0x4 - core index']
  #allocation1 [shape = 'u32[144,128]{1,0:T(1,128)}', space=vmem, size = 0x12000, scoped, tag = 'internal scratch']
  %s0 = inlined_call_operand.vmem [shape: bf16[2,16,102], index: 0, kind: input, shape index: {}]
  %s1 = inlined_call_operand.vmem [shape: bf16[16,144], index: 1, kind: input, shape index: {}]
  %s2 = inlined_call_operand.vmem [shape: bf16[2,16,80], index: 2, kind: input, shape index: {}]
  %s3 = inlined_call_operand.vmem [shape: bf16[2,16,80], index: 3, kind: output, shape index: {}]
  %s4 = sld [smem:[#allocation0]]
  $region45: #{preset_generator_resnet_forward.11} parent=0
    _
  %s6 = ssub.s32 1, %s4
  %s7 = scalar_select 0, %s6, %s4
  loop: start=0, step=1, limit=4
  $region2: #{preset_generator_resnet_forward.11} parent=0 // loop_pre_header
    _
  $region3: #{preset_generator_resnet_forward.11} parent=0 // loop_header
    %s9 = sphi 0, %s13
    %p10 = scmp.ge.s32.totalorder %s9, 4
    %s19 = sphi 0, %s21
    %s22 = sphi 0, %s19
    %s23 = sphi 0, %s22
    %s39 = sphi 0, %s23
    %s43 = sphi 0, %s43
    %s45 = sphi 0, %s43
    %s46 = sphi 0, %s45
    %s60 = sphi 0, %s46
    %s66 = sphi 0, %s68
    %s69 = sphi 0, %s66
    %s70 = sphi 0, %s69
    %s86 = sphi 0, %s70
    %s92 = sphi 0, %s94
    %s95 = sphi 0, %s92
    %s96 = sphi 0, %s95
    %s112 = sphi 0, %s96
  $region4: #{preset_generator_resnet_forward.11} parent=0 // loop_header_branch
    %12 = sbr.rel (%p10) target = $region8
  $region5: #{preset_generator_resnet_forward.11} parent=0 // loop_body
    %s14 = ssub.s32 %s9, 1
    %s15 = ssub.s32 %s9, 2
    %s16 = sadd.s32 %s9, 1
    %s17 = ssub.s32 %s9, %s16
    %p18 = scmp.eq.s32.totalorder %s17, 0
    %s20 = sadd.s32 %s19, 1
    %s21 = scalar_select %p18, %s19, %s20
    %p24 = pneg %p18
    %p25 = scmp.eq.s32.totalorder %s9, 1
    %p26 = por %p24, %p25
    %p27 = scmp.ne.s32.totalorder %s19, %s22
    %p28 = scmp.eq.s32.totalorder %s9, 0
    %p29 = por %p27, %p28
    %p30 = scmp.ne.s32.totalorder %s19, %s22
    %p31 = scmp.eq.s32.totalorder %s14, 1
    %p32 = por %p30, %p31
    %p33 = scmp.ne.s32.totalorder %s22, %s23
    %p34 = scmp.eq.s32.totalorder %s14, 0
    %p35 = por %p33, %p34
    %p36 = scmp.ne.s32.totalorder %s22, %s23
    %p37 = scmp.eq.s32.totalorder %s15, 1
    %p38 = por %p36, %p37
    %p40 = scmp.ne.s32.totalorder %s23, %s39
    %p41 = scmp.eq.s32.totalorder %s15, 0
    %p42 = por %p40, %p41
    %s44 = sadd.s32 %s43, 1
    %p47 = scmp.eq.s32.totalorder %s9, 1
    %p48 = scmp.ne.s32.totalorder %s43, %s45
    %p49 = scmp.eq.s32.totalorder %s9, 0
    %p50 = por %p48, %p49
    %p51 = scmp.ne.s32.totalorder %s43, %s45
    %p52 = scmp.eq.s32.totalorder %s14, 1
    %p53 = por %p51, %p52
    %p54 = scmp.ne.s32.totalorder %s45, %s46
    %p55 = scmp.eq.s32.totalorder %s14, 0
    %p56 = por %p54, %p55
    %p57 = scmp.ne.s32.totalorder %s45, %s46
    %p58 = scmp.eq.s32.totalorder %s15, 1
    %p59 = por %p57, %p58
    %p61 = scmp.ne.s32.totalorder %s46, %s60
    %p62 = scmp.eq.s32.totalorder %s15, 0
    %p63 = por %p61, %p62
    %s64 = ssub.s32 %s9, %s16
    %p65 = scmp.eq.s32.totalorder %s64, 0
    %s67 = sadd.s32 %s66, 1
    %s68 = scalar_select %p65, %s66, %s67
    %p71 = pneg %p65
    %p72 = scmp.eq.s32.totalorder %s9, 1
    %p73 = por %p71, %p72
    %p74 = scmp.ne.s32.totalorder %s66, %s69
    %p75 = scmp.eq.s32.totalorder %s9, 0
    %p76 = por %p74, %p75
    %p77 = scmp.ne.s32.totalorder %s66, %s69
    %p78 = scmp.eq.s32.totalorder %s14, 1
    %p79 = por %p77, %p78
    %p80 = scmp.ne.s32.totalorder %s69, %s70
    %p81 = scmp.eq.s32.totalorder %s14, 0
    %p82 = por %p80, %p81
    %p83 = scmp.ne.s32.totalorder %s69, %s70
    %p84 = scmp.eq.s32.totalorder %s15, 1
    %p85 = por %p83, %p84
    %p87 = scmp.ne.s32.totalorder %s70, %s86
    %p88 = scmp.eq.s32.totalorder %s15, 0
    %p89 = por %p87, %p88
    %s90 = ssub.s32 %s9, %s16
    %p91 = scmp.eq.s32.totalorder %s90, 0
    %s93 = sadd.s32 %s92, 1
    %s94 = scalar_select %p91, %s92, %s93
    %p97 = pneg %p91
    %p98 = scmp.eq.s32.totalorder %s9, 1
    %p99 = por %p97, %p98
    %p100 = scmp.ne.s32.totalorder %s92, %s95
    %p101 = scmp.eq.s32.totalorder %s9, 0
    %p102 = por %p100, %p101
    %p103 = scmp.ne.s32.totalorder %s92, %s95
    %p104 = scmp.eq.s32.totalorder %s14, 1
    %p105 = por %p103, %p104
    %p106 = scmp.ne.s32.totalorder %s95, %s96
    %p107 = scmp.eq.s32.totalorder %s14, 0
    %p108 = por %p106, %p107
    %p109 = scmp.ne.s32.totalorder %s95, %s96
    %p110 = scmp.eq.s32.totalorder %s15, 1
    %p111 = por %p109, %p110
    %p113 = scmp.ne.s32.totalorder %s96, %s112
    %p114 = scmp.eq.s32.totalorder %s15, 0
    %p115 = por %p113, %p114
    %p116 = scmp.le.s32.totalorder 1, %s9
    %p117 = scmp.lt.s32.totalorder %s9, 3
    %p118 = pnand %p116, %p117
    %p119 = pneg %p118
    // Predicated region
    $region9: #{preset_generator_resnet_forward.11} parent=5 // pred_check
      _
    $region10: #{preset_generator_resnet_forward.11} parent=5 // pred_check_branch
      %121 = sbr.rel (%p118) target = $region12
    $region11: #{preset_generator_resnet_forward.11} parent=5 // pred_region
      %s122 = ssub.s32 %s9, 1
      // Predicated region
      $region13: #{preset_generator_resnet_forward.11} parent=11 // pred_check
        %p123 = pneg %p56
      $region14: #{preset_generator_resnet_forward.11} parent=11 // pred_check_branch
        %125 = sbr.rel (%p123) target = $region16
      $region15: #{preset_generator_resnet_forward.11} parent=11 // pred_region
        _
      $region16: #{preset_generator_resnet_forward.11} parent=11 // pred_fallthru
        _
    $region12: #{preset_generator_resnet_forward.11} parent=5 // pred_fallthru
      _
    %p126 = scmp.lt.s32.totalorder %s9, 2
    // Predicated region
    $region17: #{preset_generator_resnet_forward.11} parent=5 // pred_check
      %p127 = pneg %p126
    $region18: #{preset_generator_resnet_forward.11} parent=5 // pred_check_branch
      %129 = sbr.rel (%p127) target = $region20
    $region19: #{preset_generator_resnet_forward.11} parent=5 // pred_region
      // Predicated region
      $region21: #{preset_generator_resnet_forward.11} parent=19 // pred_check
        %p130 = pneg %p29
      $region22: #{preset_generator_resnet_forward.11} parent=19 // pred_check_branch
        %132 = sbr.rel (%p130) target = $region24
      $region23: #{preset_generator_resnet_forward.11} parent=19 // pred_region
        %p133 = scmp.lt.s32.totalorder %s9, 1
        %s134 = scalar_select %p133, %s9, 1
        %s135 = smul.addr %s134, 2
        %s136 = smul.addr %s135, 4
        %s137 = scalar_lea.vmem %s0, %s136
      $region24: #{preset_generator_resnet_forward.11} parent=19 // pred_fallthru
        _
      // Predicated region
      $region25: #{preset_generator_resnet_forward.11} parent=19 // pred_check
        %p138 = pneg %p76
      $region26: #{preset_generator_resnet_forward.11} parent=19 // pred_check_branch
        %140 = sbr.rel (%p138) target = $region28
      $region27: #{preset_generator_resnet_forward.11} parent=19 // pred_region
        %p141 = scmp.lt.s32.totalorder %s9, 1
        %s142 = scalar_select %p141, %s9, 1
        %s143 = smul.addr %s142, 2
        %s144 = smul.addr %s143, 4
        %s145 = scalar_lea.vmem %s2, %s144
      $region28: #{preset_generator_resnet_forward.11} parent=19 // pred_fallthru
        _
    $region20: #{preset_generator_resnet_forward.11} parent=5 // pred_fallthru
      _
    %p146 = scmp.le.s32.totalorder 1, %s9
    %p147 = scmp.lt.s32.totalorder %s9, 3
    %p148 = pnand %p146, %p147
    %p149 = pneg %p148
    // Predicated region
    $region29: #{preset_generator_resnet_forward.11} parent=5 // pred_check
      _
    $region30: #{preset_generator_resnet_forward.11} parent=5 // pred_check_branch
      %151 = sbr.rel (%p148) target = $region32
    $region31: #{preset_generator_resnet_forward.11} parent=5 // pred_region
      %s152 = ssub.s32 %s9, 1
      %p153 = scmp.lt.s32.totalorder %s14, 1
      %s154 = scalar_select %p153, %s14, 1
      %s155 = smul.addr %s154, 2
      %s156 = smul.addr %s155, 4
      %s157 = scalar_lea.vmem %s0, %s156
      %p158 = pneg %p35
      %p159 = pneg %p32
      %p160 = pneg %p56
      %p161 = pneg %p53
      %p162 = scmp.lt.s32.totalorder %s14, 1
      %s163 = scalar_select %p162, %s14, 1
      %s164 = smul.addr %s163, 2
      %s165 = smul.addr %s164, 4
      %s166 = scalar_lea.vmem %s2, %s165
      %p167 = pneg %p82
      %p168 = pneg %p79
      %p169 = pneg %p108
      %p170 = pneg %p105
      %p171 = scmp.lt.s32.totalorder %s14, 1
      %s172 = scalar_select %p171, %s14, 1
      %s173 = smul.addr %s172, 2
      %s174 = smul.addr %s173, 4
      %s175 = scalar_lea.vmem %s3, %s174
      %p176 = scmp.lt.s32.totalorder %s14, 1
      %s177 = scalar_select %p176, %s14, 1
      %s178 = smul.addr %s177, 2
      %s179 = smul.addr %s178, 4
      %s180 = scalar_lea.vmem %s0, %s179
      %p181 = scmp.lt.s32.totalorder %s14, 1
      %s182 = scalar_select %p181, %s14, 1
      %s183 = smul.addr %s182, 2
      %s184 = smul.addr %s183, 4
      %s185 = scalar_lea.vmem %s2, %s184
      %p186 = scmp.lt.s32.totalorder %s14, 1
      %s187 = scalar_select %p186, %s14, 1
      %s188 = smul.addr %s187, 2
      %s189 = smul.addr %s188, 4
      %s190 = scalar_lea.vmem %s3, %s189
      %v192 = vld [vmem:[%s180] sm:$0xf]
      %v193 = vld [vmem:[%s180 + $0x4] sm:$0xf]
      %v196 = vunpack.c.l.b16 %v192
      %v197 = vunpack.c.l.b16 %v193
      %v198 = vpack.c.b16 %v197, %v196
      %200 = vrot.lane.b32.xlu0 %v198, 127
      %v201 = vpop.permute.xlu0 %200
      %203 = vrot.lane.b32.xlu0 %v198, 126
      %v204 = vpop.permute.xlu0 %203
      %206 = vrot.lane.b32.xlu0 %v198, 118
      %v207 = vpop.permute.xlu0 %206
      %209 = vrot.lane.b32.xlu0 %v198, 117
      %v210 = vpop.permute.xlu0 %209
      %212 = vrot.lane.b32.xlu0 %v198, 116
      %v213 = vpop.permute.xlu0 %212
      %215 = vrot.lane.b32.xlu0 %v198, 108
      %v216 = vpop.permute.xlu0 %215
      %218 = vrot.lane.b32.xlu0 %v198, 107
      %v219 = vpop.permute.xlu0 %218
      %221 = vrot.lane.b32.xlu0 %v198, 106
      %v222 = vpop.permute.xlu0 %221
      %v224 = vld [vmem:[%s1] sm:$0xff]
      %v225 = vld [vmem:[%s1 + $0x8] sm:$0xff]
      %v228 = vunpack.c.l.b16 %v224
      %v229 = vunpack.c.h.b16 %v224
      %v230 = vunpack.c.l.b16 %v225
      %v231 = vunpack.c.h.b16 %v225
      %v232 = vpack.c.b16 %v230, %v228
      %v233 = vpack.c.b16 %v231, %v229
      %vm235 = vcmask 130048
      %v237 = vsel %vm235, %v233, 0
      %239 = vmatprep.subr.bf16.mxu0 0
      %240 = vmatpush1.bf16.msra.mxu0 %v198
      %241 = vmatprep.subr.bf16.mxu0 0
      %242 = vmatpush1.bf16.msra.mxu0 %v201
      %243 = vmatprep.subr.bf16.mxu0 0
      %244 = vmatpush1.bf16.msra.mxu0 %v204
      %245 = vmatprep.subr.bf16.mxu0 0
      %246 = vmatpush1.bf16.msra.mxu0 %v207
      %247 = vmatprep.subr.bf16.mxu0 0
      %248 = vmatpush1.bf16.msra.mxu0 %v210
      %249 = vmatprep.subr.bf16.mxu0 0
      %250 = vmatpush1.bf16.msra.mxu0 %v213
      %251 = vmatprep.subr.bf16.mxu0 0
      %252 = vmatpush1.bf16.msra.mxu0 %v216
      %253 = vmatprep.subr.bf16.mxu0 0
      %254 = vmatpush1.bf16.msra.mxu0 %v219
      %255 = vmatprep.subr.bf16.mxu0 0
      %256 = vmatpush1.bf16.msra.mxu0 %v222
      %257 = vmatprep.subr.bf16.mxu0 0
      %258 = vmatpush1.bf16.msra.mxu0 0
      %259 = vmatprep.subr.bf16.mxu0 0
      %260 = vmatpush1.bf16.msra.mxu0 0
      %261 = vmatprep.subr.bf16.mxu0 0
      %262 = vmatpush1.bf16.msra.mxu0 0
      %263 = vmatprep.subr.bf16.mxu0 0
      %264 = vmatpush1.bf16.msra.mxu0 0
      %265 = vmatprep.subr.bf16.mxu0 0
      %266 = vmatpush1.bf16.msra.mxu0 0
      %267 = vmatprep.subr.bf16.mxu0 0
      %268 = vmatpush1.bf16.msra.mxu0 0
      %269 = vmatprep.subr.bf16.mxu0 0
      %270 = vmatpush1.bf16.msra.mxu0 0
      %271 = vmatprep.mubr.bf16.mxu0 %v237
      %272 = vmatmul.mubr.bf16.gmra.mrb[0].mxu0 %v232
      %v273 = vpop.f32.mrb[0].mxu0
      %v274 = vadd.f32 0.0, %v273
      %v275 = vpop.f32.mrb[0].mxu0
      %v276 = vpop.f32.mrb[0].mxu0
      %v277 = vadd.f32 0.0, %v276
      %v278 = vpop.f32.mrb[0].mxu0
      %279 = vdwg.mxu0
      %v280 = vlaneseq
      %v281 = vand.u32 %v280, 127
      %vm282 = vcmp.lt.s32.totalorder %v281, 0
      %v283 = vsub.s32 0, %v281
      %v284 = vsel %vm282, %v283, %v281
      %v285 = vmul.u32.u64.compose %v284, 3435973837
      %v286 = vextract.low.u32 %v285
      %v287 = vextract.high.u32 %v285
      %v288 = vshrl.u32 %v287, 3
      %v289 = vmul.u32 %v288, 10
      %v290 = vsub.s32 %v284, %v289
      %v291 = vsub.s32 0, %v290
      %v292 = vsel %vm282, %v291, %v290
      %vm293 = vcmp.ne.s32.totalorder %v292, 0
      %vm294 = vcmp.lt.s32.totalorder %v292, 0
      %vm295 = vmand %vm294, %vm293
      %v296 = vadd.s32 %v292, 10
      %v297 = vsel %vm295, %v296, %v292
      %vm298 = vcmp.lt.s32.totalorder %v297, 8
      %v299 = vsel %vm298, 1, 0
      %v300 = vcvt.s32.f32 %v299
      %v301 = vmul.f32 %v274, %v300
      %v302 = vmul.f32 %v277, %v300
      %vm303 = vcmask 654336
      %v304 = vsel %vm303, %v301, 0.0
      %305 = vadd.xlane.f32.xlu0 %v304
      %v306 = vpop.xlane.xlu0 %305
      %v307 = vsel %vm303, %v302, 0.0
      %308 = vadd.xlane.f32.xlu0 %v307
      %v309 = vpop.xlane.xlu0 %308
      %v310 = vmul.f32 %v306, 0.015625
      %v311 = vmul.f32 %v309, 0.015625
      %v312 = vsub.f32 %v274, %v310
      %v313 = vsub.f32 %v277, %v311
      %v314 = vmul.f32 %v312, %v300
      %v315 = vmul.f32 %v313, %v300
      %v316 = vmul.f32 %v314, %v314
      %v317 = vmul.f32 %v315, %v315
      %v318 = vsel %vm303, %v316, 0.0
      %319 = vadd.xlane.f32.xlu0 %v318
      %v320 = vpop.xlane.xlu0 %319
      %v321 = vsel %vm303, %v317, 0.0
      %322 = vadd.xlane.f32.xlu0 %v321
      %v323 = vpop.xlane.xlu0 %322
      %v324 = vmul.f32 %v320, 0.015625
      %v325 = vmul.f32 %v323, 0.015625
      %v326 = vadd.f32 %v324, 1e-05
      %v327 = vadd.f32 %v325, 1e-05
      %v328 = vrsqrt.pop %v326
      %v329 = vrsqrt.pop %v327
      %v330 = vmul.f32 %v312, %v328
      %v331 = vmul.f32 %v313, %v329
      %v332 = vmax.f32 %v330, 0.0
      %v333 = vmax.f32 %v331, 0.0
      %v334 = vld [vmem:[%s185] sm:$0xf]
      %v335 = vld [vmem:[%s185 + $0x4] sm:$0xf]
      %v336 = vunpack.c.l.bf16 %v334
      %v337 = vunpack.c.l.bf16 %v335
      %v338 = vadd.f32 %v332, %v336
      %v339 = vadd.f32 %v333, %v337
      %v340 = vpack.c.bf16 %v339, %v338
      %v342 = vunpack.c.l.b16 %v340
      %v343 = vunpack.c.h.b16 %v340
      %v344 = vpack.c.b16 %v342, %v342
      %v345 = vpack.c.b16 %v343, %v343
      %vm348 = vcmask 650240
      %349 = vst.msk [vmem:[%s190] sm:$0xf] %vm348, %v344
      %350 = vst.msk [vmem:[%s190 + $0x4] sm:$0xf] %vm348, %v345
      %p351 = scmp.lt.s32.totalorder %s14, 1
      %s352 = scalar_select %p351, %s14, 1
      %s353 = smul.addr %s352, 2
      %s354 = smul.addr %s353, 4
      %s355 = scalar_lea.vmem %s3, %s354
      // Predicated region
      $region33: #{preset_generator_resnet_forward.11} parent=31 // pred_check
        %p356 = pneg %p105
      $region34: #{preset_generator_resnet_forward.11} parent=31 // pred_check_branch
        %358 = sbr.rel (%p356) target = $region36
      $region35: #{preset_generator_resnet_forward.11} parent=31 // pred_region
        _
      $region36: #{preset_generator_resnet_forward.11} parent=31 // pred_fallthru
        _
    $region32: #{preset_generator_resnet_forward.11} parent=5 // pred_fallthru
      _
    %p359 = scmp.le.s32.totalorder 2, %s9
    // Predicated region
    $region37: #{preset_generator_resnet_forward.11} parent=5 // pred_check
      %p360 = pneg %p359
    $region38: #{preset_generator_resnet_forward.11} parent=5 // pred_check_branch
      %362 = sbr.rel (%p360) target = $region40
    $region39: #{preset_generator_resnet_forward.11} parent=5 // pred_region
      %s363 = ssub.s32 %s9, 2
      // Predicated region
      $region41: #{preset_generator_resnet_forward.11} parent=39 // pred_check
        %p364 = pneg %p111
      $region42: #{preset_generator_resnet_forward.11} parent=39 // pred_check_branch
        %366 = sbr.rel (%p364) target = $region44
      $region43: #{preset_generator_resnet_forward.11} parent=39 // pred_region
        %p367 = scmp.lt.s32.totalorder %s15, 1
        %s368 = scalar_select %p367, %s15, 1
        %s369 = smul.addr %s368, 2
        %s370 = smul.addr %s369, 4
        %s371 = scalar_lea.vmem %s3, %s370
      $region44: #{preset_generator_resnet_forward.11} parent=39 // pred_fallthru
        _
    $region40: #{preset_generator_resnet_forward.11} parent=5 // pred_fallthru
      _
  $region6: #{preset_generator_resnet_forward.11} parent=0 // loop_footer
    %s13 = sadd.s32 1, %s9
  $region7: #{preset_generator_resnet_forward.11} parent=0 // loop_footer_branch
    %8 = sbr.rel target = $region3
  $region8: #{preset_generator_resnet_forward.11} parent=0 // loop_exit
    _

// kernel: preset_generator_resnet_forward.14
$region0: #{preset_generator_resnet_forward.14}
  #allocation0 [shape = 'u32[]', space=smem, size = 0x4, offset = 0x4, fixed_abs, tag = 'smem constant byte address 0x4 - core index']
  #allocation1 [shape = 'u32[144,128]{1,0:T(1,128)}', space=vmem, size = 0x12000, scoped, tag = 'internal scratch']
  %s0 = inlined_call_operand.vmem [shape: bf16[2,16,82], index: 0, kind: input, shape index: {}]
  %s1 = inlined_call_operand.vmem [shape: bf16[32,64], index: 1, kind: input, shape index: {}]
  %s2 = inlined_call_operand.vmem [shape: bf16[2,4,8,72], index: 2, kind: output, shape index: {}]
  %s3 = sld [smem:[#allocation0]]
  $region41: #{preset_generator_resnet_forward.14} parent=0
    _
  %s5 = ssub.s32 1, %s3
  %s6 = scalar_select 0, %s5, %s3
  loop: start=0, step=1, limit=4
  $region2: #{preset_generator_resnet_forward.14} parent=0 // loop_pre_header
    _
  $region3: #{preset_generator_resnet_forward.14} parent=0 // loop_header
    %s8 = sphi 0, %s12
    %p9 = scmp.ge.s32.totalorder %s8, 4
    %s18 = sphi 0, %s20
    %s21 = sphi 0, %s18
    %s22 = sphi 0, %s21
    %s38 = sphi 0, %s22
    %s42 = sphi 0, %s42
    %s44 = sphi 0, %s42
    %s45 = sphi 0, %s44
    %s59 = sphi 0, %s45
    %s65 = sphi 0, %s67
    %s68 = sphi 0, %s65
    %s69 = sphi 0, %s68
    %s85 = sphi 0, %s69
  $region4: #{preset_generator_resnet_forward.14} parent=0 // loop_header_branch
    %11 = sbr.rel (%p9) target = $region8
  $region5: #{preset_generator_resnet_forward.14} parent=0 // loop_body
    %s13 = ssub.s32 %s8, 1
    %s14 = ssub.s32 %s8, 2
    %s15 = sadd.s32 %s8, 1
    %s16 = ssub.s32 %s8, %s15
    %p17 = scmp.eq.s32.totalorder %s16, 0
    %s19 = sadd.s32 %s18, 1
    %s20 = scalar_select %p17, %s18, %s19
    %p23 = pneg %p17
    %p24 = scmp.eq.s32.totalorder %s8, 1
    %p25 = por %p23, %p24
    %p26 = scmp.ne.s32.totalorder %s18, %s21
    %p27 = scmp.eq.s32.totalorder %s8, 0
    %p28 = por %p26, %p27
    %p29 = scmp.ne.s32.totalorder %s18, %s21
    %p30 = scmp.eq.s32.totalorder %s13, 1
    %p31 = por %p29, %p30
    %p32 = scmp.ne.s32.totalorder %s21, %s22
    %p33 = scmp.eq.s32.totalorder %s13, 0
    %p34 = por %p32, %p33
    %p35 = scmp.ne.s32.totalorder %s21, %s22
    %p36 = scmp.eq.s32.totalorder %s14, 1
    %p37 = por %p35, %p36
    %p39 = scmp.ne.s32.totalorder %s22, %s38
    %p40 = scmp.eq.s32.totalorder %s14, 0
    %p41 = por %p39, %p40
    %s43 = sadd.s32 %s42, 1
    %p46 = scmp.eq.s32.totalorder %s8, 1
    %p47 = scmp.ne.s32.totalorder %s42, %s44
    %p48 = scmp.eq.s32.totalorder %s8, 0
    %p49 = por %p47, %p48
    %p50 = scmp.ne.s32.totalorder %s42, %s44
    %p51 = scmp.eq.s32.totalorder %s13, 1
    %p52 = por %p50, %p51
    %p53 = scmp.ne.s32.totalorder %s44, %s45
    %p54 = scmp.eq.s32.totalorder %s13, 0
    %p55 = por %p53, %p54
    %p56 = scmp.ne.s32.totalorder %s44, %s45
    %p57 = scmp.eq.s32.totalorder %s14, 1
    %p58 = por %p56, %p57
    %p60 = scmp.ne.s32.totalorder %s45, %s59
    %p61 = scmp.eq.s32.totalorder %s14, 0
    %p62 = por %p60, %p61
    %s63 = ssub.s32 %s8, %s15
    %p64 = scmp.eq.s32.totalorder %s63, 0
    %s66 = sadd.s32 %s65, 1
    %s67 = scalar_select %p64, %s65, %s66
    %p70 = pneg %p64
    %p71 = scmp.eq.s32.totalorder %s8, 1
    %p72 = por %p70, %p71
    %p73 = scmp.ne.s32.totalorder %s65, %s68
    %p74 = scmp.eq.s32.totalorder %s8, 0
    %p75 = por %p73, %p74
    %p76 = scmp.ne.s32.totalorder %s65, %s68
    %p77 = scmp.eq.s32.totalorder %s13, 1
    %p78 = por %p76, %p77
    %p79 = scmp.ne.s32.totalorder %s68, %s69
    %p80 = scmp.eq.s32.totalorder %s13, 0
    %p81 = por %p79, %p80
    %p82 = scmp.ne.s32.totalorder %s68, %s69
    %p83 = scmp.eq.s32.totalorder %s14, 1
    %p84 = por %p82, %p83
    %p86 = scmp.ne.s32.totalorder %s69, %s85
    %p87 = scmp.eq.s32.totalorder %s14, 0
    %p88 = por %p86, %p87
    %p89 = scmp.le.s32.totalorder 1, %s8
    %p90 = scmp.lt.s32.totalorder %s8, 3
    %p91 = pnand %p89, %p90
    %p92 = pneg %p91
    // Predicated region
    $region9: #{preset_generator_resnet_forward.14} parent=5 // pred_check
      _
    $region10: #{preset_generator_resnet_forward.14} parent=5 // pred_check_branch
      %94 = sbr.rel (%p91) target = $region12
    $region11: #{preset_generator_resnet_forward.14} parent=5 // pred_region
      %s95 = ssub.s32 %s8, 1
      // Predicated region
      $region13: #{preset_generator_resnet_forward.14} parent=11 // pred_check
        %p96 = pneg %p55
      $region14: #{preset_generator_resnet_forward.14} parent=11 // pred_check_branch
        %98 = sbr.rel (%p96) target = $region16
      $region15: #{preset_generator_resnet_forward.14} parent=11 // pred_region
        _
      $region16: #{preset_generator_resnet_forward.14} parent=11 // pred_fallthru
        _
    $region12: #{preset_generator_resnet_forward.14} parent=5 // pred_fallthru
      _
    %p99 = scmp.lt.s32.totalorder %s8, 2
    // Predicated region
    $region17: #{preset_generator_resnet_forward.14} parent=5 // pred_check
      %p100 = pneg %p99
    $region18: #{preset_generator_resnet_forward.14} parent=5 // pred_check_branch
      %102 = sbr.rel (%p100) target = $region20
    $region19: #{preset_generator_resnet_forward.14} parent=5 // pred_region
      // Predicated region
      $region21: #{preset_generator_resnet_forward.14} parent=19 // pred_check
        %p103 = pneg %p28
      $region22: #{preset_generator_resnet_forward.14} parent=19 // pred_check_branch
        %105 = sbr.rel (%p103) target = $region24
      $region23: #{preset_generator_resnet_forward.14} parent=19 // pred_region
        %p106 = scmp.lt.s32.totalorder %s8, 1
        %s107 = scalar_select %p106, %s8, 1
        %s108 = smul.addr %s107, 2
        %s109 = smul.addr %s108, 4
        %s110 = scalar_lea.vmem %s0, %s109
      $region24: #{preset_generator_resnet_forward.14} parent=19 // pred_fallthru
        _
    $region20: #{preset_generator_resnet_forward.14} parent=5 // pred_fallthru
      _
    %p111 = scmp.le.s32.totalorder 1, %s8
    %p112 = scmp.lt.s32.totalorder %s8, 3
    %p113 = pnand %p111, %p112
    %p114 = pneg %p113
    // Predicated region
    $region25: #{preset_generator_resnet_forward.14} parent=5 // pred_check
      _
    $region26: #{preset_generator_resnet_forward.14} parent=5 // pred_check_branch
      %116 = sbr.rel (%p113) target = $region28
    $region27: #{preset_generator_resnet_forward.14} parent=5 // pred_region
      %s117 = ssub.s32 %s8, 1
      %p118 = scmp.lt.s32.totalorder %s13, 1
      %s119 = scalar_select %p118, %s13, 1
      %s120 = smul.addr %s119, 2
      %s121 = smul.addr %s120, 4
      %s122 = scalar_lea.vmem %s0, %s121
      %p123 = pneg %p34
      %p124 = pneg %p31
      %p125 = pneg %p55
      %p126 = pneg %p52
      %p127 = pneg %p81
      %p128 = pneg %p78
      %p129 = scmp.lt.s32.totalorder %s13, 1
      %s130 = scalar_select %p129, %s13, 1
      %s131 = smul.addr %s130, 4
      %s132 = smul.addr %s131, 4
      %s133 = scalar_lea.vmem %s2, %s132
      %p134 = scmp.lt.s32.totalorder %s13, 1
      %s135 = scalar_select %p134, %s13, 1
      %s136 = smul.addr %s135, 2
      %s137 = smul.addr %s136, 4
      %s138 = scalar_lea.vmem %s0, %s137
      %p139 = scmp.lt.s32.totalorder %s13, 1
      %s140 = scalar_select %p139, %s13, 1
      %s141 = smul.addr %s140, 4
      %s142 = smul.addr %s141, 4
      %s143 = scalar_lea.vmem %s2, %s142
      %v145 = vld [vmem:[%s138] sm:$0xf]
      %v146 = vld [vmem:[%s138 + $0x4] sm:$0xf]
      %v149 = vunpack.c.l.b16 %v145
      %v150 = vunpack.c.l.b16 %v146
      %v151 = vpack.c.b16 %v150, %v149
      %153 = vrot.lane.b32.xlu0 %v151, 127
      %v154 = vpop.permute.xlu0 %153
      %156 = vrot.lane.b32.xlu0 %v151, 119
      %v157 = vpop.permute.xlu0 %156
      %159 = vrot.lane.b32.xlu0 %v151, 118
      %v160 = vpop.permute.xlu0 %159
      %v162 = vld [vmem:[%s1] sm:$0xf]
      %v163 = vld [vmem:[%s1 + $0x4] sm:$0xf]
      %v164 = vld [vmem:[%s1 + $0x8] sm:$0xf]
      %v165 = vld [vmem:[%s1 + $0xc] sm:$0xf]
      %v170 = vunpack.c.l.b16 %v162
      %v171 = vunpack.c.l.b16 %v163
      %v172 = vunpack.c.l.b16 %v164
      %v173 = vunpack.c.l.b16 %v165
      %v174 = vpack.c.b16 %v171, %v170
      %v175 = vpack.c.b16 %v173, %v172
      %vm176 = vcmask 523264
      %v178 = vsel %vm176, %v174, 0
      %v181 = vsel %vm176, %v175, 0
      %183 = vmatprep.subr.bf16.mxu0 0
      %184 = vmatpush1.bf16.msra.mxu0 %v151
      %185 = vmatprep.subr.bf16.mxu0 0
      %186 = vmatpush1.bf16.msra.mxu0 %v154
      %187 = vmatprep.subr.bf16.mxu0 0
      %188 = vmatpush1.bf16.msra.mxu0 %v157
      %189 = vmatprep.subr.bf16.mxu0 0
      %190 = vmatpush1.bf16.msra.mxu0 %v160
      %191 = vmatprep.subr.bf16.mxu0 0
      %192 = vmatpush1.bf16.msra.mxu0 0
      %193 = vmatprep.subr.bf16.mxu0 0
      %194 = vmatpush1.bf16.msra.mxu0 0
      %195 = vmatprep.subr.bf16.mxu0 0
      %196 = vmatpush1.bf16.msra.mxu0 0
      %197 = vmatprep.subr.bf16.mxu0 0
      %198 = vmatpush1.bf16.msra.mxu0 0
      %199 = vmatprep.subr.bf16.mxu0 0
      %200 = vmatpush1.bf16.msra.mxu0 0
      %201 = vmatprep.subr.bf16.mxu0 0
      %202 = vmatpush1.bf16.msra.mxu0 0
      %203 = vmatprep.subr.bf16.mxu0 0
      %204 = vmatpush1.bf16.msra.mxu0 0
      %205 = vmatprep.subr.bf16.mxu0 0
      %206 = vmatpush1.bf16.msra.mxu0 0
      %207 = vmatprep.subr.bf16.mxu0 0
      %208 = vmatpush1.bf16.msra.mxu0 0
      %209 = vmatprep.subr.bf16.mxu0 0
      %210 = vmatpush1.bf16.msra.mxu0 0
      %211 = vmatprep.subr.bf16.mxu0 0
      %212 = vmatpush1.bf16.msra.mxu0 0
      %213 = vmatprep.subr.bf16.mxu0 0
      %214 = vmatpush1.bf16.msra.mxu0 0
      %215 = vmatprep.mubr.bf16.mxu0 0
      %216 = vmatmul.mubr.bf16.gmra.mrb[0].mxu0 %v178
      %v217 = vpop.f32.mrb[0].mxu0
      %v218 = vadd.f32 0.0, %v217
      %v219 = vpop.f32.mrb[0].mxu0
      %v220 = vpop.f32.mrb[0].mxu0
      %v221 = vadd.f32 0.0, %v220
      %v222 = vpop.f32.mrb[0].mxu0
      %223 = vmatprep.mubr.bf16.mxu0 0
      %224 = vmatmul.mubr.bf16.gmra.mrb[0].mxu0 %v181
      %v225 = vpop.f32.mrb[0].mxu0
      %v226 = vadd.f32 0.0, %v225
      %v227 = vpop.f32.mrb[0].mxu0
      %v228 = vpop.f32.mrb[0].mxu0
      %v229 = vadd.f32 0.0, %v228
      %v230 = vpop.f32.mrb[0].mxu0
      %231 = vdwg.mxu0
      %v232 = vlaneseq
      %v233 = vand.u32 %v232, 127
      %vm234 = vcmp.lt.s32.totalorder %v233, 0
      %v235 = vsub.s32 0, %v233
      %v236 = vsel %vm234, %v235, %v233
      %v237 = vmul.u32.u64.compose %v236, 3817748708
      %v238 = vextract.low.u32 %v237
      %v239 = vextract.high.u32 %v237
      %v240 = vshrl.u32 %v239, 3
      %v241 = vmul.u32 %v240, 9
      %v242 = vsub.s32 %v236, %v241
      %v243 = vsub.s32 0, %v242
      %v244 = vsel %vm234, %v243, %v242
      %vm245 = vcmp.ne.s32.totalorder %v244, 0
      %vm246 = vcmp.lt.s32.totalorder %v244, 0
      %vm247 = vmand %vm246, %vm245
      %v248 = vadd.s32 %v244, 9
      %v249 = vsel %vm247, %v248, %v244
      %vm250 = vcmp.lt.s32.totalorder %v249, 8
      %v251 = vsel %vm250, 1, 0
      %v252 = vcvt.s32.f32 %v251
      %v253 = vmul.f32 %v218, %v252
      %vm254 = vcmask 588800
      %v255 = vsel %vm254, %v253, 0.0
      %256 = vadd.xlane.f32.xlu0 %v255
      %v257 = vpop.xlane.xlu0 %256
      %v258 = vadd.f32 %v257, 0.0
      %v259 = vmul.f32 %v221, %v252
      %v260 = vsel %vm254, %v259, 0.0
      %261 = vadd.xlane.f32.xlu0 %v260
      %v262 = vpop.xlane.xlu0 %261
      %v263 = vadd.f32 %v258, %v262
      %v264 = vmul.f32 %v226, %v252
      %v265 = vsel %vm254, %v264, 0.0
      %266 = vadd.xlane.f32.xlu0 %v265
      %v267 = vpop.xlane.xlu0 %266
      %v268 = vadd.f32 %v263, %v267
      %v269 = vmul.f32 %v229, %v252
      %v270 = vsel %vm254, %v269, 0.0
      %271 = vadd.xlane.f32.xlu0 %v270
      %v272 = vpop.xlane.xlu0 %271
      %v273 = vadd.f32 %v268, %v272
      %v274 = vmul.f32 %v273, 0.00390625
      %v275 = vsub.f32 %v218, %v274
      %v276 = vmul.f32 %v275, %v252
      %v277 = vmul.f32 %v276, %v276
      %v278 = vsel %vm254, %v277, 0.0
      %279 = vadd.xlane.f32.xlu0 %v278
      %v280 = vpop.xlane.xlu0 %279
      %v281 = vadd.f32 %v280, 0.0
      %v282 = vsub.f32 %v221, %v274
      %v283 = vmul.f32 %v282, %v252
      %v284 = vmul.f32 %v283, %v283
      %v285 = vsel %vm254, %v284, 0.0
      %286 = vadd.xlane.f32.xlu0 %v285
      %v287 = vpop.xlane.xlu0 %286
      %v288 = vadd.f32 %v281, %v287
      %v289 = vsub.f32 %v226, %v274
      %v290 = vmul.f32 %v289, %v252
      %v291 = vmul.f32 %v290, %v290
      %v292 = vsel %vm254, %v291, 0.0
      %293 = vadd.xlane.f32.xlu0 %v292
      %v294 = vpop.xlane.xlu0 %293
      %v295 = vadd.f32 %v288, %v294
      %v296 = vsub.f32 %v229, %v274
      %v297 = vmul.f32 %v296, %v252
      %v298 = vmul.f32 %v297, %v297
      %v299 = vsel %vm254, %v298, 0.0
      %300 = vadd.xlane.f32.xlu0 %v299
      %v301 = vpop.xlane.xlu0 %300
      %v302 = vadd.f32 %v295, %v301
      %v303 = vmul.f32 %v302, 0.00390625
      %v304 = vadd.f32 %v303, 1e-05
      %v305 = vrsqrt.pop %v304
      %v306 = vmul.f32 %v275, %v305
      %v307 = vmax.f32 %v306, 0.0
      %v308 = vpack.c.bf16 %v307, %v307
      %vm309 = vcmask 584704
      %310 = vst.msk [vmem:[%s143] sm:$0xf] %vm309, %v308
      %v311 = vmul.f32 %v282, %v305
      %v312 = vmax.f32 %v311, 0.0
      %v313 = vpack.c.bf16 %v312, %v312
      %s314 = scalar_lea.vmem %s143, 4
      %315 = vst.msk [vmem:[%s314] sm:$0xf] %vm309, %v313
      %v316 = vmul.f32 %v289, %v305
      %v317 = vmax.f32 %v316, 0.0
      %v318 = vpack.c.bf16 %v317, %v317
      %s319 = scalar_lea.vmem %s143, 8
      %320 = vst.msk [vmem:[%s319] sm:$0xf] %vm309, %v318
      %v321 = vmul.f32 %v296, %v305
      %v322 = vmax.f32 %v321, 0.0
      %v323 = vpack.c.bf16 %v322, %v322
      %s324 = scalar_lea.vmem %s143, 12
      %325 = vst.msk [vmem:[%s324] sm:$0xf] %vm309, %v323
      %p326 = scmp.lt.s32.totalorder %s13, 1
      %s327 = scalar_select %p326, %s13, 1
      %s328 = smul.addr %s327, 4
      %s329 = smul.addr %s328, 4
      %s330 = scalar_lea.vmem %s2, %s329
      // Predicated region
      $region29: #{preset_generator_resnet_forward.14} parent=27 // pred_check
        %p331 = pneg %p78
      $region30: #{preset_generator_resnet_forward.14} parent=27 // pred_check_branch
        %333 = sbr.rel (%p331) target = $region32
      $region31: #{preset_generator_resnet_forward.14} parent=27 // pred_region
        _
      $region32: #{preset_generator_resnet_forward.14} parent=27 // pred_fallthru
        _
    $region28: #{preset_generator_resnet_forward.14} parent=5 // pred_fallthru
      _
    %p334 = scmp.le.s32.totalorder 2, %s8
    // Predicated region
    $region33: #{preset_generator_resnet_forward.14} parent=5 // pred_check
      %p335 = pneg %p334
    $region34: #{preset_generator_resnet_forward.14} parent=5 // pred_check_branch
      %337 = sbr.rel (%p335) target = $region36
    $region35: #{preset_generator_resnet_forward.14} parent=5 // pred_region
      %s338 = ssub.s32 %s8, 2
      // Predicated region
      $region37: #{preset_generator_resnet_forward.14} parent=35 // pred_check
        %p339 = pneg %p84
      $region38: #{preset_generator_resnet_forward.14} parent=35 // pred_check_branch
        %341 = sbr.rel (%p339) target = $region40
      $region39: #{preset_generator_resnet_forward.14} parent=35 // pred_region
        %p342 = scmp.lt.s32.totalorder %s14, 1
        %s343 = scalar_select %p342, %s14, 1
        %s344 = smul.addr %s343, 4
        %s345 = smul.addr %s344, 4
        %s346 = scalar_lea.vmem %s2, %s345
      $region40: #{preset_generator_resnet_forward.14} parent=35 // pred_fallthru
        _
    $region36: #{preset_generator_resnet_forward.14} parent=5 // pred_fallthru
      _
  $region6: #{preset_generator_resnet_forward.14} parent=0 // loop_footer
    %s12 = sadd.s32 1, %s8
  $region7: #{preset_generator_resnet_forward.14} parent=0 // loop_footer_branch
    %7 = sbr.rel target = $region3
  $region8: #{preset_generator_resnet_forward.14} parent=0 // loop_exit
    _

// kernel: preset_generator_resnet_forward.15
$region0: #{preset_generator_resnet_forward.15}
  #allocation0 [shape = 'u32[]', space=smem, size = 0x4, offset = 0x4, fixed_abs, tag = 'smem constant byte address 0x4 - core index']
  #allocation1 [shape = 'u32[144,128]{1,0:T(1,128)}', space=vmem, size = 0x12000, scoped, tag = 'internal scratch']
  %s0 = inlined_call_operand.vmem [shape: bf16[2,8,490], index: 0, kind: input, shape index: {}]
  %s1 = inlined_call_operand.vmem [shape: bf16[3,392], index: 1, kind: input, shape index: {}]
  %s2 = inlined_call_operand.vmem [shape: f32[3,1], index: 2, kind: input, shape index: {}]
  %s3 = inlined_call_operand.vmem [shape: f32[2,3,352], index: 3, kind: output, shape index: {}]
  %s4 = sld [smem:[#allocation0]]
  $region45: #{preset_generator_resnet_forward.15} parent=0
    _
  %s6 = ssub.s32 1, %s4
  %s7 = scalar_select 0, %s6, %s4
  loop: start=0, step=1, limit=4
  $region2: #{preset_generator_resnet_forward.15} parent=0 // loop_pre_header
    _
  $region3: #{preset_generator_resnet_forward.15} parent=0 // loop_header
    %s9 = sphi 0, %s13
    %p10 = scmp.ge.s32.totalorder %s9, 4
    %s19 = sphi 0, %s21
    %s22 = sphi 0, %s19
    %s23 = sphi 0, %s22
    %s39 = sphi 0, %s23
    %s43 = sphi 0, %s43
    %s45 = sphi 0, %s43
    %s46 = sphi 0, %s45
    %s60 = sphi 0, %s46
    %s64 = sphi 0, %s64
    %s66 = sphi 0, %s64
    %s67 = sphi 0, %s66
    %s81 = sphi 0, %s67
    %s87 = sphi 0, %s89
    %s90 = sphi 0, %s87
    %s91 = sphi 0, %s90
    %s107 = sphi 0, %s91
  $region4: #{preset_generator_resnet_forward.15} parent=0 // loop_header_branch
    %12 = sbr.rel (%p10) target = $region8
  $region5: #{preset_generator_resnet_forward.15} parent=0 // loop_body
    %s14 = ssub.s32 %s9, 1
    %s15 = ssub.s32 %s9, 2
    %s16 = sadd.s32 %s9, 1
    %s17 = ssub.s32 %s9, %s16
    %p18 = scmp.eq.s32.totalorder %s17, 0
    %s20 = sadd.s32 %s19, 1
    %s21 = scalar_select %p18, %s19, %s20
    %p24 = pneg %p18
    %p25 = scmp.eq.s32.totalorder %s9, 1
    %p26 = por %p24, %p25
    %p27 = scmp.ne.s32.totalorder %s19, %s22
    %p28 = scmp.eq.s32.totalorder %s9, 0
    %p29 = por %p27, %p28
    %p30 = scmp.ne.s32.totalorder %s19, %s22
    %p31 = scmp.eq.s32.totalorder %s14, 1
    %p32 = por %p30, %p31
    %p33 = scmp.ne.s32.totalorder %s22, %s23
    %p34 = scmp.eq.s32.totalorder %s14, 0
    %p35 = por %p33, %p34
    %p36 = scmp.ne.s32.totalorder %s22, %s23
    %p37 = scmp.eq.s32.totalorder %s15, 1
    %p38 = por %p36, %p37
    %p40 = scmp.ne.s32.totalorder %s23, %s39
    %p41 = scmp.eq.s32.totalorder %s15, 0
    %p42 = por %p40, %p41
    %s44 = sadd.s32 %s43, 1
    %p47 = scmp.eq.s32.totalorder %s9, 1
    %p48 = scmp.ne.s32.totalorder %s43, %s45
    %p49 = scmp.eq.s32.totalorder %s9, 0
    %p50 = por %p48, %p49
    %p51 = scmp.ne.s32.totalorder %s43, %s45
    %p52 = scmp.eq.s32.totalorder %s14, 1
    %p53 = por %p51, %p52
    %p54 = scmp.ne.s32.totalorder %s45, %s46
    %p55 = scmp.eq.s32.totalorder %s14, 0
    %p56 = por %p54, %p55
    %p57 = scmp.ne.s32.totalorder %s45, %s46
    %p58 = scmp.eq.s32.totalorder %s15, 1
    %p59 = por %p57, %p58
    %p61 = scmp.ne.s32.totalorder %s46, %s60
    %p62 = scmp.eq.s32.totalorder %s15, 0
    %p63 = por %p61, %p62
    %s65 = sadd.s32 %s64, 1
    %p68 = scmp.eq.s32.totalorder %s9, 1
    %p69 = scmp.ne.s32.totalorder %s64, %s66
    %p70 = scmp.eq.s32.totalorder %s9, 0
    %p71 = por %p69, %p70
    %p72 = scmp.ne.s32.totalorder %s64, %s66
    %p73 = scmp.eq.s32.totalorder %s14, 1
    %p74 = por %p72, %p73
    %p75 = scmp.ne.s32.totalorder %s66, %s67
    %p76 = scmp.eq.s32.totalorder %s14, 0
    %p77 = por %p75, %p76
    %p78 = scmp.ne.s32.totalorder %s66, %s67
    %p79 = scmp.eq.s32.totalorder %s15, 1
    %p80 = por %p78, %p79
    %p82 = scmp.ne.s32.totalorder %s67, %s81
    %p83 = scmp.eq.s32.totalorder %s15, 0
    %p84 = por %p82, %p83
    %s85 = ssub.s32 %s9, %s16
    %p86 = scmp.eq.s32.totalorder %s85, 0
    %s88 = sadd.s32 %s87, 1
    %s89 = scalar_select %p86, %s87, %s88
    %p92 = pneg %p86
    %p93 = scmp.eq.s32.totalorder %s9, 1
    %p94 = por %p92, %p93
    %p95 = scmp.ne.s32.totalorder %s87, %s90
    %p96 = scmp.eq.s32.totalorder %s9, 0
    %p97 = por %p95, %p96
    %p98 = scmp.ne.s32.totalorder %s87, %s90
    %p99 = scmp.eq.s32.totalorder %s14, 1
    %p100 = por %p98, %p99
    %p101 = scmp.ne.s32.totalorder %s90, %s91
    %p102 = scmp.eq.s32.totalorder %s14, 0
    %p103 = por %p101, %p102
    %p104 = scmp.ne.s32.totalorder %s90, %s91
    %p105 = scmp.eq.s32.totalorder %s15, 1
    %p106 = por %p104, %p105
    %p108 = scmp.ne.s32.totalorder %s91, %s107
    %p109 = scmp.eq.s32.totalorder %s15, 0
    %p110 = por %p108, %p109
    %p111 = scmp.le.s32.totalorder 1, %s9
    %p112 = scmp.lt.s32.totalorder %s9, 3
    %p113 = pnand %p111, %p112
    %p114 = pneg %p113
    // Predicated region
    $region9: #{preset_generator_resnet_forward.15} parent=5 // pred_check
      _
    $region10: #{preset_generator_resnet_forward.15} parent=5 // pred_check_branch
      %116 = sbr.rel (%p113) target = $region12
    $region11: #{preset_generator_resnet_forward.15} parent=5 // pred_region
      %s117 = ssub.s32 %s9, 1
      // Predicated region
      $region13: #{preset_generator_resnet_forward.15} parent=11 // pred_check
        %p118 = pneg %p56
      $region14: #{preset_generator_resnet_forward.15} parent=11 // pred_check_branch
        %120 = sbr.rel (%p118) target = $region16
      $region15: #{preset_generator_resnet_forward.15} parent=11 // pred_region
        _
      $region16: #{preset_generator_resnet_forward.15} parent=11 // pred_fallthru
        _
      // Predicated region
      $region17: #{preset_generator_resnet_forward.15} parent=11 // pred_check
        %p121 = pneg %p77
      $region18: #{preset_generator_resnet_forward.15} parent=11 // pred_check_branch
        %123 = sbr.rel (%p121) target = $region20
      $region19: #{preset_generator_resnet_forward.15} parent=11 // pred_region
        _
      $region20: #{preset_generator_resnet_forward.15} parent=11 // pred_fallthru
        _
    $region12: #{preset_generator_resnet_forward.15} parent=5 // pred_fallthru
      _
    %p124 = scmp.lt.s32.totalorder %s9, 2
    // Predicated region
    $region21: #{preset_generator_resnet_forward.15} parent=5 // pred_check
      %p125 = pneg %p124
    $region22: #{preset_generator_resnet_forward.15} parent=5 // pred_check_branch
      %127 = sbr.rel (%p125) target = $region24
    $region23: #{preset_generator_resnet_forward.15} parent=5 // pred_region
      // Predicated region
      $region25: #{preset_generator_resnet_forward.15} parent=23 // pred_check
        %p128 = pneg %p29
      $region26: #{preset_generator_resnet_forward.15} parent=23 // pred_check_branch
        %130 = sbr.rel (%p128) target = $region28
      $region27: #{preset_generator_resnet_forward.15} parent=23 // pred_region
        %p131 = scmp.lt.s32.totalorder %s9, 1
        %s132 = scalar_select %p131, %s9, 1
        %s133 = smul.addr %s132, 4
        %s134 = smul.addr %s133, 4
        %s135 = scalar_lea.vmem %s0, %s134
      $region28: #{preset_generator_resnet_forward.15} parent=23 // pred_fallthru
        _
    $region24: #{preset_generator_resnet_forward.15} parent=5 // pred_fallthru
      _
    %p136 = scmp.le.s32.totalorder 1, %s9
    %p137 = scmp.lt.s32.totalorder %s9, 3
    %p138 = pnand %p136, %p137
    %p139 = pneg %p138
    // Predicated region
    $region29: #{preset_generator_resnet_forward.15} parent=5 // pred_check
      _
    $region30: #{preset_generator_resnet_forward.15} parent=5 // pred_check_branch
      %141 = sbr.rel (%p138) target = $region32
    $region31: #{preset_generator_resnet_forward.15} parent=5 // pred_region
      %s142 = ssub.s32 %s9, 1
      %p143 = scmp.lt.s32.totalorder %s14, 1
      %s144 = scalar_select %p143, %s14, 1
      %s145 = smul.addr %s144, 4
      %s146 = smul.addr %s145, 4
      %s147 = scalar_lea.vmem %s0, %s146
      %p148 = pneg %p35
      %p149 = pneg %p32
      %p150 = pneg %p56
      %p151 = pneg %p53
      %p152 = pneg %p77
      %p153 = pneg %p74
      %p154 = pneg %p103
      %p155 = pneg %p100
      %p156 = scmp.lt.s32.totalorder %s14, 1
      %s157 = scalar_select %p156, %s14, 1
      %s158 = smul.addr %s157, 3
      %s159 = smul.addr %s158, 4
      %s160 = scalar_lea.vmem %s3, %s159
      %p161 = scmp.lt.s32.totalorder %s14, 1
      %s162 = scalar_select %p161, %s14, 1
      %s163 = smul.addr %s162, 4
      %s164 = smul.addr %s163, 4
      %s165 = scalar_lea.vmem %s0, %s164
      %p166 = scmp.lt.s32.totalorder %s14, 1
      %s167 = scalar_select %p166, %s14, 1
      %s168 = smul.addr %s167, 3
      %s169 = smul.addr %s168, 4
      %s170 = scalar_lea.vmem %s3, %s169
      %v172 = vld [vmem:[%s165] sm:$0xff]
      %v173 = vld [vmem:[%s165 + $0x8] sm:$0xf]
      %v174 = vld [vmem:[%s165 + $0x8] sm:$0xff]
      %v175 = vld [vmem:[%s165 + $0x4] sm:$0xff]
      %v176 = vld [vmem:[%s165 + $0xc] sm:$0xf]
      %v179 = vunpack.c.l.b16 %v172
      %v180 = vunpack.c.h.b16 %v172
      %v181 = vunpack.c.l.b16 %v173
      %v182 = vpack.c.b16 %v179, %v179
      %v183 = vpack.c.b16 %v180, %v180
      %v184 = vpack.c.b16 %v181, %v181
      %185 = vrot.lane.b32.xlu0 %v182, 127
      %v186 = vpop.permute.xlu0 %185
      %187 = vrot.lane.b32.xlu0 %v183, 127
      %v188 = vpop.permute.xlu0 %187
      %189 = vrot.lane.b32.xlu0 %v184, 127
      %v190 = vpop.permute.xlu0 %189
      %vm191 = vcmask 1039360
      %v192 = vsel %vm191, %v186, %v188
      %v193 = vsel %vm191, %v188, %v190
      %194 = vrot.lane.b32.xlu0 %v182, 126
      %v195 = vpop.permute.xlu0 %194
      %196 = vrot.lane.b32.xlu0 %v183, 126
      %v197 = vpop.permute.xlu0 %196
      %198 = vrot.lane.b32.xlu0 %v184, 126
      %v199 = vpop.permute.xlu0 %198
      %vm200 = vcmask 1031168
      %v201 = vsel %vm200, %v195, %v197
      %v202 = vsel %vm200, %v197, %v199
      %203 = vrot.lane.b32.xlu0 %v182, 125
      %v204 = vpop.permute.xlu0 %203
      %205 = vrot.lane.b32.xlu0 %v183, 125
      %v206 = vpop.permute.xlu0 %205
      %207 = vrot.lane.b32.xlu0 %v184, 125
      %v208 = vpop.permute.xlu0 %207
      %vm209 = vcmask 1022976
      %v210 = vsel %vm209, %v204, %v206
      %v211 = vsel %vm209, %v206, %v208
      %212 = vrot.lane.b32.xlu0 %v182, 124
      %v213 = vpop.permute.xlu0 %212
      %214 = vrot.lane.b32.xlu0 %v183, 124
      %v215 = vpop.permute.xlu0 %214
      %216 = vrot.lane.b32.xlu0 %v184, 124
      %v217 = vpop.permute.xlu0 %216
      %vm218 = vcmask 1014784
      %v219 = vsel %vm218, %v213, %v215
      %v220 = vsel %vm218, %v215, %v217
      %221 = vrot.lane.b32.xlu0 %v182, 123
      %v222 = vpop.permute.xlu0 %221
      %223 = vrot.lane.b32.xlu0 %v183, 123
      %v224 = vpop.permute.xlu0 %223
      %225 = vrot.lane.b32.xlu0 %v184, 123
      %v226 = vpop.permute.xlu0 %225
      %vm227 = vcmask 1006592
      %v228 = vsel %vm227, %v222, %v224
      %v229 = vsel %vm227, %v224, %v226
      %230 = vrot.lane.b32.xlu0 %v182, 122
      %v231 = vpop.permute.xlu0 %230
      %232 = vrot.lane.b32.xlu0 %v183, 122
      %v233 = vpop.permute.xlu0 %232
      %234 = vrot.lane.b32.xlu0 %v184, 122
      %v235 = vpop.permute.xlu0 %234
      %vm236 = vcmask 998400
      %v237 = vsel %vm236, %v231, %v233
      %v238 = vsel %vm236, %v233, %v235
      %239 = vrot.lane.b32.xlu0 %v182, 106
      %v240 = vpop.permute.xlu0 %239
      %241 = vrot.lane.b32.xlu0 %v183, 106
      %v242 = vpop.permute.xlu0 %241
      %243 = vrot.lane.b32.xlu0 %v184, 106
      %v244 = vpop.permute.xlu0 %243
      %vm245 = vcmask 867328
      %v246 = vsel %vm245, %v240, %v242
      %v247 = vsel %vm245, %v242, %v244
      %248 = vrot.lane.b32.xlu0 %v182, 105
      %v249 = vpop.permute.xlu0 %248
      %250 = vrot.lane.b32.xlu0 %v183, 105
      %v251 = vpop.permute.xlu0 %250
      %252 = vrot.lane.b32.xlu0 %v184, 105
      %v253 = vpop.permute.xlu0 %252
      %vm254 = vcmask 859136
      %v255 = vsel %vm254, %v249, %v251
      %v256 = vsel %vm254, %v251, %v253
      %257 = vrot.lane.b32.xlu0 %v182, 104
      %v258 = vpop.permute.xlu0 %257
      %259 = vrot.lane.b32.xlu0 %v183, 104
      %v260 = vpop.permute.xlu0 %259
      %261 = vrot.lane.b32.xlu0 %v184, 104
      %v262 = vpop.permute.xlu0 %261
      %vm263 = vcmask 850944
      %v264 = vsel %vm263, %v258, %v260
      %v265 = vsel %vm263, %v260, %v262
      %266 = vrot.lane.b32.xlu0 %v182, 103
      %v267 = vpop.permute.xlu0 %266
      %268 = vrot.lane.b32.xlu0 %v183, 103
      %v269 = vpop.permute.xlu0 %268
      %270 = vrot.lane.b32.xlu0 %v184, 103
      %v271 = vpop.permute.xlu0 %270
      %vm272 = vcmask 842752
      %v273 = vsel %vm272, %v267, %v269
      %v274 = vsel %vm272, %v269, %v271
      %275 = vrot.lane.b32.xlu0 %v182, 102
      %v276 = vpop.permute.xlu0 %275
      %277 = vrot.lane.b32.xlu0 %v183, 102
      %v278 = vpop.permute.xlu0 %277
      %279 = vrot.lane.b32.xlu0 %v184, 102
      %v280 = vpop.permute.xlu0 %279
      %vm281 = vcmask 834560
      %v282 = vsel %vm281, %v276, %v278
      %v283 = vsel %vm281, %v278, %v280
      %284 = vrot.lane.b32.xlu0 %v182, 101
      %v285 = vpop.permute.xlu0 %284
      %286 = vrot.lane.b32.xlu0 %v183, 101
      %v287 = vpop.permute.xlu0 %286
      %288 = vrot.lane.b32.xlu0 %v184, 101
      %v289 = vpop.permute.xlu0 %288
      %vm290 = vcmask 826368
      %v291 = vsel %vm290, %v285, %v287
      %v292 = vsel %vm290, %v287, %v289
      %293 = vrot.lane.b32.xlu0 %v182, 100
      %v294 = vpop.permute.xlu0 %293
      %295 = vrot.lane.b32.xlu0 %v183, 100
      %v296 = vpop.permute.xlu0 %295
      %297 = vrot.lane.b32.xlu0 %v184, 100
      %v298 = vpop.permute.xlu0 %297
      %vm299 = vcmask 818176
      %v300 = vsel %vm299, %v294, %v296
      %v301 = vsel %vm299, %v296, %v298
      %v303 = vunpack.c.l.b16 %v174
      %v304 = vunpack.c.h.b16 %v174
      %v305 = vpack.c.b16 %v303, %v303
      %v306 = vpack.c.b16 %v304, %v304
      %307 = vrot.lane.b32.xlu0 %v182, 84
      %v308 = vpop.permute.xlu0 %307
      %309 = vrot.lane.b32.xlu0 %v183, 84
      %v310 = vpop.permute.xlu0 %309
      %311 = vrot.lane.b32.xlu0 %v305, 84
      %v312 = vpop.permute.xlu0 %311
      %313 = vrot.lane.b32.xlu0 %v306, 84
      %v314 = vpop.permute.xlu0 %313
      %vm315 = vcmask 687104
      %v316 = vsel %vm315, %v308, %v310
      %v317 = vsel %vm315, %v310, %v312
      %v318 = vsel %vm315, %v312, %v314
      %319 = vrot.lane.b32.xlu0 %v182, 83
      %v320 = vpop.permute.xlu0 %319
      %321 = vrot.lane.b32.xlu0 %v183, 83
      %v322 = vpop.permute.xlu0 %321
      %323 = vrot.lane.b32.xlu0 %v305, 83
      %v324 = vpop.permute.xlu0 %323
      %325 = vrot.lane.b32.xlu0 %v306, 83
      %v326 = vpop.permute.xlu0 %325
      %vm327 = vcmask 678912
      %v328 = vsel %vm327, %v320, %v322
      %v329 = vsel %vm327, %v322, %v324
      %v330 = vsel %vm327, %v324, %v326
      %vm331 = vcmask 1043456
      %v334 = vsel %vm331, %v182, %v192
      %v338 = vsel %vm331, %v183, %v193
      %v342 = vsel %vm331, %v184, %v190
      %v346 = vsel %vm331, %v201, %v210
      %v350 = vsel %vm331, %v202, %v211
      %v354 = vsel %vm331, %v199, %v208
      %v358 = vsel %vm331, %v219, %v228
      %v362 = vsel %vm331, %v220, %v229
      %v366 = vsel %vm331, %v217, %v226
      %v370 = vsel %vm331, %v237, %v246
      %v374 = vsel %vm331, %v238, %v247
      %v378 = vsel %vm331, %v235, %v244
      %v382 = vsel %vm331, %v255, %v264
      %v386 = vsel %vm331, %v256, %v265
      %v390 = vsel %vm331, %v253, %v262
      %v394 = vsel %vm331, %v273, %v282
      %v398 = vsel %vm331, %v274, %v283
      %v402 = vsel %vm331, %v271, %v280
      %v406 = vsel %vm331, %v291, %v300
      %v410 = vsel %vm331, %v292, %v301
      %v414 = vsel %vm331, %v289, %v298
      %v418 = vsel %vm331, %v316, %v328
      %v422 = vsel %vm331, %v317, %v329
      %v426 = vsel %vm331, %v318, %v330
      %428 = vrot.lane.b32.xlu0 %v305, 127
      %v429 = vpop.permute.xlu0 %428
      %430 = vrot.lane.b32.xlu0 %v306, 127
      %v431 = vpop.permute.xlu0 %430
      %v432 = vsel %vm191, %v188, %v429
      %v433 = vsel %vm191, %v429, %v431
      %434 = vrot.lane.b32.xlu0 %v305, 126
      %v435 = vpop.permute.xlu0 %434
      %436 = vrot.lane.b32.xlu0 %v306, 126
      %v437 = vpop.permute.xlu0 %436
      %v438 = vsel %vm200, %v197, %v435
      %v439 = vsel %vm200, %v435, %v437
      %440 = vrot.lane.b32.xlu0 %v305, 125
      %v441 = vpop.permute.xlu0 %440
      %442 = vrot.lane.b32.xlu0 %v306, 125
      %v443 = vpop.permute.xlu0 %442
      %v444 = vsel %vm209, %v206, %v441
      %v445 = vsel %vm209, %v441, %v443
      %446 = vrot.lane.b32.xlu0 %v305, 124
      %v447 = vpop.permute.xlu0 %446
      %448 = vrot.lane.b32.xlu0 %v306, 124
      %v449 = vpop.permute.xlu0 %448
      %v450 = vsel %vm218, %v215, %v447
      %v451 = vsel %vm218, %v447, %v449
      %452 = vrot.lane.b32.xlu0 %v182, 108
      %v453 = vpop.permute.xlu0 %452
      %454 = vrot.lane.b32.xlu0 %v183, 108
      %v455 = vpop.permute.xlu0 %454
      %456 = vrot.lane.b32.xlu0 %v305, 108
      %v457 = vpop.permute.xlu0 %456
      %458 = vrot.lane.b32.xlu0 %v306, 108
      %v459 = vpop.permute.xlu0 %458
      %vm460 = vcmask 883712
      %v461 = vsel %vm460, %v453, %v455
      %v462 = vsel %vm460, %v455, %v457
      %v463 = vsel %vm460, %v457, %v459
      %464 = vrot.lane.b32.xlu0 %v182, 107
      %v465 = vpop.permute.xlu0 %464
      %466 = vrot.lane.b32.xlu0 %v183, 107
      %v467 = vpop.permute.xlu0 %466
      %468 = vrot.lane.b32.xlu0 %v305, 107
      %v469 = vpop.permute.xlu0 %468
      %470 = vrot.lane.b32.xlu0 %v306, 107
      %v471 = vpop.permute.xlu0 %470
      %vm472 = vcmask 875520
      %v473 = vsel %vm472, %v465, %v467
      %v474 = vsel %vm472, %v467, %v469
      %v475 = vsel %vm472, %v469, %v471
      %476 = vrot.lane.b32.xlu0 %v305, 106
      %v477 = vpop.permute.xlu0 %476
      %478 = vrot.lane.b32.xlu0 %v306, 106
      %v479 = vpop.permute.xlu0 %478
      %v480 = vsel %vm245, %v242, %v477
      %v481 = vsel %vm245, %v477, %v479
      %482 = vrot.lane.b32.xlu0 %v305, 105
      %v483 = vpop.permute.xlu0 %482
      %484 = vrot.lane.b32.xlu0 %v306, 105
      %v485 = vpop.permute.xlu0 %484
      %v486 = vsel %vm254, %v251, %v483
      %v487 = vsel %vm254, %v483, %v485
      %488 = vrot.lane.b32.xlu0 %v305, 104
      %v489 = vpop.permute.xlu0 %488
      %490 = vrot.lane.b32.xlu0 %v306, 104
      %v491 = vpop.permute.xlu0 %490
      %v492 = vsel %vm263, %v260, %v489
      %v493 = vsel %vm263, %v489, %v491
      %494 = vrot.lane.b32.xlu0 %v305, 103
      %v495 = vpop.permute.xlu0 %494
      %496 = vrot.lane.b32.xlu0 %v306, 103
      %v497 = vpop.permute.xlu0 %496
      %v498 = vsel %vm272, %v269, %v495
      %v499 = vsel %vm272, %v495, %v497
      %500 = vrot.lane.b32.xlu0 %v305, 102
      %v501 = vpop.permute.xlu0 %500
      %502 = vrot.lane.b32.xlu0 %v306, 102
      %v503 = vpop.permute.xlu0 %502
      %v504 = vsel %vm281, %v278, %v501
      %v505 = vsel %vm281, %v501, %v503
      %506 = vrot.lane.b32.xlu0 %v182, 86
      %v507 = vpop.permute.xlu0 %506
      %508 = vrot.lane.b32.xlu0 %v183, 86
      %v509 = vpop.permute.xlu0 %508
      %510 = vrot.lane.b32.xlu0 %v305, 86
      %v511 = vpop.permute.xlu0 %510
      %512 = vrot.lane.b32.xlu0 %v306, 86
      %v513 = vpop.permute.xlu0 %512
      %vm514 = vcmask 703488
      %v515 = vsel %vm514, %v507, %v509
      %v516 = vsel %vm514, %v509, %v511
      %v517 = vsel %vm514, %v511, %v513
      %518 = vrot.lane.b32.xlu0 %v182, 85
      %v519 = vpop.permute.xlu0 %518
      %520 = vrot.lane.b32.xlu0 %v183, 85
      %v521 = vpop.permute.xlu0 %520
      %522 = vrot.lane.b32.xlu0 %v305, 85
      %v523 = vpop.permute.xlu0 %522
      %524 = vrot.lane.b32.xlu0 %v306, 85
      %v525 = vpop.permute.xlu0 %524
      %vm526 = vcmask 695296
      %v527 = vsel %vm526, %v519, %v521
      %v528 = vsel %vm526, %v521, %v523
      %v529 = vsel %vm526, %v523, %v525
      %v531 = vsel %vm331, %v183, %v432
      %v534 = vsel %vm331, %v305, %v433
      %v537 = vsel %vm331, %v306, %v431
      %v540 = vsel %vm331, %v438, %v444
      %v543 = vsel %vm331, %v439, %v445
      %v546 = vsel %vm331, %v437, %v443
      %v548 = vsel %vm331, %v219, %v461
      %v551 = vsel %vm331, %v450, %v462
      %v554 = vsel %vm331, %v451, %v463
      %v557 = vsel %vm331, %v449, %v459
      %v559 = vsel %vm331, %v473, %v246
      %v562 = vsel %vm331, %v474, %v480
      %v565 = vsel %vm331, %v475, %v481
      %v568 = vsel %vm331, %v471, %v479
      %v571 = vsel %vm331, %v486, %v492
      %v574 = vsel %vm331, %v487, %v493
      %v577 = vsel %vm331, %v485, %v491
      %v580 = vsel %vm331, %v498, %v504
      %v583 = vsel %vm331, %v499, %v505
      %v586 = vsel %vm331, %v497, %v503
      %v589 = vsel %vm331, %v515, %v527
      %v592 = vsel %vm331, %v516, %v528
      %v595 = vsel %vm331, %v517, %v529
      %v598 = vsel %vm331, %v513, %v525
      %v601 = vsel %vm331, %v314, %v326
      %602 = vrot.lane.b32.xlu0 %v182, 110
      %v603 = vpop.permute.xlu0 %602
      %604 = vrot.lane.b32.xlu0 %v183, 110
      %v605 = vpop.permute.xlu0 %604
      %606 = vrot.lane.b32.xlu0 %v305, 110
      %v607 = vpop.permute.xlu0 %606
      %608 = vrot.lane.b32.xlu0 %v306, 110
      %v609 = vpop.permute.xlu0 %608
      %vm610 = vcmask 900096
      %v611 = vsel %vm610, %v603, %v605
      %v612 = vsel %vm610, %v605, %v607
      %v613 = vsel %vm610, %v607, %v609
      %614 = vrot.lane.b32.xlu0 %v182, 109
      %v615 = vpop.permute.xlu0 %614
      %616 = vrot.lane.b32.xlu0 %v183, 109
      %v617 = vpop.permute.xlu0 %616
      %618 = vrot.lane.b32.xlu0 %v305, 109
      %v619 = vpop.permute.xlu0 %618
      %620 = vrot.lane.b32.xlu0 %v306, 109
      %v621 = vpop.permute.xlu0 %620
      %vm622 = vcmask 891904
      %v623 = vsel %vm622, %v615, %v617
      %v624 = vsel %vm622, %v617, %v619
      %v625 = vsel %vm622, %v619, %v621
      %v628 = vunpack.c.l.b16 %v175
      %v629 = vunpack.c.h.b16 %v175
      %v630 = vunpack.c.l.b16 %v176
      %v631 = vpack.c.b16 %v628, %v628
      %v632 = vpack.c.b16 %v629, %v629
      %v633 = vpack.c.b16 %v630, %v630
      %634 = vrot.lane.b32.xlu0 %v631, 88
      %v635 = vpop.permute.xlu0 %634
      %636 = vrot.lane.b32.xlu0 %v632, 88
      %v637 = vpop.permute.xlu0 %636
      %638 = vrot.lane.b32.xlu0 %v633, 88
      %v639 = vpop.permute.xlu0 %638
      %vm640 = vcmask 719872
      %v641 = vsel %vm640, %v635, %v637
      %v642 = vsel %vm640, %v637, %v639
      %643 = vrot.lane.b32.xlu0 %v631, 87
      %v644 = vpop.permute.xlu0 %643
      %645 = vrot.lane.b32.xlu0 %v632, 87
      %v646 = vpop.permute.xlu0 %645
      %647 = vrot.lane.b32.xlu0 %v633, 87
      %v648 = vpop.permute.xlu0 %647
      %vm649 = vcmask 711680
      %v650 = vsel %vm649, %v644, %v646
      %v651 = vsel %vm649, %v646, %v648
      %652 = vrot.lane.b32.xlu0 %v631, 86
      %v653 = vpop.permute.xlu0 %652
      %654 = vrot.lane.b32.xlu0 %v632, 86
      %v655 = vpop.permute.xlu0 %654
      %656 = vrot.lane.b32.xlu0 %v633, 86
      %v657 = vpop.permute.xlu0 %656
      %v658 = vsel %vm514, %v653, %v655
      %v659 = vsel %vm514, %v655, %v657
      %660 = vrot.lane.b32.xlu0 %v631, 85
      %v661 = vpop.permute.xlu0 %660
      %662 = vrot.lane.b32.xlu0 %v632, 85
      %v663 = vpop.permute.xlu0 %662
      %664 = vrot.lane.b32.xlu0 %v633, 85
      %v665 = vpop.permute.xlu0 %664
      %v666 = vsel %vm526, %v661, %v663
      %v667 = vsel %vm526, %v663, %v665
      %668 = vrot.lane.b32.xlu0 %v631, 84
      %v669 = vpop.permute.xlu0 %668
      %670 = vrot.lane.b32.xlu0 %v632, 84
      %v671 = vpop.permute.xlu0 %670
      %672 = vrot.lane.b32.xlu0 %v633, 84
      %v673 = vpop.permute.xlu0 %672
      %v674 = vsel %vm315, %v669, %v671
      %v675 = vsel %vm315, %v671, %v673
      %676 = vrot.lane.b32.xlu0 %v631, 83
      %v677 = vpop.permute.xlu0 %676
      %678 = vrot.lane.b32.xlu0 %v632, 83
      %v679 = vpop.permute.xlu0 %678
      %680 = vrot.lane.b32.xlu0 %v633, 83
      %v681 = vpop.permute.xlu0 %680
      %v682 = vsel %vm327, %v677, %v679
      %v683 = vsel %vm327, %v679, %v681
      %v685 = vsel %vm331, %v201, %v611
      %v687 = vsel %vm331, %v438, %v612
      %v689 = vsel %vm331, %v439, %v613
      %v691 = vsel %vm331, %v437, %v609
      %v693 = vsel %vm331, %v623, %v461
      %v695 = vsel %vm331, %v624, %v462
      %v697 = vsel %vm331, %v625, %v463
      %v699 = vsel %vm331, %v621, %v459
      %v702 = vsel %vm331, %v635, %v644
      %v705 = vsel %vm331, %v641, %v650
      %v708 = vsel %vm331, %v642, %v651
      %v711 = vsel %vm331, %v639, %v648
      %v714 = vsel %vm331, %v653, %v661
      %v717 = vsel %vm331, %v658, %v666
      %v720 = vsel %vm331, %v659, %v667
      %v723 = vsel %vm331, %v657, %v665
      %v726 = vsel %vm331, %v669, %v677
      %v729 = vsel %vm331, %v674, %v682
      %v732 = vsel %vm331, %v675, %v683
      %v735 = vsel %vm331, %v673, %v681
      %768 = vrot.lane.b32.xlu0 %v334, 82
      %v769 = vpop.permute.xlu0 %768
      %770 = vrot.lane.b32.xlu0 %v531, 82
      %v771 = vpop.permute.xlu0 %770
      %772 = vrot.lane.b32.xlu0 %v534, 82
      %v773 = vpop.permute.xlu0 %772
      %774 = vrot.lane.b32.xlu0 %v537, 82
      %v775 = vpop.permute.xlu0 %774
      %776 = vrot.lane.b32.xlu0 %v346, 82
      %v777 = vpop.permute.xlu0 %776
      %778 = vrot.lane.b32.xlu0 %v540, 82
      %v779 = vpop.permute.xlu0 %778
      %780 = vrot.lane.b32.xlu0 %v543, 82
      %v781 = vpop.permute.xlu0 %780
      %782 = vrot.lane.b32.xlu0 %v546, 82
      %v783 = vpop.permute.xlu0 %782
      %784 = vrot.lane.b32.xlu0 %v548, 82
      %v785 = vpop.permute.xlu0 %784
      %786 = vrot.lane.b32.xlu0 %v551, 82
      %v787 = vpop.permute.xlu0 %786
      %788 = vrot.lane.b32.xlu0 %v554, 82
      %v789 = vpop.permute.xlu0 %788
      %790 = vrot.lane.b32.xlu0 %v557, 82
      %v791 = vpop.permute.xlu0 %790
      %792 = vrot.lane.b32.xlu0 %v559, 82
      %v793 = vpop.permute.xlu0 %792
      %794 = vrot.lane.b32.xlu0 %v562, 82
      %v795 = vpop.permute.xlu0 %794
      %796 = vrot.lane.b32.xlu0 %v565, 82
      %v797 = vpop.permute.xlu0 %796
      %798 = vrot.lane.b32.xlu0 %v568, 82
      %v799 = vpop.permute.xlu0 %798
      %800 = vrot.lane.b32.xlu0 %v382, 82
      %v801 = vpop.permute.xlu0 %800
      %802 = vrot.lane.b32.xlu0 %v571, 82
      %v803 = vpop.permute.xlu0 %802
      %804 = vrot.lane.b32.xlu0 %v574, 82
      %v805 = vpop.permute.xlu0 %804
      %806 = vrot.lane.b32.xlu0 %v577, 82
      %v807 = vpop.permute.xlu0 %806
      %808 = vrot.lane.b32.xlu0 %v394, 82
      %v809 = vpop.permute.xlu0 %808
      %810 = vrot.lane.b32.xlu0 %v580, 82
      %v811 = vpop.permute.xlu0 %810
      %812 = vrot.lane.b32.xlu0 %v583, 82
      %v813 = vpop.permute.xlu0 %812
      %814 = vrot.lane.b32.xlu0 %v586, 82
      %v815 = vpop.permute.xlu0 %814
      %816 = vrot.lane.b32.xlu0 %v589, 82
      %v817 = vpop.permute.xlu0 %816
      %818 = vrot.lane.b32.xlu0 %v592, 82
      %v819 = vpop.permute.xlu0 %818
      %820 = vrot.lane.b32.xlu0 %v595, 82
      %v821 = vpop.permute.xlu0 %820
      %822 = vrot.lane.b32.xlu0 %v598, 82
      %v823 = vpop.permute.xlu0 %822
      %824 = vrot.lane.b32.xlu0 %v418, 82
      %v825 = vpop.permute.xlu0 %824
      %826 = vrot.lane.b32.xlu0 %v422, 82
      %v827 = vpop.permute.xlu0 %826
      %828 = vrot.lane.b32.xlu0 %v426, 82
      %v829 = vpop.permute.xlu0 %828
      %830 = vrot.lane.b32.xlu0 %v601, 82
      %v831 = vpop.permute.xlu0 %830
      %vm832 = vcmask 670720
      %v833 = vsel %vm832, %v769, %v771
      %v834 = vsel %vm832, %v771, %v773
      %v835 = vsel %vm832, %v773, %v775
      %v836 = vsel %vm832, %v777, %v779
      %v837 = vsel %vm832, %v779, %v781
      %v838 = vsel %vm832, %v781, %v783
      %v839 = vsel %vm832, %v785, %v787
      %v840 = vsel %vm832, %v787, %v789
      %v841 = vsel %vm832, %v789, %v791
      %v842 = vsel %vm832, %v793, %v795
      %v843 = vsel %vm832, %v795, %v797
      %v844 = vsel %vm832, %v797, %v799
      %v845 = vsel %vm832, %v801, %v803
      %v846 = vsel %vm832, %v803, %v805
      %v847 = vsel %vm832, %v805, %v807
      %v848 = vsel %vm832, %v809, %v811
      %v849 = vsel %vm832, %v811, %v813
      %v850 = vsel %vm832, %v813, %v815
      %v851 = vsel %vm832, %v817, %v819
      %v852 = vsel %vm832, %v819, %v821
      %v853 = vsel %vm832, %v821, %v823
      %v854 = vsel %vm832, %v825, %v827
      %v855 = vsel %vm832, %v827, %v829
      %v856 = vsel %vm832, %v829, %v831
      %901 = vrot.lane.b32.xlu0 %v334, 36
      %v902 = vpop.permute.xlu0 %901
      %903 = vrot.lane.b32.xlu0 %v531, 36
      %v904 = vpop.permute.xlu0 %903
      %905 = vrot.lane.b32.xlu0 %v534, 36
      %v906 = vpop.permute.xlu0 %905
      %907 = vrot.lane.b32.xlu0 %v537, 36
      %v908 = vpop.permute.xlu0 %907
      %909 = vrot.lane.b32.xlu0 %v685, 36
      %v910 = vpop.permute.xlu0 %909
      %911 = vrot.lane.b32.xlu0 %v687, 36
      %v912 = vpop.permute.xlu0 %911
      %913 = vrot.lane.b32.xlu0 %v689, 36
      %v914 = vpop.permute.xlu0 %913
      %915 = vrot.lane.b32.xlu0 %v691, 36
      %v916 = vpop.permute.xlu0 %915
      %917 = vrot.lane.b32.xlu0 %v693, 36
      %v918 = vpop.permute.xlu0 %917
      %919 = vrot.lane.b32.xlu0 %v695, 36
      %v920 = vpop.permute.xlu0 %919
      %921 = vrot.lane.b32.xlu0 %v697, 36
      %v922 = vpop.permute.xlu0 %921
      %923 = vrot.lane.b32.xlu0 %v699, 36
      %v924 = vpop.permute.xlu0 %923
      %925 = vrot.lane.b32.xlu0 %v559, 36
      %v926 = vpop.permute.xlu0 %925
      %927 = vrot.lane.b32.xlu0 %v562, 36
      %v928 = vpop.permute.xlu0 %927
      %929 = vrot.lane.b32.xlu0 %v565, 36
      %v930 = vpop.permute.xlu0 %929
      %931 = vrot.lane.b32.xlu0 %v568, 36
      %v932 = vpop.permute.xlu0 %931
      %933 = vrot.lane.b32.xlu0 %v382, 36
      %v934 = vpop.permute.xlu0 %933
      %935 = vrot.lane.b32.xlu0 %v571, 36
      %v936 = vpop.permute.xlu0 %935
      %937 = vrot.lane.b32.xlu0 %v574, 36
      %v938 = vpop.permute.xlu0 %937
      %939 = vrot.lane.b32.xlu0 %v577, 36
      %v940 = vpop.permute.xlu0 %939
      %941 = vrot.lane.b32.xlu0 %v702, 36
      %v942 = vpop.permute.xlu0 %941
      %943 = vrot.lane.b32.xlu0 %v705, 36
      %v944 = vpop.permute.xlu0 %943
      %945 = vrot.lane.b32.xlu0 %v708, 36
      %v946 = vpop.permute.xlu0 %945
      %947 = vrot.lane.b32.xlu0 %v711, 36
      %v948 = vpop.permute.xlu0 %947
      %949 = vrot.lane.b32.xlu0 %v714, 36
      %v950 = vpop.permute.xlu0 %949
      %951 = vrot.lane.b32.xlu0 %v717, 36
      %v952 = vpop.permute.xlu0 %951
      %953 = vrot.lane.b32.xlu0 %v720, 36
      %v954 = vpop.permute.xlu0 %953
      %955 = vrot.lane.b32.xlu0 %v723, 36
      %v956 = vpop.permute.xlu0 %955
      %957 = vrot.lane.b32.xlu0 %v726, 36
      %v958 = vpop.permute.xlu0 %957
      %959 = vrot.lane.b32.xlu0 %v729, 36
      %v960 = vpop.permute.xlu0 %959
      %961 = vrot.lane.b32.xlu0 %v732, 36
      %v962 = vpop.permute.xlu0 %961
      %963 = vrot.lane.b32.xlu0 %v735, 36
      %v964 = vpop.permute.xlu0 %963
      %vm965 = vcmask 293888
      %v966 = vsel %vm965, %v902, %v904
      %v967 = vsel %vm965, %v904, %v906
      %v968 = vsel %vm965, %v906, %v908
      %v969 = vsel %vm965, %v910, %v912
      %v970 = vsel %vm965, %v912, %v914
      %v971 = vsel %vm965, %v914, %v916
      %v972 = vsel %vm965, %v918, %v920
      %v973 = vsel %vm965, %v920, %v922
      %v974 = vsel %vm965, %v922, %v924
      %v975 = vsel %vm965, %v926, %v928
      %v976 = vsel %vm965, %v928, %v930
      %v977 = vsel %vm965, %v930, %v932
      %v978 = vsel %vm965, %v934, %v936
      %v979 = vsel %vm965, %v936, %v938
      %v980 = vsel %vm965, %v938, %v940
      %v981 = vsel %vm965, %v942, %v944
      %v982 = vsel %vm965, %v944, %v946
      %v983 = vsel %vm965, %v946, %v948
      %v984 = vsel %vm965, %v950, %v952
      %v985 = vsel %vm965, %v952, %v954
      %v986 = vsel %vm965, %v954, %v956
      %v987 = vsel %vm965, %v958, %v960
      %v988 = vsel %vm965, %v960, %v962
      %v989 = vsel %vm965, %v962, %v964
      %1014 = vrot.lane.b32.xlu0 %v631, 118
      %v1015 = vpop.permute.xlu0 %1014
      %1016 = vrot.lane.b32.xlu0 %v632, 118
      %v1017 = vpop.permute.xlu0 %1016
      %1018 = vrot.lane.b32.xlu0 %v633, 118
      %v1019 = vpop.permute.xlu0 %1018
      %vm1020 = vcmask 965632
      %v1021 = vsel %vm1020, %v1015, %v1017
      %v1022 = vsel %vm1020, %v1017, %v1019
      %v1023 = vld [vmem:[%s1] sm:$0xff]
      %v1024 = vld [vmem:[%s2] sm:$0x7]
      %1026 = vset.pattern.permute.xlu0 0
      %1027 = vperm.xlu0 %1026, %v1024
      %v1028 = vpop.permute.xlu0 %1027
      %v1031 = vcombine.high %v1023, %v1023
      %v1033 = vunpack.c.l.s4 1983009808
      %v1034 = vunpack.c.0.s8 %v1033
      %v1035 = vlaneseq
      %v1036 = vshrl.u32 %v1035, 7
      %v1037 = vsub.s32 %v1034, %v1036
      %v1038 = vrot.slane %v1023, %v1037
      %v1040 = vunpack.c.l.s4 1983009808
      %v1041 = vunpack.c.0.s8 %v1040
      %v1042 = vlaneseq
      %v1043 = vshrl.u32 %v1042, 7
      %v1044 = vsub.s32 %v1041, %v1043
      %v1045 = vrot.slane %v1031, %v1044
      %v1046 = vcombine.high %v1038, %v1038
      %v1047 = vcombine.high %v1045, %v1045
      %vm1051 = vcmask 64512
      %v1053 = vsel %vm1051, %v1047, 0
      %v1056 = vsel %vm331, %v1021, 0
      %v1059 = vsel %vm331, %v1022, 0
      %v1062 = vsel %vm331, %v1019, 0
      %1064 = vmatprep.subr.bf16.mxu0 %v338
      %1065 = vmatpush1.bf16.msra.mxu0 %v334
      %1066 = vmatprep.subr.bf16.mxu0 %v350
      %1067 = vmatpush1.bf16.msra.mxu0 %v346
      %1068 = vmatprep.subr.bf16.mxu0 %v362
      %1069 = vmatpush1.bf16.msra.mxu0 %v358
      %1070 = vmatprep.subr.bf16.mxu0 %v374
      %1071 = vmatpush1.bf16.msra.mxu0 %v370
      %1072 = vmatprep.subr.bf16.mxu0 %v386
      %1073 = vmatpush1.bf16.msra.mxu0 %v382
      %1074 = vmatprep.subr.bf16.mxu0 %v398
      %1075 = vmatpush1.bf16.msra.mxu0 %v394
      %1076 = vmatprep.subr.bf16.mxu0 %v410
      %1077 = vmatpush1.bf16.msra.mxu0 %v406
      %1078 = vmatprep.subr.bf16.mxu0 %v422
      %1079 = vmatpush1.bf16.msra.mxu0 %v418
      %1080 = vmatprep.subr.bf16.mxu0 %v834
      %1081 = vmatpush1.bf16.msra.mxu0 %v833
      %1082 = vmatprep.subr.bf16.mxu0 %v837
      %1083 = vmatpush1.bf16.msra.mxu0 %v836
      %1084 = vmatprep.subr.bf16.mxu0 %v840
      %1085 = vmatpush1.bf16.msra.mxu0 %v839
      %1086 = vmatprep.subr.bf16.mxu0 %v843
      %1087 = vmatpush1.bf16.msra.mxu0 %v842
      %1088 = vmatprep.subr.bf16.mxu0 %v846
      %1089 = vmatpush1.bf16.msra.mxu0 %v845
      %1090 = vmatprep.subr.bf16.mxu0 %v849
      %1091 = vmatpush1.bf16.msra.mxu0 %v848
      %1092 = vmatprep.subr.bf16.mxu0 %v852
      %1093 = vmatpush1.bf16.msra.mxu0 %v851
      %1094 = vmatprep.subr.bf16.mxu0 %v855
      %1095 = vmatpush1.bf16.msra.mxu0 %v854
      %1096 = vmatprep.mubr.bf16.mxu0 %v1046
      %1097 = vmatmul.mubr.bf16.gmra.mrb[0].mxu0 %v1038
      %v1098 = vpop.f32.mrb[0].mxu0
      %v1099 = vadd.f32 %v1028, %v1098
      %v1100 = vpop.f32.mrb[0].mxu0
      %v1101 = vadd.f32 %v1028, %v1100
      %v1102 = vpop.f32.mrb[0].mxu0
      %v1103 = vpop.f32.mrb[0].mxu0
      %1104 = vdwg.mxu0
      %1105 = vmatprep.subr.bf16.mxu0 %v967
      %1106 = vmatpush1.bf16.msra.mxu0 %v966
      %1107 = vmatprep.subr.bf16.mxu0 %v970
      %1108 = vmatpush1.bf16.msra.mxu0 %v969
      %1109 = vmatprep.subr.bf16.mxu0 %v973
      %1110 = vmatpush1.bf16.msra.mxu0 %v972
      %1111 = vmatprep.subr.bf16.mxu0 %v976
      %1112 = vmatpush1.bf16.msra.mxu0 %v975
      %1113 = vmatprep.subr.bf16.mxu0 %v979
      %1114 = vmatpush1.bf16.msra.mxu0 %v978
      %1115 = vmatprep.subr.bf16.mxu0 %v982
      %1116 = vmatpush1.bf16.msra.mxu0 %v981
      %1117 = vmatprep.subr.bf16.mxu0 %v985
      %1118 = vmatpush1.bf16.msra.mxu0 %v984
      %1119 = vmatprep.subr.bf16.mxu0 %v988
      %1120 = vmatpush1.bf16.msra.mxu0 %v987
      %1121 = vmatprep.subr.bf16.mxu0 %v1059
      %1122 = vmatpush1.bf16.msra.mxu0 %v1056
      %1123 = vmatprep.subr.bf16.mxu0 0
      %1124 = vmatpush1.bf16.msra.mxu0 0
      %1125 = vmatprep.subr.bf16.mxu0 0
      %1126 = vmatpush1.bf16.msra.mxu0 0
      %1127 = vmatprep.subr.bf16.mxu0 0
      %1128 = vmatpush1.bf16.msra.mxu0 0
      %1129 = vmatprep.subr.bf16.mxu0 0
      %1130 = vmatpush1.bf16.msra.mxu0 0
      %1131 = vmatprep.subr.bf16.mxu0 0
      %1132 = vmatpush1.bf16.msra.mxu0 0
      %1133 = vmatprep.subr.bf16.mxu0 0
      %1134 = vmatpush1.bf16.msra.mxu0 0
      %1135 = vmatprep.subr.bf16.mxu0 0
      %1136 = vmatpush1.bf16.msra.mxu0 0
      %1137 = vmatprep.mubr.bf16.mxu0 %v1053
      %1138 = vmatmul.mubr.bf16.gmra.mrb[0].mxu0 %v1045
      %v1139 = vpop.f32.mrb[0].mxu0
      %v1140 = vadd.f32 %v1099, %v1139
      %v1141 = vpop.f32.mrb[0].mxu0
      %v1142 = vadd.f32 %v1101, %v1141
      %v1143 = vpop.f32.mrb[0].mxu0
      %v1144 = vpop.f32.mrb[0].mxu0
      %1145 = vdwg.mxu0
      %1146 = vmatprep.subr.bf16.mxu0 0
      %1147 = vmatpush1.bf16.msra.mxu0 %v342
      %1148 = vmatprep.subr.bf16.mxu0 0
      %1149 = vmatpush1.bf16.msra.mxu0 %v354
      %1150 = vmatprep.subr.bf16.mxu0 0
      %1151 = vmatpush1.bf16.msra.mxu0 %v366
      %1152 = vmatprep.subr.bf16.mxu0 0
      %1153 = vmatpush1.bf16.msra.mxu0 %v378
      %1154 = vmatprep.subr.bf16.mxu0 0
      %1155 = vmatpush1.bf16.msra.mxu0 %v390
      %1156 = vmatprep.subr.bf16.mxu0 0
      %1157 = vmatpush1.bf16.msra.mxu0 %v402
      %1158 = vmatprep.subr.bf16.mxu0 0
      %1159 = vmatpush1.bf16.msra.mxu0 %v414
      %1160 = vmatprep.subr.bf16.mxu0 0
      %1161 = vmatpush1.bf16.msra.mxu0 %v426
      %1162 = vmatprep.subr.bf16.mxu0 0
      %1163 = vmatpush1.bf16.msra.mxu0 %v835
      %1164 = vmatprep.subr.bf16.mxu0 0
      %1165 = vmatpush1.bf16.msra.mxu0 %v838
      %1166 = vmatprep.subr.bf16.mxu0 0
      %1167 = vmatpush1.bf16.msra.mxu0 %v841
      %1168 = vmatprep.subr.bf16.mxu0 0
      %1169 = vmatpush1.bf16.msra.mxu0 %v844
      %1170 = vmatprep.subr.bf16.mxu0 0
      %1171 = vmatpush1.bf16.msra.mxu0 %v847
      %1172 = vmatprep.subr.bf16.mxu0 0
      %1173 = vmatpush1.bf16.msra.mxu0 %v850
      %1174 = vmatprep.subr.bf16.mxu0 0
      %1175 = vmatpush1.bf16.msra.mxu0 %v853
      %1176 = vmatprep.subr.bf16.mxu0 0
      %1177 = vmatpush1.bf16.msra.mxu0 %v856
      %1178 = vmatprep.mubr.bf16.mxu0 %v1046
      %1179 = vmatmul.mubr.bf16.gmra.mrb[0].mxu0 %v1038
      %v1180 = vpop.f32.mrb[0].mxu0
      %v1181 = vadd.f32 %v1028, %v1180
      %v1182 = vpop.f32.mrb[0].mxu0
      %v1183 = vpop.f32.mrb[0].mxu0
      %v1184 = vpop.f32.mrb[0].mxu0
      %1185 = vdwg.mxu0
      %1186 = vmatprep.subr.bf16.mxu0 0
      %1187 = vmatpush1.bf16.msra.mxu0 %v968
      %1188 = vmatprep.subr.bf16.mxu0 0
      %1189 = vmatpush1.bf16.msra.mxu0 %v971
      %1190 = vmatprep.subr.bf16.mxu0 0
      %1191 = vmatpush1.bf16.msra.mxu0 %v974
      %1192 = vmatprep.subr.bf16.mxu0 0
      %1193 = vmatpush1.bf16.msra.mxu0 %v977
      %1194 = vmatprep.subr.bf16.mxu0 0
      %1195 = vmatpush1.bf16.msra.mxu0 %v980
      %1196 = vmatprep.subr.bf16.mxu0 0
      %1197 = vmatpush1.bf16.msra.mxu0 %v983
      %1198 = vmatprep.subr.bf16.mxu0 0
      %1199 = vmatpush1.bf16.msra.mxu0 %v986
      %1200 = vmatprep.subr.bf16.mxu0 0
      %1201 = vmatpush1.bf16.msra.mxu0 %v989
      %1202 = vmatprep.subr.bf16.mxu0 0
      %1203 = vmatpush1.bf16.msra.mxu0 %v1062
      %1204 = vmatprep.subr.bf16.mxu0 0
      %1205 = vmatpush1.bf16.msra.mxu0 0
      %1206 = vmatprep.subr.bf16.mxu0 0
      %1207 = vmatpush1.bf16.msra.mxu0 0
      %1208 = vmatprep.subr.bf16.mxu0 0
      %1209 = vmatpush1.bf16.msra.mxu0 0
      %1210 = vmatprep.subr.bf16.mxu0 0
      %1211 = vmatpush1.bf16.msra.mxu0 0
      %1212 = vmatprep.subr.bf16.mxu0 0
      %1213 = vmatpush1.bf16.msra.mxu0 0
      %1214 = vmatprep.subr.bf16.mxu0 0
      %1215 = vmatpush1.bf16.msra.mxu0 0
      %1216 = vmatprep.subr.bf16.mxu0 0
      %1217 = vmatpush1.bf16.msra.mxu0 0
      %1218 = vmatprep.mubr.bf16.mxu0 %v1053
      %1219 = vmatmul.mubr.bf16.gmra.mrb[0].mxu0 %v1045
      %v1220 = vpop.f32.mrb[0].mxu0
      %v1221 = vadd.f32 %v1181, %v1220
      %v1222 = vpop.f32.mrb[0].mxu0
      %v1223 = vpop.f32.mrb[0].mxu0
      %v1224 = vpop.f32.mrb[0].mxu0
      %1225 = vdwg.mxu0
      %v1228 = vcombine.low %v1140, %v1142
      %1230 = vst [vmem:[%s170] sm:$0x77] %v1228
      %vm1231 = vcmask 780288
      %1232 = vst.msk [vmem:[%s170 + $0x8] sm:$0x7] %vm1231, %v1221
      %p1233 = scmp.lt.s32.totalorder %s14, 1
      %s1234 = scalar_select %p1233, %s14, 1
      %s1235 = smul.addr %s1234, 3
      %s1236 = smul.addr %s1235, 4
      %s1237 = scalar_lea.vmem %s3, %s1236
      // Predicated region
      $region33: #{preset_generator_resnet_forward.15} parent=31 // pred_check
        %p1238 = pneg %p100
      $region34: #{preset_generator_resnet_forward.15} parent=31 // pred_check_branch
        %1240 = sbr.rel (%p1238) target = $region36
      $region35: #{preset_generator_resnet_forward.15} parent=31 // pred_region
        _
      $region36: #{preset_generator_resnet_forward.15} parent=31 // pred_fallthru
        _
    $region32: #{preset_generator_resnet_forward.15} parent=5 // pred_fallthru
      _
    %p1241 = scmp.le.s32.totalorder 2, %s9
    // Predicated region
    $region37: #{preset_generator_resnet_forward.15} parent=5 // pred_check
      %p1242 = pneg %p1241
    $region38: #{preset_generator_resnet_forward.15} parent=5 // pred_check_branch
      %1244 = sbr.rel (%p1242) target = $region40
    $region39: #{preset_generator_resnet_forward.15} parent=5 // pred_region
      %s1245 = ssub.s32 %s9, 2
      // Predicated region
      $region41: #{preset_generator_resnet_forward.15} parent=39 // pred_check
        %p1246 = pneg %p106
      $region42: #{preset_generator_resnet_forward.15} parent=39 // pred_check_branch
        %1248 = sbr.rel (%p1246) target = $region44
      $region43: #{preset_generator_resnet_forward.15} parent=39 // pred_region
        %p1249 = scmp.lt.s32.totalorder %s15, 1
        %s1250 = scalar_select %p1249, %s15, 1
        %s1251 = smul.addr %s1250, 3
        %s1252 = smul.addr %s1251, 4
        %s1253 = scalar_lea.vmem %s3, %s1252
      $region44: #{preset_generator_resnet_forward.15} parent=39 // pred_fallthru
        _
    $region40: #{preset_generator_resnet_forward.15} parent=5 // pred_fallthru
      _
  $region6: #{preset_generator_resnet_forward.15} parent=0 // loop_footer
    %s13 = sadd.s32 1, %s9
  $region7: #{preset_generator_resnet_forward.15} parent=0 // loop_footer_branch
    %8 = sbr.rel target = $region3
  $region8: #{preset_generator_resnet_forward.15} parent=0 // loop_exit
    _

</llo_original>
